<compile_context>
chip_gen: v6e
topology: v6e:2x2x1
jax: 0.10.0
libtpu: 0.0.40
codegen_flags: <defaults>
</compile_context>

<pallas_src>
import jax
import jax.numpy as jnp
from jax import lax
from jax.experimental import pallas as pl
from jax.experimental.pallas import tpu as pltpu

NEG_SLOPE = 0.01          # nn.LeakyReLU default negative_slope
BN_EPS = 1e-5             # nn.BatchNorm2d default eps
VMEM_CAP = 48 * 1024 * 1024   # safe on v7x (64 MiB physical), plenty on v5e/v6e


def _round_up(x, m):
    return ((x + m - 1) // m) * m


def _make_upconv_kernel(TH, W, Wp, n_tiles):
    """Kernel closure over static tile rows TH, real width W, padded width Wp."""
    TM = TH * Wp  # flattened (row, x) positions computed per grid step

    def kernel(x_ref, w_ref, shift_ref, out_ref):
        # x_ref    : ((H+3)*Wp, Cin) bf16  whole zero-padded image, flattened (row, x)
        # w_ref    : (9, Cin, Ccols) bf16  one (Cin, Ccols) slab per tap (dy, dx);
        #                                  BN scale folded; columns = (py, px, cout) padded
        # shift_ref: (1, Ccols)      f32   conv bias + BN shift, tiled per parity
        # out_ref  : (TH, W, Ccols)  bf16  parity-packed output tile
        if n_tiles == 1:
            base = 0                                   # fully static offsets (common case)
        else:
            base = pl.multiple_of(pl.program_id(1) * (TH * Wp), Wp)
        acc = None
        for dy in range(3):                            # static unroll: 9 MXU matmuls, K = Cin
            for dx in range(3):
                lhs = x_ref[pl.ds(base + dy * Wp + dx, TM), :]
                part = jnp.dot(lhs, w_ref[3 * dy + dx],
                               preferred_element_type=jnp.float32)
                acc = part if acc is None else acc + part
        y = acc + shift_ref[...]                       # conv bias + eval-mode BatchNorm
        y = jnp.where(y >= 0, y, NEG_SLOPE * y)        # LeakyReLU (f32 epilogue)
        # drop the width-alignment garbage columns before they ever hit HBM
        y = y.reshape(TH, Wp, y.shape[-1])[:, :W, :]
        out_ref[...] = y.astype(out_ref.dtype)

    return kernel


def _vmem_bytes(H, W, Wp, Cin, Ccols, TH):
    """Rough VMEM footprint (lane/sublane padded) for a given tile height."""
    TM = TH * Wp
    cin_l = _round_up(Cin, 128)
    in_b = (H + 3) * Wp * cin_l * 2               # whole padded image block, bf16
    w_b = 9 * _round_up(Cin, 16) * Ccols * 2      # weight slab, bf16
    sh_b = 8 * Ccols * 4                          # shift row, f32
    out_b = TH * _round_up(W, 16) * Ccols * 2     # output tile, bf16
    acc_b = TM * Ccols * 4                        # f32 accumulator
    lhs_b = TM * cin_l * 2                        # one tap operand, bf16
    # pipeline operands are double-buffered; ~3 acc-sized and ~3 lhs-sized live temps
    return 2 * (in_b + w_b + sh_b + out_b) + 3 * acc_b + 3 * lhs_b


def _pick_tile_rows(H, W, Wp, Cin, Ccols, target_rows):
    """Largest divisor TH of H with TH*Wp <= target_rows that fits the VMEM cap;
    falls back to the smallest feasible divisor (row tiling) for big images."""
    divisors = [d for d in range(1, H + 1) if H % d == 0]
    fits = [d for d in divisors
            if _vmem_bytes(H, W, Wp, Cin, Ccols, d) + (8 << 20) <= VMEM_CAP]
    if not fits:
        raise ValueError(
            "UpConv pallas kernel: padded image does not fit the VMEM budget; "
            "a manual-DMA row-tiled variant is required for this size")
    within = [d for d in fits if d * Wp <= target_rows]
    return max(within) if within else min(fits)


def upconv_forward(x_nchw, conv_w, conv_b, bn_gamma, bn_beta, bn_mean, bn_var,
                   eps=BN_EPS, target_rows=1024):
    """UpConv.forward with upsample_method='nearest' (module default), eval-mode BN."""
    N, Cin, H, W = x_nchw.shape
    Cout = conv_w.shape[0]

    Wp = _round_up(W + 2, 16)          # padded width: left zero col + right zero/align cols
    C4 = 4 * Cout                      # parity-packed output channels
    Ccols = _round_up(C4, 128)         # lane-dense output width (unmasked stores)
    Sall = (H + 3) * Wp                # flattened padded rows (1 top + 2 bottom zero rows)

    TH = _pick_tile_rows(H, W, Wp, Cin, Ccols, target_rows)
    n_tiles = H // TH

    # ---- activations: NCHW -> NHWC bf16 + zero pad; no other HBM materialization ----
    x = jnp.transpose(x_nchw, (0, 2, 3, 1)).astype(jnp.bfloat16)        # (N, H, W, Cin)
    xp = jnp.pad(x, ((0, 0), (1, 2), (1, Wp - W - 1), (0, 0)))          # (N, H+3, Wp, Cin)
    xf = xp.reshape(N, Sall, Cin)                                       # flattened (row, x)

    # ---- weights: fold nearest-2x parity decomposition + conv bias + BN ----
    # A[p, d, k]: which 3x3-kernel row k contributes to original-row tap d
    # (d: 0 -> y-1, 1 -> y, 2 -> y+1) for output-row parity p.
    A = jnp.array([[[1., 0., 0.], [0., 1., 1.], [0., 0., 0.]],
                   [[0., 0., 0.], [1., 1., 0.], [0., 0., 1.]]], dtype=jnp.float32)
    scale = bn_gamma / jnp.sqrt(bn_var + eps)                           # (Cout,)
    shift = bn_beta + (conv_b - bn_mean) * scale                        # (Cout,)
    w9 = jnp.einsum('pdk,qel,ockl->depqco', A, A, conv_w.astype(jnp.float32))
    w9 = w9 * scale                                                     # fold BN scale
    # (d,e,p,q,c,o) -> (d,e,c, (2p+q)*Cout+o) -> (9, Cin, Ccols)
    wk = jnp.transpose(w9, (0, 1, 4, 2, 3, 5)).reshape(3, 3, Cin, C4)
    wk = jnp.pad(wk, ((0, 0), (0, 0), (0, 0), (0, Ccols - C4)))
    wk = wk.reshape(9, Cin, Ccols).astype(jnp.bfloat16)
    shift4 = jnp.pad(jnp.tile(shift, 4), (0, Ccols - C4))
    shift4 = shift4.reshape(1, Ccols).astype(jnp.float32)

    kernel = _make_upconv_kernel(TH, W, Wp, n_tiles)

    need = _vmem_bytes(H, W, Wp, Cin, Ccols, TH)
    vmem_limit = int(min(VMEM_CAP, max(16 * 1024 * 1024, need + (8 << 20))))

    # NOTE: the weight/shift index maps are constant, so they are fetched only once;
    # Pallas still reserves two buffers for them.  For large Cin/Cout on v7x,
    # single-buffer them (pl.Buffered(1) where supported, or a one-time DMA into a
    # VMEM scratch) to reclaim ~9*Cin*Ccols*2 bytes of VMEM.
    out = pl.pallas_call(
        kernel,
        out_shape=jax.ShapeDtypeStruct((N, H, W, Ccols), jnp.bfloat16),
        grid_spec=pltpu.PrefetchScalarGridSpec(
            num_scalar_prefetch=0,
            grid=(N, n_tiles),
            in_specs=[
                # whole padded image per batch element; block index is constant in m,
                # so it is DMA'd once per batch element (no halo duplication in HBM).
                pl.BlockSpec((None, Sall, Cin), lambda n, m: (n, 0, 0)),
                pl.BlockSpec((9, Cin, Ccols), lambda n, m: (0, 0, 0)),
                pl.BlockSpec((1, Ccols), lambda n, m: (0, 0)),
            ],
            out_specs=pl.BlockSpec((None, TH, W, Ccols), lambda n, m: (n, m, 0, 0)),
        ),
        compiler_params=pltpu.CompilerParams(
            dimension_semantics=("parallel", "arbitrary"),
            vmem_limit_bytes=vmem_limit),
    )(xf, wk, shift4)

    # ---- unpack parities: (N, H, W, Ccols) -> NCHW (N, Cout, 2H, 2W) ----
    out = out[..., :C4].reshape(N, H, W, 2, 2, Cout)                    # (n,y,x,py,px,co)
    out = jnp.transpose(out, (0, 1, 3, 2, 4, 5)).reshape(N, 2 * H, 2 * W, Cout)
    return jnp.transpose(out, (0, 3, 1, 2)).astype(x_nchw.dtype)


def upconv_reference(x, conv_w, conv_b, g, b, m, v, eps=BN_EPS):
    """Plain-JAX reference mirroring the PyTorch forward (eval-mode BN)."""
    xu = jnp.repeat(jnp.repeat(x, 2, axis=2), 2, axis=3)
    y = lax.conv_general_dilated(
        xu, conv_w, window_strides=(1, 1), padding=((1, 1), (1, 1)),
        dimension_numbers=("NCHW", "OIHW", "NCHW"))
    y = y + conv_b.reshape(1, -1, 1, 1)
    y = (y - m.reshape(1, -1, 1, 1)) / jnp.sqrt(v.reshape(1, -1, 1, 1) + eps)
    y = y * g.reshape(1, -1, 1, 1) + b.reshape(1, -1, 1, 1)
    return jnp.where(y >= 0, y, NEG_SLOPE * y)


if __name__ == "__main__":
    key = jax.random.PRNGKey(0)
    k_x, k_w, k_b, k_g, k_be, k_m, k_v = jax.random.split(key, 7)

    N, Cin, Cout, H, W = 2, 4, 8, 16, 16

    x = jax.random.normal(k_x, (N, Cin, H, W), dtype=jnp.float32)

    # Deterministic synthetic parameters (Conv2d(Cin, Cout, 3) + BatchNorm2d(Cout)).
    conv_w = 0.1 * jax.random.normal(k_w, (Cout, Cin, 3, 3), dtype=jnp.float32)
    conv_b = 0.1 * jax.random.normal(k_b, (Cout,), dtype=jnp.float32)
    bn_gamma = jax.random.uniform(k_g, (Cout,), minval=0.5, maxval=1.5, dtype=jnp.float32)
    bn_beta = 0.1 * jax.random.normal(k_be, (Cout,), dtype=jnp.float32)
    bn_mean = 0.1 * jax.random.normal(k_m, (Cout,), dtype=jnp.float32)
    bn_var = jax.random.uniform(k_v, (Cout,), minval=0.5, maxval=1.5, dtype=jnp.float32)

    out = upconv_forward(x, conv_w, conv_b, bn_gamma, bn_beta, bn_mean, bn_var)
    out = jax.block_until_ready(out)

    ref = upconv_reference(x, conv_w, conv_b, bn_gamma, bn_beta, bn_mean, bn_var)
    ref = jax.block_until_ready(ref)

    assert out.shape == (N, Cout, 2 * H, 2 * W), out.shape
    max_err = float(jnp.max(jnp.abs(out - ref)))
    # bf16 activations/weights/outputs with f32 accumulation -> small drift vs f32 ref.
    assert max_err < 3e-2, max_err

    print("KERNEL_OK")
</pallas_src>

<mosaic_0001>
module attributes {stable_mosaic.version = 11 : i64} {
  func.func @kernel(%arg0: i32, %arg1: i32, %arg2: memref<1x608x4xbf16, #tpu.memory_space<vmem>>, %arg3: memref<9x4x128xbf16, #tpu.memory_space<vmem>>, %arg4: memref<1x128xf32, #tpu.memory_space<vmem>>, %arg5: memref<1x16x16x128xbf16, #tpu.memory_space<vmem>>) attributes {dimension_semantics = [#tpu.dimension_semantics<parallel>, #tpu.dimension_semantics<arbitrary>], iteration_bounds = array<i64: 2, 1>, scalar_prefetch = 0 : i64, scratch_operands = 0 : i64, tpu.core_type = #tpu.core_type<tc>, window_params = [{transform_indices = @transform_0, window_bounds = array<i64: 1, 608, 4>}, {pipeline_mode = #tpu.pipeline_mode<synchronous>, transform_indices = @transform_1, window_bounds = array<i64: 9, 4, 128>}, {pipeline_mode = #tpu.pipeline_mode<synchronous>, transform_indices = @transform_2, window_bounds = array<i64: 1, 128>}, {transform_indices = @transform_3, window_bounds = array<i64: 1, 16, 16, 128>}]} {
    %c0 = arith.constant 0 : index
    %c0_0 = arith.constant 0 : index
    %c0_1 = arith.constant 0 : index
    %0 = vector.load %arg2[%c0, %c0_0, %c0_1] : memref<1x608x4xbf16, #tpu.memory_space<vmem>>, vector<1x512x4xbf16>
    %1 = vector.shape_cast %0 : vector<1x512x4xbf16> to vector<512x4xbf16>
    %c0_2 = arith.constant 0 : index
    %c0_3 = arith.constant 0 : index
    %c0_4 = arith.constant 0 : index
    %2 = vector.load %arg3[%c0_2, %c0_3, %c0_4] : memref<9x4x128xbf16, #tpu.memory_space<vmem>>, vector<1x4x128xbf16>
    %3 = vector.shape_cast %2 : vector<1x4x128xbf16> to vector<4x128xbf16>
    %cst = arith.constant dense<0.000000e+00> : vector<512x128xf32>
    %4 = tpu.matmul %1, %3, %cst {dimension_numbers = #tpu.dot_dimension_numbers<[1], [0], [0], [1], [0, 0, 1, 1], [], []>} : vector<512x4xbf16>, vector<4x128xbf16>, vector<512x128xf32> -> vector<512x128xf32>
    %c0_5 = arith.constant 0 : index
    %c1 = arith.constant 1 : index
    %c0_6 = arith.constant 0 : index
    %5 = vector.load %arg2[%c0_5, %c1, %c0_6] : memref<1x608x4xbf16, #tpu.memory_space<vmem>>, vector<1x512x4xbf16>
    %6 = vector.shape_cast %5 : vector<1x512x4xbf16> to vector<512x4xbf16>
    %c1_7 = arith.constant 1 : index
    %c0_8 = arith.constant 0 : index
    %c0_9 = arith.constant 0 : index
    %7 = vector.load %arg3[%c1_7, %c0_8, %c0_9] : memref<9x4x128xbf16, #tpu.memory_space<vmem>>, vector<1x4x128xbf16>
    %8 = vector.shape_cast %7 : vector<1x4x128xbf16> to vector<4x128xbf16>
    %cst_10 = arith.constant dense<0.000000e+00> : vector<512x128xf32>
    %9 = tpu.matmul %6, %8, %cst_10 {dimension_numbers = #tpu.dot_dimension_numbers<[1], [0], [0], [1], [0, 0, 1, 1], [], []>} : vector<512x4xbf16>, vector<4x128xbf16>, vector<512x128xf32> -> vector<512x128xf32>
    %10 = arith.addf %4, %9 : vector<512x128xf32>
    %c0_11 = arith.constant 0 : index
    %c2 = arith.constant 2 : index
    %c0_12 = arith.constant 0 : index
    %11 = vector.load %arg2[%c0_11, %c2, %c0_12] : memref<1x608x4xbf16, #tpu.memory_space<vmem>>, vector<1x512x4xbf16>
    %12 = vector.shape_cast %11 : vector<1x512x4xbf16> to vector<512x4xbf16>
    %c2_13 = arith.constant 2 : index
    %c0_14 = arith.constant 0 : index
    %c0_15 = arith.constant 0 : index
    %13 = vector.load %arg3[%c2_13, %c0_14, %c0_15] : memref<9x4x128xbf16, #tpu.memory_space<vmem>>, vector<1x4x128xbf16>
    %14 = vector.shape_cast %13 : vector<1x4x128xbf16> to vector<4x128xbf16>
    %cst_16 = arith.constant dense<0.000000e+00> : vector<512x128xf32>
    %15 = tpu.matmul %12, %14, %cst_16 {dimension_numbers = #tpu.dot_dimension_numbers<[1], [0], [0], [1], [0, 0, 1, 1], [], []>} : vector<512x4xbf16>, vector<4x128xbf16>, vector<512x128xf32> -> vector<512x128xf32>
    %16 = arith.addf %10, %15 : vector<512x128xf32>
    %c0_17 = arith.constant 0 : index
    %c32 = arith.constant 32 : index
    %c0_18 = arith.constant 0 : index
    %17 = vector.load %arg2[%c0_17, %c32, %c0_18] : memref<1x608x4xbf16, #tpu.memory_space<vmem>>, vector<1x512x4xbf16>
    %18 = vector.shape_cast %17 : vector<1x512x4xbf16> to vector<512x4xbf16>
    %c3 = arith.constant 3 : index
    %c0_19 = arith.constant 0 : index
    %c0_20 = arith.constant 0 : index
    %19 = vector.load %arg3[%c3, %c0_19, %c0_20] : memref<9x4x128xbf16, #tpu.memory_space<vmem>>, vector<1x4x128xbf16>
    %20 = vector.shape_cast %19 : vector<1x4x128xbf16> to vector<4x128xbf16>
    %cst_21 = arith.constant dense<0.000000e+00> : vector<512x128xf32>
    %21 = tpu.matmul %18, %20, %cst_21 {dimension_numbers = #tpu.dot_dimension_numbers<[1], [0], [0], [1], [0, 0, 1, 1], [], []>} : vector<512x4xbf16>, vector<4x128xbf16>, vector<512x128xf32> -> vector<512x128xf32>
    %22 = arith.addf %16, %21 : vector<512x128xf32>
    %c0_22 = arith.constant 0 : index
    %c33 = arith.constant 33 : index
    %c0_23 = arith.constant 0 : index
    %23 = vector.load %arg2[%c0_22, %c33, %c0_23] : memref<1x608x4xbf16, #tpu.memory_space<vmem>>, vector<1x512x4xbf16>
    %24 = vector.shape_cast %23 : vector<1x512x4xbf16> to vector<512x4xbf16>
    %c4 = arith.constant 4 : index
    %c0_24 = arith.constant 0 : index
    %c0_25 = arith.constant 0 : index
    %25 = vector.load %arg3[%c4, %c0_24, %c0_25] : memref<9x4x128xbf16, #tpu.memory_space<vmem>>, vector<1x4x128xbf16>
    %26 = vector.shape_cast %25 : vector<1x4x128xbf16> to vector<4x128xbf16>
    %cst_26 = arith.constant dense<0.000000e+00> : vector<512x128xf32>
    %27 = tpu.matmul %24, %26, %cst_26 {dimension_numbers = #tpu.dot_dimension_numbers<[1], [0], [0], [1], [0, 0, 1, 1], [], []>} : vector<512x4xbf16>, vector<4x128xbf16>, vector<512x128xf32> -> vector<512x128xf32>
    %28 = arith.addf %22, %27 : vector<512x128xf32>
    %c0_27 = arith.constant 0 : index
    %c34 = arith.constant 34 : index
    %c0_28 = arith.constant 0 : index
    %29 = vector.load %arg2[%c0_27, %c34, %c0_28] : memref<1x608x4xbf16, #tpu.memory_space<vmem>>, vector<1x512x4xbf16>
    %30 = vector.shape_cast %29 : vector<1x512x4xbf16> to vector<512x4xbf16>
    %c5 = arith.constant 5 : index
    %c0_29 = arith.constant 0 : index
    %c0_30 = arith.constant 0 : index
    %31 = vector.load %arg3[%c5, %c0_29, %c0_30] : memref<9x4x128xbf16, #tpu.memory_space<vmem>>, vector<1x4x128xbf16>
    %32 = vector.shape_cast %31 : vector<1x4x128xbf16> to vector<4x128xbf16>
    %cst_31 = arith.constant dense<0.000000e+00> : vector<512x128xf32>
    %33 = tpu.matmul %30, %32, %cst_31 {dimension_numbers = #tpu.dot_dimension_numbers<[1], [0], [0], [1], [0, 0, 1, 1], [], []>} : vector<512x4xbf16>, vector<4x128xbf16>, vector<512x128xf32> -> vector<512x128xf32>
    %34 = arith.addf %28, %33 : vector<512x128xf32>
    %c0_32 = arith.constant 0 : index
    %c64 = arith.constant 64 : index
    %c0_33 = arith.constant 0 : index
    %35 = vector.load %arg2[%c0_32, %c64, %c0_33] : memref<1x608x4xbf16, #tpu.memory_space<vmem>>, vector<1x512x4xbf16>
    %36 = vector.shape_cast %35 : vector<1x512x4xbf16> to vector<512x4xbf16>
    %c6 = arith.constant 6 : index
    %c0_34 = arith.constant 0 : index
    %c0_35 = arith.constant 0 : index
    %37 = vector.load %arg3[%c6, %c0_34, %c0_35] : memref<9x4x128xbf16, #tpu.memory_space<vmem>>, vector<1x4x128xbf16>
    %38 = vector.shape_cast %37 : vector<1x4x128xbf16> to vector<4x128xbf16>
    %cst_36 = arith.constant dense<0.000000e+00> : vector<512x128xf32>
    %39 = tpu.matmul %36, %38, %cst_36 {dimension_numbers = #tpu.dot_dimension_numbers<[1], [0], [0], [1], [0, 0, 1, 1], [], []>} : vector<512x4xbf16>, vector<4x128xbf16>, vector<512x128xf32> -> vector<512x128xf32>
    %40 = arith.addf %34, %39 : vector<512x128xf32>
    %c0_37 = arith.constant 0 : index
    %c65 = arith.constant 65 : index
    %c0_38 = arith.constant 0 : index
    %41 = vector.load %arg2[%c0_37, %c65, %c0_38] : memref<1x608x4xbf16, #tpu.memory_space<vmem>>, vector<1x512x4xbf16>
    %42 = vector.shape_cast %41 : vector<1x512x4xbf16> to vector<512x4xbf16>
    %c7 = arith.constant 7 : index
    %c0_39 = arith.constant 0 : index
    %c0_40 = arith.constant 0 : index
    %43 = vector.load %arg3[%c7, %c0_39, %c0_40] : memref<9x4x128xbf16, #tpu.memory_space<vmem>>, vector<1x4x128xbf16>
    %44 = vector.shape_cast %43 : vector<1x4x128xbf16> to vector<4x128xbf16>
    %cst_41 = arith.constant dense<0.000000e+00> : vector<512x128xf32>
    %45 = tpu.matmul %42, %44, %cst_41 {dimension_numbers = #tpu.dot_dimension_numbers<[1], [0], [0], [1], [0, 0, 1, 1], [], []>} : vector<512x4xbf16>, vector<4x128xbf16>, vector<512x128xf32> -> vector<512x128xf32>
    %46 = arith.addf %40, %45 : vector<512x128xf32>
    %c0_42 = arith.constant 0 : index
    %c66 = arith.constant 66 : index
    %c0_43 = arith.constant 0 : index
    %47 = vector.load %arg2[%c0_42, %c66, %c0_43] : memref<1x608x4xbf16, #tpu.memory_space<vmem>>, vector<1x512x4xbf16>
    %48 = vector.shape_cast %47 : vector<1x512x4xbf16> to vector<512x4xbf16>
    %c8 = arith.constant 8 : index
    %c0_44 = arith.constant 0 : index
    %c0_45 = arith.constant 0 : index
    %49 = vector.load %arg3[%c8, %c0_44, %c0_45] : memref<9x4x128xbf16, #tpu.memory_space<vmem>>, vector<1x4x128xbf16>
    %50 = vector.shape_cast %49 : vector<1x4x128xbf16> to vector<4x128xbf16>
    %cst_46 = arith.constant dense<0.000000e+00> : vector<512x128xf32>
    %51 = tpu.matmul %48, %50, %cst_46 {dimension_numbers = #tpu.dot_dimension_numbers<[1], [0], [0], [1], [0, 0, 1, 1], [], []>} : vector<512x4xbf16>, vector<4x128xbf16>, vector<512x128xf32> -> vector<512x128xf32>
    %52 = arith.addf %46, %51 : vector<512x128xf32>
    %c0_47 = arith.constant 0 : index
    %c0_48 = arith.constant 0 : index
    %53 = vector.load %arg4[%c0_47, %c0_48] : memref<1x128xf32, #tpu.memory_space<vmem>>, vector<1x128xf32>
    %54 = vector.broadcast %53 : vector<1x128xf32> to vector<512x128xf32>
    %55 = arith.addf %52, %54 : vector<512x128xf32>
    %cst_49 = arith.constant 0.000000e+00 : f32
    %56 = vector.broadcast %cst_49 : f32 to vector<512x128xf32>
    %57 = arith.cmpf oge, %55, %56 : vector<512x128xf32>
    %cst_50 = arith.constant 0.00999999977 : f32
    %58 = vector.broadcast %cst_50 : f32 to vector<512x128xf32>
    %59 = arith.mulf %58, %55 : vector<512x128xf32>
    %60 = arith.select %57, %55, %59 : vector<512x128xi1>, vector<512x128xf32>
    %61 = vector.shape_cast %60 : vector<512x128xf32> to vector<16x32x128xf32>
    %62 = vector.extract_strided_slice %61 {offsets = [0, 0, 0], sizes = [16, 16, 128], strides = [1, 1, 1]} : vector<16x32x128xf32> to vector<16x16x128xf32>
    %63 = arith.truncf %62 : vector<16x16x128xf32> to vector<16x16x128xbf16>
    %c0_51 = arith.constant 0 : index
    %c0_52 = arith.constant 0 : index
    %c0_53 = arith.constant 0 : index
    %c0_54 = arith.constant 0 : index
    %64 = vector.load %arg5[%c0_51, %c0_52, %c0_53, %c0_54] : memref<1x16x16x128xbf16, #tpu.memory_space<vmem>>, vector<1x16x16x128xbf16>
    %65 = vector.shape_cast %64 : vector<1x16x16x128xbf16> to vector<16x16x128xbf16>
    %66 = vector.shape_cast %63 : vector<16x16x128xbf16> to vector<1x16x16x128xbf16>
    tpu.vector_store %arg5[%c0_51, %c0_52, %c0_53, %c0_54], %66 {strides = array<i32>} : memref<1x16x16x128xbf16, #tpu.memory_space<vmem>>, vector<1x16x16x128xbf16>,
    return
  }
  func.func @transform_0(%arg0: i32, %arg1: i32) -> (i32, i32, i32) {
    %c0_i32 = arith.constant 0 : i32
    %c0_i32_0 = arith.constant 0 : i32
    %c0_i32_1 = arith.constant 0 : i32
    return %arg0, %c0_i32, %c0_i32_0 : i32, i32, i32
  }
  func.func @transform_1(%arg0: i32, %arg1: i32) -> (i32, i32, i32) {
    %c0_i32 = arith.constant 0 : i32
    %c0_i32_0 = arith.constant 0 : i32
    %c0_i32_1 = arith.constant 0 : i32
    %c0_i32_2 = arith.constant 0 : i32
    return %c0_i32, %c0_i32_0, %c0_i32_1 : i32, i32, i32
  }
  func.func @transform_2(%arg0: i32, %arg1: i32) -> (i32, i32) {
    %c0_i32 = arith.constant 0 : i32
    %c0_i32_0 = arith.constant 0 : i32
    %c0_i32_1 = arith.constant 0 : i32
    return %c0_i32, %c0_i32_0 : i32, i32
  }
  func.func @transform_3(%arg0: i32, %arg1: i32) -> (i32, i32, i32, i32) {
    %c0_i32 = arith.constant 0 : i32
    %c0_i32_0 = arith.constant 0 : i32
    %c0_i32_1 = arith.constant 0 : i32
    return %arg0, %arg1, %c0_i32, %c0_i32_0 : i32, i32, i32, i32
  }
}

</mosaic_0001>

<llo_original>
// kernel: tpu_custom_call.1
$region0: #{tpu_custom_call.1}
  #allocation0 [shape = 'u32[]', space=smem, size = 0x4, offset = 0x4, fixed_abs, tag = 'smem constant byte address 0x4 - core index']
  #allocation1 [shape = 'u32[144,128]{1,0:T(1,128)}', space=vmem, size = 0x12000, scoped, tag = 'internal scratch']
  %s0 = inlined_call_operand.vmem [shape: bf16[2,608,4], index: 0, kind: input, shape index: {}]
  %s1 = inlined_call_operand.vmem [shape: bf16[9,4,128], index: 1, kind: input, shape index: {}]
  %s2 = inlined_call_operand.vmem [shape: f32[1,128], index: 2, kind: input, shape index: {}]
  %s3 = inlined_call_operand.hbm [shape: bf16[2,16,16,128], index: 3, kind: output, shape index: {}]
  %s4 = sld [smem:[#allocation0]]
  $region45: #{tpu_custom_call.1} parent=0
    _
  %s6 = ssub.s32 1, %s4
  %s7 = scalar_select 0, %s6, %s4
  $region1: #{tpu_custom_call.1} parent=0
    #allocation2 [shape = 'u8[131072]{0}', space=vmem, size = 0x20000, scoped, tag = 'output window, operand 0']
    #allocation3 [shape = 's32[2]{0}', space=sflag, size = 0x8, scoped, tag = 'scoped memory for tpu_custom_call.1']
    %8 = vsyncpa [#allocation3], 0
    %s9 = scalar_lea.sflag [#allocation3], 1
    %10 = vsyncpa %s9, 0
    loop: start=0, step=1, limit=4
    $region2: #{tpu_custom_call.1} parent=1 // loop_pre_header
      _
    $region3: #{tpu_custom_call.1} parent=1 // loop_header
      %s12 = sphi 0, %s16
      %p13 = scmp.ge.s32.totalorder %s12, 4
      %s19 = sphi 0, %s31
      %s20 = sphi 0, %s27
      %s21 = sphi 0, %s19
      %s22 = sphi 0, %s20
      %s23 = sphi 0, %s21
      %s24 = sphi 0, %s22
      %s34 = sphi 0, %s36
      %s37 = sphi 0, %s34
      %s38 = sphi 0, %s37
      %s54 = sphi 0, %s38
      %s58 = sphi 0, %s58
      %s60 = sphi 0, %s58
      %s61 = sphi 0, %s60
      %s75 = sphi 0, %s61
      %s79 = sphi 0, %s79
      %s81 = sphi 0, %s79
      %s82 = sphi 0, %s81
      %s96 = sphi 0, %s82
      %s104 = sphi 0, %s106
      %s107 = sphi 0, %s104
      %s108 = sphi 0, %s107
      %s124 = sphi 0, %s108
    $region4: #{tpu_custom_call.1} parent=1 // loop_header_branch
      %15 = sbr.rel (%p13) target = $region8
    $region5: #{tpu_custom_call.1} parent=1 // loop_body
      %s17 = ssub.s32 %s12, 1
      %s18 = ssub.s32 %s12, 2
      %s25 = sadd.s32 1, %s20
      %p26 = scmp.ge.s32.totalorder %s25, 1
      %s27 = scalar_select %p26, 0, %s25
      %s28 = sadd.s32 1, %s19
      %s29 = scalar_select %p26, %s28, %s19
      %p30 = scmp.ge.s32.totalorder %s29, 2
      %s31 = scalar_select %p30, 0, %s29
      %s32 = ssub.s32 %s19, %s31
      %p33 = scmp.eq.s32.totalorder %s32, 0
      %s35 = sadd.s32 %s34, 1
      %s36 = scalar_select %p33, %s34, %s35
      %p39 = pneg %p33
      %p40 = scmp.eq.s32.totalorder %s12, 1
      %p41 = por %p39, %p40
      %p42 = scmp.ne.s32.totalorder %s34, %s37
      %p43 = scmp.eq.s32.totalorder %s12, 0
      %p44 = por %p42, %p43
      %p45 = scmp.ne.s32.totalorder %s34, %s37
      %p46 = scmp.eq.s32.totalorder %s17, 1
      %p47 = por %p45, %p46
      %p48 = scmp.ne.s32.totalorder %s37, %s38
      %p49 = scmp.eq.s32.totalorder %s17, 0
      %p50 = por %p48, %p49
      %p51 = scmp.ne.s32.totalorder %s37, %s38
      %p52 = scmp.eq.s32.totalorder %s18, 1
      %p53 = por %p51, %p52
      %p55 = scmp.ne.s32.totalorder %s38, %s54
      %p56 = scmp.eq.s32.totalorder %s18, 0
      %p57 = por %p55, %p56
      %s59 = sadd.s32 %s58, 1
      %p62 = scmp.eq.s32.totalorder %s12, 1
      %p63 = scmp.ne.s32.totalorder %s58, %s60
      %p64 = scmp.eq.s32.totalorder %s12, 0
      %p65 = por %p63, %p64
      %p66 = scmp.ne.s32.totalorder %s58, %s60
      %p67 = scmp.eq.s32.totalorder %s17, 1
      %p68 = por %p66, %p67
      %p69 = scmp.ne.s32.totalorder %s60, %s61
      %p70 = scmp.eq.s32.totalorder %s17, 0
      %p71 = por %p69, %p70
      %p72 = scmp.ne.s32.totalorder %s60, %s61
      %p73 = scmp.eq.s32.totalorder %s18, 1
      %p74 = por %p72, %p73
      %p76 = scmp.ne.s32.totalorder %s61, %s75
      %p77 = scmp.eq.s32.totalorder %s18, 0
      %p78 = por %p76, %p77
      %s80 = sadd.s32 %s79, 1
      %p83 = scmp.eq.s32.totalorder %s12, 1
      %p84 = scmp.ne.s32.totalorder %s79, %s81
      %p85 = scmp.eq.s32.totalorder %s12, 0
      %p86 = por %p84, %p85
      %p87 = scmp.ne.s32.totalorder %s79, %s81
      %p88 = scmp.eq.s32.totalorder %s17, 1
      %p89 = por %p87, %p88
      %p90 = scmp.ne.s32.totalorder %s81, %s82
      %p91 = scmp.eq.s32.totalorder %s17, 0
      %p92 = por %p90, %p91
      %p93 = scmp.ne.s32.totalorder %s81, %s82
      %p94 = scmp.eq.s32.totalorder %s18, 1
      %p95 = por %p93, %p94
      %p97 = scmp.ne.s32.totalorder %s82, %s96
      %p98 = scmp.eq.s32.totalorder %s18, 0
      %p99 = por %p97, %p98
      %s100 = ssub.s32 %s19, %s31
      %s101 = ssub.s32 %s20, %s27
      %s102 = sor.u32 %s100, %s101
      %p103 = scmp.eq.s32.totalorder %s102, 0
      %s105 = sadd.s32 %s104, 1
      %s106 = scalar_select %p103, %s104, %s105
      %p109 = pneg %p103
      %p110 = scmp.eq.s32.totalorder %s12, 1
      %p111 = por %p109, %p110
      %p112 = scmp.ne.s32.totalorder %s104, %s107
      %p113 = scmp.eq.s32.totalorder %s12, 0
      %p114 = por %p112, %p113
      %p115 = scmp.ne.s32.totalorder %s104, %s107
      %p116 = scmp.eq.s32.totalorder %s17, 1
      %p117 = por %p115, %p116
      %p118 = scmp.ne.s32.totalorder %s107, %s108
      %p119 = scmp.eq.s32.totalorder %s17, 0
      %p120 = por %p118, %p119
      %p121 = scmp.ne.s32.totalorder %s107, %s108
      %p122 = scmp.eq.s32.totalorder %s18, 1
      %p123 = por %p121, %p122
      %p125 = scmp.ne.s32.totalorder %s108, %s124
      %p126 = scmp.eq.s32.totalorder %s18, 0
      %p127 = por %p125, %p126
      %p128 = scmp.le.s32.totalorder 1, %s12
      %p129 = scmp.lt.s32.totalorder %s12, 3
      %p130 = pnand %p128, %p129
      %p131 = pneg %p130
      // Predicated region
      $region9: #{tpu_custom_call.1} parent=5 // pred_check
        _
      $region10: #{tpu_custom_call.1} parent=5 // pred_check_branch
        %133 = sbr.rel (%p130) target = $region12
      $region11: #{tpu_custom_call.1} parent=5 // pred_region
        %s134 = ssub.s32 %s12, 1
        // Predicated region
        $region13: #{tpu_custom_call.1} parent=11 // pred_check
          %p135 = pneg %p71
        $region14: #{tpu_custom_call.1} parent=11 // pred_check_branch
          %137 = sbr.rel (%p135) target = $region16
        $region15: #{tpu_custom_call.1} parent=11 // pred_region
          _
        $region16: #{tpu_custom_call.1} parent=11 // pred_fallthru
          _
        // Predicated region
        $region17: #{tpu_custom_call.1} parent=11 // pred_check
          %p138 = pneg %p92
        $region18: #{tpu_custom_call.1} parent=11 // pred_check_branch
          %140 = sbr.rel (%p138) target = $region20
        $region19: #{tpu_custom_call.1} parent=11 // pred_region
          _
        $region20: #{tpu_custom_call.1} parent=11 // pred_fallthru
          _
      $region12: #{tpu_custom_call.1} parent=5 // pred_fallthru
        _
      %p141 = scmp.lt.s32.totalorder %s12, 2
      // Predicated region
      $region21: #{tpu_custom_call.1} parent=5 // pred_check
        %p142 = pneg %p141
      $region22: #{tpu_custom_call.1} parent=5 // pred_check_branch
        %144 = sbr.rel (%p142) target = $region24
      $region23: #{tpu_custom_call.1} parent=5 // pred_region
        // Predicated region
        $region25: #{tpu_custom_call.1} parent=23 // pred_check
          %p145 = pneg %p44
        $region26: #{tpu_custom_call.1} parent=23 // pred_check_branch
          %147 = sbr.rel (%p145) target = $region28
        $region27: #{tpu_custom_call.1} parent=23 // pred_region
          %p148 = scmp.lt.s32.totalorder %s19, 1
          %s149 = scalar_select %p148, %s19, 1
          %s150 = smul.addr %s149, 76
          %s151 = smul.addr %s150, 4
          %s152 = scalar_lea.vmem %s0, %s151
        $region28: #{tpu_custom_call.1} parent=23 // pred_fallthru
          _
      $region24: #{tpu_custom_call.1} parent=5 // pred_fallthru
        _
      %p153 = scmp.le.s32.totalorder 1, %s12
      %p154 = scmp.lt.s32.totalorder %s12, 3
      %p155 = pnand %p153, %p154
      %p156 = pneg %p155
      // Predicated region
      $region29: #{tpu_custom_call.1} parent=5 // pred_check
        _
      $region30: #{tpu_custom_call.1} parent=5 // pred_check_branch
        %158 = sbr.rel (%p155) target = $region32
      $region31: #{tpu_custom_call.1} parent=5 // pred_region
        %s159 = ssub.s32 %s12, 1
        %p160 = scmp.lt.s32.totalorder %s21, 1
        %s161 = scalar_select %p160, %s21, 1
        %s162 = smul.addr %s161, 76
        %s163 = smul.addr %s162, 4
        %s164 = scalar_lea.vmem %s0, %s163
        %p165 = pneg %p50
        %p166 = pneg %p47
        %p167 = pneg %p71
        %p168 = pneg %p68
        %p169 = pneg %p92
        %p170 = pneg %p89
        %p171 = pneg %p120
        %p172 = pneg %p117
        %s173 = sand.u32 %s107, 1
        %s174 = scalar_lea.sflag [#allocation3], %s173
        %s175 = sand.u32 %s107, 1
        %s176 = smul.addr %s175, 128
        %s177 = scalar_lea.vmem [#allocation2], %s176
        %p178 = scmp.lt.s32.totalorder %s21, 1
        %s179 = scalar_select %p178, %s21, 1
        %s180 = smul.addr %s179, 76
        %s181 = smul.addr %s180, 4
        %s182 = scalar_lea.vmem %s0, %s181
        %s183 = smul.u32 16, %s22
        %v185 = vld [vmem:[%s182] sm:$0xf]
        %v186 = vld [vmem:[%s182 + $0x4] sm:$0xf]
        %v187 = vld [vmem:[%s182 + $0x8] sm:$0xf]
        %v188 = vld [vmem:[%s182 + $0xc] sm:$0xf]
        %v189 = vld [vmem:[%s182 + $0x10] sm:$0xf]
        %v190 = vld [vmem:[%s182 + $0x14] sm:$0xf]
        %v191 = vld [vmem:[%s182 + $0x18] sm:$0xf]
        %v192 = vld [vmem:[%s182 + $0x1c] sm:$0xf]
        %v193 = vld [vmem:[%s182 + $0x20] sm:$0xf]
        %v194 = vld [vmem:[%s182 + $0x24] sm:$0xf]
        %v195 = vld [vmem:[%s182 + $0x28] sm:$0xf]
        %v196 = vld [vmem:[%s182 + $0x2c] sm:$0xf]
        %v197 = vld [vmem:[%s182 + $0x30] sm:$0xf]
        %v198 = vld [vmem:[%s182 + $0x34] sm:$0xf]
        %v199 = vld [vmem:[%s182 + $0x38] sm:$0xf]
        %v200 = vld [vmem:[%s182 + $0x3c] sm:$0xf]
        %v201 = vld [vmem:[%s182 + $0x40] sm:$0xf]
        %v202 = vld [vmem:[%s182 + $0x44] sm:$0xf]
        %v203 = vld [vmem:[%s182 + $0x48] sm:$0xf]
        %v204 = vld [vmem:[%s182 + $0x4c] sm:$0xf]
        %v205 = vld [vmem:[%s182 + $0x50] sm:$0xf]
        %v206 = vld [vmem:[%s182 + $0x54] sm:$0xf]
        %v207 = vld [vmem:[%s182 + $0x58] sm:$0xf]
        %v208 = vld [vmem:[%s182 + $0x5c] sm:$0xf]
        %v209 = vld [vmem:[%s182 + $0x60] sm:$0xf]
        %v210 = vld [vmem:[%s182 + $0x64] sm:$0xf]
        %v211 = vld [vmem:[%s182 + $0x68] sm:$0xf]
        %v212 = vld [vmem:[%s182 + $0x6c] sm:$0xf]
        %v213 = vld [vmem:[%s182 + $0x70] sm:$0xf]
        %v214 = vld [vmem:[%s182 + $0x74] sm:$0xf]
        %v215 = vld [vmem:[%s182 + $0x78] sm:$0xf]
        %v216 = vld [vmem:[%s182 + $0x7c] sm:$0xf]
        %v217 = vld [vmem:[%s182 + $0x80] sm:$0xf]
        %v218 = vld [vmem:[%s182 + $0x84] sm:$0xf]
        %v219 = vld [vmem:[%s182 + $0x88] sm:$0xf]
        %v220 = vld [vmem:[%s182 + $0x8c] sm:$0xf]
        %v221 = vld [vmem:[%s182 + $0x90] sm:$0xf]
        %v222 = vld [vmem:[%s182 + $0x94] sm:$0xf]
        %v223 = vld [vmem:[%s182 + $0x98] sm:$0xf]
        %v224 = vld [vmem:[%s182 + $0x9c] sm:$0xf]
        %v225 = vld [vmem:[%s182 + $0xa0] sm:$0xf]
        %v226 = vld [vmem:[%s182 + $0xa4] sm:$0xf]
        %v227 = vld [vmem:[%s182 + $0xa8] sm:$0xf]
        %v228 = vld [vmem:[%s182 + $0xac] sm:$0xf]
        %v229 = vld [vmem:[%s182 + $0xb0] sm:$0xf]
        %v230 = vld [vmem:[%s182 + $0xb4] sm:$0xf]
        %v231 = vld [vmem:[%s182 + $0xb8] sm:$0xf]
        %v232 = vld [vmem:[%s182 + $0xbc] sm:$0xf]
        %v233 = vld [vmem:[%s182 + $0xc0] sm:$0xf]
        %v234 = vld [vmem:[%s182 + $0xc4] sm:$0xf]
        %v235 = vld [vmem:[%s182 + $0xc8] sm:$0xf]
        %v236 = vld [vmem:[%s182 + $0xcc] sm:$0xf]
        %v237 = vld [vmem:[%s182 + $0xd0] sm:$0xf]
        %v238 = vld [vmem:[%s182 + $0xd4] sm:$0xf]
        %v239 = vld [vmem:[%s182 + $0xd8] sm:$0xf]
        %v240 = vld [vmem:[%s182 + $0xdc] sm:$0xf]
        %v241 = vld [vmem:[%s182 + $0xe0] sm:$0xf]
        %v242 = vld [vmem:[%s182 + $0xe4] sm:$0xf]
        %v243 = vld [vmem:[%s182 + $0xe8] sm:$0xf]
        %v244 = vld [vmem:[%s182 + $0xec] sm:$0xf]
        %v245 = vld [vmem:[%s182 + $0xf0] sm:$0xf]
        %v246 = vld [vmem:[%s182 + $0xf4] sm:$0xf]
        %v247 = vld [vmem:[%s182 + $0xf8] sm:$0xf]
        %v248 = vld [vmem:[%s182 + $0xfc] sm:$0xf]
        %v249 = vld [vmem:[%s1] sm:$0x3]
        %v250 = vld [vmem:[%s182 + $0x100] sm:$0x1]
        %s251 = scalar_lea.vmem %s1, 2
        %v252 = vld [vmem:[%s251] sm:$0x3]
        %v318 = vunpack.c.l.b16 %v185
        %v319 = vunpack.c.l.b16 %v186
        %v320 = vunpack.c.l.b16 %v187
        %v321 = vunpack.c.l.b16 %v188
        %v322 = vunpack.c.l.b16 %v189
        %v323 = vunpack.c.l.b16 %v190
        %v324 = vunpack.c.l.b16 %v191
        %v325 = vunpack.c.l.b16 %v192
        %v326 = vunpack.c.l.b16 %v193
        %v327 = vunpack.c.l.b16 %v194
        %v328 = vunpack.c.l.b16 %v195
        %v329 = vunpack.c.l.b16 %v196
        %v330 = vunpack.c.l.b16 %v197
        %v331 = vunpack.c.l.b16 %v198
        %v332 = vunpack.c.l.b16 %v199
        %v333 = vunpack.c.l.b16 %v200
        %v334 = vunpack.c.l.b16 %v201
        %v335 = vunpack.c.l.b16 %v202
        %v336 = vunpack.c.l.b16 %v203
        %v337 = vunpack.c.l.b16 %v204
        %v338 = vunpack.c.l.b16 %v205
        %v339 = vunpack.c.l.b16 %v206
        %v340 = vunpack.c.l.b16 %v207
        %v341 = vunpack.c.l.b16 %v208
        %v342 = vunpack.c.l.b16 %v209
        %v343 = vunpack.c.l.b16 %v210
        %v344 = vunpack.c.l.b16 %v211
        %v345 = vunpack.c.l.b16 %v212
        %v346 = vunpack.c.l.b16 %v213
        %v347 = vunpack.c.l.b16 %v214
        %v348 = vunpack.c.l.b16 %v215
        %v349 = vunpack.c.l.b16 %v216
        %v350 = vunpack.c.l.b16 %v217
        %v351 = vunpack.c.l.b16 %v218
        %v352 = vunpack.c.l.b16 %v219
        %v353 = vunpack.c.l.b16 %v220
        %v354 = vunpack.c.l.b16 %v221
        %v355 = vunpack.c.l.b16 %v222
        %v356 = vunpack.c.l.b16 %v223
        %v357 = vunpack.c.l.b16 %v224
        %v358 = vunpack.c.l.b16 %v225
        %v359 = vunpack.c.l.b16 %v226
        %v360 = vunpack.c.l.b16 %v227
        %v361 = vunpack.c.l.b16 %v228
        %v362 = vunpack.c.l.b16 %v229
        %v363 = vunpack.c.l.b16 %v230
        %v364 = vunpack.c.l.b16 %v231
        %v365 = vunpack.c.l.b16 %v232
        %v366 = vunpack.c.l.b16 %v233
        %v367 = vunpack.c.l.b16 %v234
        %v368 = vunpack.c.l.b16 %v235
        %v369 = vunpack.c.l.b16 %v236
        %v370 = vunpack.c.l.b16 %v237
        %v371 = vunpack.c.l.b16 %v238
        %v372 = vunpack.c.l.b16 %v239
        %v373 = vunpack.c.l.b16 %v240
        %v374 = vunpack.c.l.b16 %v241
        %v375 = vunpack.c.l.b16 %v242
        %v376 = vunpack.c.l.b16 %v243
        %v377 = vunpack.c.l.b16 %v244
        %v378 = vunpack.c.l.b16 %v245
        %v379 = vunpack.c.l.b16 %v246
        %v380 = vunpack.c.l.b16 %v247
        %v381 = vunpack.c.l.b16 %v248
        %v382 = vunpack.c.l.b16 %v250
        %v383 = vpack.c.b16 %v319, %v318
        %v384 = vpack.c.b16 %v321, %v320
        %v385 = vpack.c.b16 %v323, %v322
        %v386 = vpack.c.b16 %v325, %v324
        %v387 = vpack.c.b16 %v327, %v326
        %v388 = vpack.c.b16 %v329, %v328
        %v389 = vpack.c.b16 %v331, %v330
        %v390 = vpack.c.b16 %v333, %v332
        %v391 = vpack.c.b16 %v335, %v334
        %v392 = vpack.c.b16 %v337, %v336
        %v393 = vpack.c.b16 %v339, %v338
        %v394 = vpack.c.b16 %v341, %v340
        %v395 = vpack.c.b16 %v343, %v342
        %v396 = vpack.c.b16 %v345, %v344
        %v397 = vpack.c.b16 %v347, %v346
        %v398 = vpack.c.b16 %v349, %v348
        %v399 = vpack.c.b16 %v351, %v350
        %v400 = vpack.c.b16 %v353, %v352
        %v401 = vpack.c.b16 %v355, %v354
        %v402 = vpack.c.b16 %v357, %v356
        %v403 = vpack.c.b16 %v359, %v358
        %v404 = vpack.c.b16 %v361, %v360
        %v405 = vpack.c.b16 %v363, %v362
        %v406 = vpack.c.b16 %v365, %v364
        %v407 = vpack.c.b16 %v367, %v366
        %v408 = vpack.c.b16 %v369, %v368
        %v409 = vpack.c.b16 %v371, %v370
        %v410 = vpack.c.b16 %v373, %v372
        %v411 = vpack.c.b16 %v375, %v374
        %v412 = vpack.c.b16 %v377, %v376
        %v413 = vpack.c.b16 %v379, %v378
        %v414 = vpack.c.b16 %v381, %v380
        %v415 = vpack.c.b16 %v382, %v382
        %vm416 = vsmask.f32 7424
        %v418 = vshrl.u32 %v383, 16
        %v420 = vshll.u32 %v383, 16
        %v422 = vrot.slane %v420, 1
        %v423 = vor.u32 %v418, %v422
        %v425 = vshll.u32 %v384, 16
        %v427 = vrot.slane %v425, 1
        %v428 = vsel %vm416, %v423, %v427
        %v429 = vshrl.u32 %v384, 16
        %v431 = vor.u32 %v429, %v427
        %v433 = vshll.u32 %v385, 16
        %v435 = vrot.slane %v433, 1
        %v436 = vsel %vm416, %v431, %v435
        %v437 = vshrl.u32 %v385, 16
        %v439 = vor.u32 %v437, %v435
        %v441 = vshll.u32 %v386, 16
        %v443 = vrot.slane %v441, 1
        %v444 = vsel %vm416, %v439, %v443
        %v445 = vshrl.u32 %v386, 16
        %v447 = vor.u32 %v445, %v443
        %v449 = vshll.u32 %v387, 16
        %v451 = vrot.slane %v449, 1
        %v452 = vsel %vm416, %v447, %v451
        %v453 = vshrl.u32 %v387, 16
        %v455 = vor.u32 %v453, %v451
        %v457 = vshll.u32 %v388, 16
        %v459 = vrot.slane %v457, 1
        %v460 = vsel %vm416, %v455, %v459
        %v461 = vshrl.u32 %v388, 16
        %v463 = vor.u32 %v461, %v459
        %v465 = vshll.u32 %v389, 16
        %v467 = vrot.slane %v465, 1
        %v468 = vsel %vm416, %v463, %v467
        %v469 = vshrl.u32 %v389, 16
        %v471 = vor.u32 %v469, %v467
        %v473 = vshll.u32 %v390, 16
        %v475 = vrot.slane %v473, 1
        %v476 = vsel %vm416, %v471, %v475
        %v477 = vshrl.u32 %v390, 16
        %v479 = vor.u32 %v477, %v475
        %v481 = vshll.u32 %v391, 16
        %v483 = vrot.slane %v481, 1
        %v484 = vsel %vm416, %v479, %v483
        %v485 = vshrl.u32 %v391, 16
        %v487 = vor.u32 %v485, %v483
        %v489 = vshll.u32 %v392, 16
        %v491 = vrot.slane %v489, 1
        %v492 = vsel %vm416, %v487, %v491
        %v493 = vshrl.u32 %v392, 16
        %v495 = vor.u32 %v493, %v491
        %v497 = vshll.u32 %v393, 16
        %v499 = vrot.slane %v497, 1
        %v500 = vsel %vm416, %v495, %v499
        %v501 = vshrl.u32 %v393, 16
        %v503 = vor.u32 %v501, %v499
        %v505 = vshll.u32 %v394, 16
        %v507 = vrot.slane %v505, 1
        %v508 = vsel %vm416, %v503, %v507
        %v509 = vshrl.u32 %v394, 16
        %v511 = vor.u32 %v509, %v507
        %v513 = vshll.u32 %v395, 16
        %v515 = vrot.slane %v513, 1
        %v516 = vsel %vm416, %v511, %v515
        %v517 = vshrl.u32 %v395, 16
        %v519 = vor.u32 %v517, %v515
        %v521 = vshll.u32 %v396, 16
        %v523 = vrot.slane %v521, 1
        %v524 = vsel %vm416, %v519, %v523
        %v525 = vshrl.u32 %v396, 16
        %v527 = vor.u32 %v525, %v523
        %v529 = vshll.u32 %v397, 16
        %v531 = vrot.slane %v529, 1
        %v532 = vsel %vm416, %v527, %v531
        %v533 = vshrl.u32 %v397, 16
        %v535 = vor.u32 %v533, %v531
        %v537 = vshll.u32 %v398, 16
        %v539 = vrot.slane %v537, 1
        %v540 = vsel %vm416, %v535, %v539
        %v541 = vshrl.u32 %v398, 16
        %v543 = vor.u32 %v541, %v539
        %v545 = vshll.u32 %v399, 16
        %v547 = vrot.slane %v545, 1
        %v548 = vsel %vm416, %v543, %v547
        %v549 = vshrl.u32 %v399, 16
        %v551 = vor.u32 %v549, %v547
        %v553 = vshll.u32 %v400, 16
        %v555 = vrot.slane %v553, 1
        %v556 = vsel %vm416, %v551, %v555
        %v557 = vshrl.u32 %v400, 16
        %v559 = vor.u32 %v557, %v555
        %v561 = vshll.u32 %v401, 16
        %v563 = vrot.slane %v561, 1
        %v564 = vsel %vm416, %v559, %v563
        %v565 = vshrl.u32 %v401, 16
        %v567 = vor.u32 %v565, %v563
        %v569 = vshll.u32 %v402, 16
        %v571 = vrot.slane %v569, 1
        %v572 = vsel %vm416, %v567, %v571
        %v573 = vshrl.u32 %v402, 16
        %v575 = vor.u32 %v573, %v571
        %v577 = vshll.u32 %v403, 16
        %v579 = vrot.slane %v577, 1
        %v580 = vsel %vm416, %v575, %v579
        %v581 = vshrl.u32 %v403, 16
        %v583 = vor.u32 %v581, %v579
        %v585 = vshll.u32 %v404, 16
        %v587 = vrot.slane %v585, 1
        %v588 = vsel %vm416, %v583, %v587
        %v589 = vshrl.u32 %v404, 16
        %v591 = vor.u32 %v589, %v587
        %v593 = vshll.u32 %v405, 16
        %v595 = vrot.slane %v593, 1
        %v596 = vsel %vm416, %v591, %v595
        %v597 = vshrl.u32 %v405, 16
        %v599 = vor.u32 %v597, %v595
        %v601 = vshll.u32 %v406, 16
        %v603 = vrot.slane %v601, 1
        %v604 = vsel %vm416, %v599, %v603
        %v605 = vshrl.u32 %v406, 16
        %v607 = vor.u32 %v605, %v603
        %v609 = vshll.u32 %v407, 16
        %v611 = vrot.slane %v609, 1
        %v612 = vsel %vm416, %v607, %v611
        %v613 = vshrl.u32 %v407, 16
        %v615 = vor.u32 %v613, %v611
        %v617 = vshll.u32 %v408, 16
        %v619 = vrot.slane %v617, 1
        %v620 = vsel %vm416, %v615, %v619
        %v621 = vshrl.u32 %v408, 16
        %v623 = vor.u32 %v621, %v619
        %v625 = vshll.u32 %v409, 16
        %v627 = vrot.slane %v625, 1
        %v628 = vsel %vm416, %v623, %v627
        %v629 = vshrl.u32 %v409, 16
        %v631 = vor.u32 %v629, %v627
        %v633 = vshll.u32 %v410, 16
        %v635 = vrot.slane %v633, 1
        %v636 = vsel %vm416, %v631, %v635
        %v637 = vshrl.u32 %v410, 16
        %v639 = vor.u32 %v637, %v635
        %v641 = vshll.u32 %v411, 16
        %v643 = vrot.slane %v641, 1
        %v644 = vsel %vm416, %v639, %v643
        %v645 = vshrl.u32 %v411, 16
        %v647 = vor.u32 %v645, %v643
        %v649 = vshll.u32 %v412, 16
        %v651 = vrot.slane %v649, 1
        %v652 = vsel %vm416, %v647, %v651
        %v653 = vshrl.u32 %v412, 16
        %v655 = vor.u32 %v653, %v651
        %v657 = vshll.u32 %v413, 16
        %v659 = vrot.slane %v657, 1
        %v660 = vsel %vm416, %v655, %v659
        %v661 = vshrl.u32 %v413, 16
        %v663 = vor.u32 %v661, %v659
        %v665 = vshll.u32 %v414, 16
        %v667 = vrot.slane %v665, 1
        %v668 = vsel %vm416, %v663, %v667
        %v669 = vshrl.u32 %v414, 16
        %v671 = vor.u32 %v669, %v667
        %v673 = vshll.u32 %v415, 16
        %v675 = vrot.slane %v673, 1
        %v676 = vsel %vm416, %v671, %v675
        %vm677 = vcmask 31744
        %v679 = vsel %vm677, %v428, 0
        %v682 = vsel %vm677, %v436, 0
        %v685 = vsel %vm677, %v444, 0
        %v688 = vsel %vm677, %v452, 0
        %v691 = vsel %vm677, %v460, 0
        %v694 = vsel %vm677, %v468, 0
        %v697 = vsel %vm677, %v476, 0
        %v700 = vsel %vm677, %v484, 0
        %v703 = vsel %vm677, %v492, 0
        %v706 = vsel %vm677, %v500, 0
        %v709 = vsel %vm677, %v508, 0
        %v712 = vsel %vm677, %v516, 0
        %v715 = vsel %vm677, %v524, 0
        %v718 = vsel %vm677, %v532, 0
        %v721 = vsel %vm677, %v540, 0
        %v724 = vsel %vm677, %v548, 0
        %v727 = vsel %vm677, %v556, 0
        %v730 = vsel %vm677, %v564, 0
        %v733 = vsel %vm677, %v572, 0
        %v736 = vsel %vm677, %v580, 0
        %v739 = vsel %vm677, %v588, 0
        %v742 = vsel %vm677, %v596, 0
        %v745 = vsel %vm677, %v604, 0
        %v748 = vsel %vm677, %v612, 0
        %v751 = vsel %vm677, %v620, 0
        %v754 = vsel %vm677, %v628, 0
        %v757 = vsel %vm677, %v636, 0
        %v760 = vsel %vm677, %v644, 0
        %v763 = vsel %vm677, %v652, 0
        %v766 = vsel %vm677, %v660, 0
        %v769 = vsel %vm677, %v668, 0
        %v772 = vsel %vm677, %v676, 0
        %vm774 = vcmask 1041408
        %v776 = vsel %vm774, %v252, 0
        %778 = vmatprep.subr.bf16.mxu0 0
        %779 = vmatpush1.bf16.msra.mxu0 0
        %780 = vmatprep.subr.bf16.mxu0 0
        %781 = vmatpush1.bf16.msra.mxu0 0
        %782 = vmatprep.subr.bf16.mxu0 0
        %783 = vmatpush1.bf16.msra.mxu0 0
        %784 = vmatprep.subr.bf16.mxu0 0
        %785 = vmatpush1.bf16.msra.mxu0 0
        %786 = vmatprep.subr.bf16.mxu0 0
        %787 = vmatpush1.bf16.msra.mxu0 0
        %788 = vmatprep.subr.bf16.mxu0 0
        %789 = vmatpush1.bf16.msra.mxu0 0
        %790 = vmatprep.subr.bf16.mxu0 0
        %791 = vmatpush1.bf16.msra.mxu0 0
        %792 = vmatprep.subr.bf16.mxu0 0
        %793 = vmatpush1.bf16.msra.mxu0 %v776
        %794 = vmatprep.subr.bf16.mxu0 0
        %795 = vmatpush2.bf16.msra.mxu0 0
        %796 = vmatprep.subr.bf16.mxu0 0
        %797 = vmatpush2.bf16.msra.mxu0 0
        %798 = vmatprep.subr.bf16.mxu0 0
        %799 = vmatpush2.bf16.msra.mxu0 0
        %800 = vmatprep.subr.bf16.mxu0 0
        %801 = vmatpush2.bf16.msra.mxu0 0
        %802 = vmatprep.subr.bf16.mxu0 0
        %803 = vmatpush2.bf16.msra.mxu0 0
        %804 = vmatprep.subr.bf16.mxu0 0
        %805 = vmatpush2.bf16.msra.mxu0 0
        %806 = vmatprep.subr.bf16.mxu0 0
        %807 = vmatpush2.bf16.msra.mxu0 0
        %808 = vmatprep.subr.bf16.mxu0 0
        %809 = vmatpush2.bf16.msra.mxu0 0
        %810 = vmatprep.mubr.bf16.mxu0 0
        %811 = vmatmul.mubr.bf16.gmra.mxu0 %v679
        %v812 = vpop.f32.mrf.mxu0
        %v813 = vadd.f32 0.0, %v812
        %v814 = vpop.f32.mrf.mxu0
        %v815 = vpop.f32.mrf.mxu0
        %v816 = vadd.f32 0.0, %v815
        %v817 = vpop.f32.mrf.mxu0
        %818 = vmatprep.mubr.bf16.mxu0 0
        %819 = vmatmul.mubr.bf16.gmra.mxu0 %v682
        %v820 = vpop.f32.mrf.mxu0
        %v821 = vpop.f32.mrf.mxu0
        %v822 = vpop.f32.mrf.mxu0
        %v823 = vpop.f32.mrf.mxu0
        %824 = vmatprep.mubr.bf16.mxu0 0
        %825 = vmatmul.mubr.bf16.gmra.mxu0 %v685
        %v826 = vpop.f32.mrf.mxu0
        %v827 = vadd.f32 0.0, %v826
        %v828 = vpop.f32.mrf.mxu0
        %v829 = vpop.f32.mrf.mxu0
        %v830 = vadd.f32 0.0, %v829
        %v831 = vpop.f32.mrf.mxu0
        %832 = vmatprep.mubr.bf16.mxu0 0
        %833 = vmatmul.mubr.bf16.gmra.mxu0 %v688
        %v834 = vpop.f32.mrf.mxu0
        %v835 = vpop.f32.mrf.mxu0
        %v836 = vpop.f32.mrf.mxu0
        %v837 = vpop.f32.mrf.mxu0
        %838 = vmatprep.mubr.bf16.mxu0 0
        %839 = vmatmul.mubr.bf16.gmra.mxu0 %v691
        %v840 = vpop.f32.mrf.mxu0
        %v841 = vadd.f32 0.0, %v840
        %v842 = vpop.f32.mrf.mxu0
        %v843 = vpop.f32.mrf.mxu0
        %v844 = vadd.f32 0.0, %v843
        %v845 = vpop.f32.mrf.mxu0
        %846 = vmatprep.mubr.bf16.mxu0 0
        %847 = vmatmul.mubr.bf16.gmra.mxu0 %v694
        %v848 = vpop.f32.mrf.mxu0
        %v849 = vpop.f32.mrf.mxu0
        %v850 = vpop.f32.mrf.mxu0
        %v851 = vpop.f32.mrf.mxu0
        %852 = vmatprep.mubr.bf16.mxu0 0
        %853 = vmatmul.mubr.bf16.gmra.mxu0 %v697
        %v854 = vpop.f32.mrf.mxu0
        %v855 = vadd.f32 0.0, %v854
        %v856 = vpop.f32.mrf.mxu0
        %v857 = vpop.f32.mrf.mxu0
        %v858 = vadd.f32 0.0, %v857
        %v859 = vpop.f32.mrf.mxu0
        %860 = vmatprep.mubr.bf16.mxu0 0
        %861 = vmatmul.mubr.bf16.gmra.mxu0 %v700
        %v862 = vpop.f32.mrf.mxu0
        %v863 = vpop.f32.mrf.mxu0
        %v864 = vpop.f32.mrf.mxu0
        %v865 = vpop.f32.mrf.mxu0
        %866 = vmatprep.mubr.bf16.mxu0 0
        %867 = vmatmul.mubr.bf16.gmra.mxu0 %v703
        %v868 = vpop.f32.mrf.mxu0
        %v869 = vadd.f32 0.0, %v868
        %v870 = vpop.f32.mrf.mxu0
        %v871 = vpop.f32.mrf.mxu0
        %v872 = vadd.f32 0.0, %v871
        %v873 = vpop.f32.mrf.mxu0
        %874 = vmatprep.mubr.bf16.mxu0 0
        %875 = vmatmul.mubr.bf16.gmra.mxu0 %v706
        %v876 = vpop.f32.mrf.mxu0
        %v877 = vpop.f32.mrf.mxu0
        %v878 = vpop.f32.mrf.mxu0
        %v879 = vpop.f32.mrf.mxu0
        %880 = vmatprep.mubr.bf16.mxu0 0
        %881 = vmatmul.mubr.bf16.gmra.mxu0 %v709
        %v882 = vpop.f32.mrf.mxu0
        %v883 = vadd.f32 0.0, %v882
        %v884 = vpop.f32.mrf.mxu0
        %v885 = vpop.f32.mrf.mxu0
        %v886 = vadd.f32 0.0, %v885
        %v887 = vpop.f32.mrf.mxu0
        %888 = vmatprep.mubr.bf16.mxu0 0
        %889 = vmatmul.mubr.bf16.gmra.mxu0 %v712
        %v890 = vpop.f32.mrf.mxu0
        %v891 = vpop.f32.mrf.mxu0
        %v892 = vpop.f32.mrf.mxu0
        %v893 = vpop.f32.mrf.mxu0
        %894 = vmatprep.mubr.bf16.mxu0 0
        %895 = vmatmul.mubr.bf16.gmra.mxu0 %v715
        %v896 = vpop.f32.mrf.mxu0
        %v897 = vadd.f32 0.0, %v896
        %v898 = vpop.f32.mrf.mxu0
        %v899 = vpop.f32.mrf.mxu0
        %v900 = vadd.f32 0.0, %v899
        %v901 = vpop.f32.mrf.mxu0
        %902 = vmatprep.mubr.bf16.mxu0 0
        %903 = vmatmul.mubr.bf16.gmra.mxu0 %v718
        %v904 = vpop.f32.mrf.mxu0
        %v905 = vpop.f32.mrf.mxu0
        %v906 = vpop.f32.mrf.mxu0
        %v907 = vpop.f32.mrf.mxu0
        %908 = vmatprep.mubr.bf16.mxu0 0
        %909 = vmatmul.mubr.bf16.gmra.mxu0 %v721
        %v910 = vpop.f32.mrf.mxu0
        %v911 = vadd.f32 0.0, %v910
        %v912 = vpop.f32.mrf.mxu0
        %v913 = vpop.f32.mrf.mxu0
        %v914 = vadd.f32 0.0, %v913
        %v915 = vpop.f32.mrf.mxu0
        %916 = vmatprep.mubr.bf16.mxu0 0
        %917 = vmatmul.mubr.bf16.gmra.mxu0 %v724
        %v918 = vpop.f32.mrf.mxu0
        %v919 = vpop.f32.mrf.mxu0
        %v920 = vpop.f32.mrf.mxu0
        %v921 = vpop.f32.mrf.mxu0
        %922 = vmatprep.mubr.bf16.mxu0 0
        %923 = vmatmul.mubr.bf16.gmra.mxu0 %v727
        %v924 = vpop.f32.mrf.mxu0
        %v925 = vadd.f32 0.0, %v924
        %v926 = vpop.f32.mrf.mxu0
        %v927 = vpop.f32.mrf.mxu0
        %v928 = vadd.f32 0.0, %v927
        %v929 = vpop.f32.mrf.mxu0
        %930 = vmatprep.mubr.bf16.mxu0 0
        %931 = vmatmul.mubr.bf16.gmra.mxu0 %v730
        %v932 = vpop.f32.mrf.mxu0
        %v933 = vpop.f32.mrf.mxu0
        %v934 = vpop.f32.mrf.mxu0
        %v935 = vpop.f32.mrf.mxu0
        %936 = vmatprep.mubr.bf16.mxu0 0
        %937 = vmatmul.mubr.bf16.gmra.mxu0 %v733
        %v938 = vpop.f32.mrf.mxu0
        %v939 = vadd.f32 0.0, %v938
        %v940 = vpop.f32.mrf.mxu0
        %v941 = vpop.f32.mrf.mxu0
        %v942 = vadd.f32 0.0, %v941
        %v943 = vpop.f32.mrf.mxu0
        %944 = vmatprep.mubr.bf16.mxu0 0
        %945 = vmatmul.mubr.bf16.gmra.mxu0 %v736
        %v946 = vpop.f32.mrf.mxu0
        %v947 = vpop.f32.mrf.mxu0
        %v948 = vpop.f32.mrf.mxu0
        %v949 = vpop.f32.mrf.mxu0
        %950 = vmatprep.mubr.bf16.mxu0 0
        %951 = vmatmul.mubr.bf16.gmra.mxu0 %v739
        %v952 = vpop.f32.mrf.mxu0
        %v953 = vadd.f32 0.0, %v952
        %v954 = vpop.f32.mrf.mxu0
        %v955 = vpop.f32.mrf.mxu0
        %v956 = vadd.f32 0.0, %v955
        %v957 = vpop.f32.mrf.mxu0
        %958 = vmatprep.mubr.bf16.mxu0 0
        %959 = vmatmul.mubr.bf16.gmra.mxu0 %v742
        %v960 = vpop.f32.mrf.mxu0
        %v961 = vpop.f32.mrf.mxu0
        %v962 = vpop.f32.mrf.mxu0
        %v963 = vpop.f32.mrf.mxu0
        %964 = vmatprep.mubr.bf16.mxu0 0
        %965 = vmatmul.mubr.bf16.gmra.mxu0 %v745
        %v966 = vpop.f32.mrf.mxu0
        %v967 = vadd.f32 0.0, %v966
        %v968 = vpop.f32.mrf.mxu0
        %v969 = vpop.f32.mrf.mxu0
        %v970 = vadd.f32 0.0, %v969
        %v971 = vpop.f32.mrf.mxu0
        %972 = vmatprep.mubr.bf16.mxu0 0
        %973 = vmatmul.mubr.bf16.gmra.mxu0 %v748
        %v974 = vpop.f32.mrf.mxu0
        %v975 = vpop.f32.mrf.mxu0
        %v976 = vpop.f32.mrf.mxu0
        %v977 = vpop.f32.mrf.mxu0
        %978 = vmatprep.mubr.bf16.mxu0 0
        %979 = vmatmul.mubr.bf16.gmra.mxu0 %v751
        %v980 = vpop.f32.mrf.mxu0
        %v981 = vadd.f32 0.0, %v980
        %v982 = vpop.f32.mrf.mxu0
        %v983 = vpop.f32.mrf.mxu0
        %v984 = vadd.f32 0.0, %v983
        %v985 = vpop.f32.mrf.mxu0
        %986 = vmatprep.mubr.bf16.mxu0 0
        %987 = vmatmul.mubr.bf16.gmra.mxu0 %v754
        %v988 = vpop.f32.mrf.mxu0
        %v989 = vpop.f32.mrf.mxu0
        %v990 = vpop.f32.mrf.mxu0
        %v991 = vpop.f32.mrf.mxu0
        %992 = vmatprep.mubr.bf16.mxu0 0
        %993 = vmatmul.mubr.bf16.gmra.mxu0 %v757
        %v994 = vpop.f32.mrf.mxu0
        %v995 = vadd.f32 0.0, %v994
        %v996 = vpop.f32.mrf.mxu0
        %v997 = vpop.f32.mrf.mxu0
        %v998 = vadd.f32 0.0, %v997
        %v999 = vpop.f32.mrf.mxu0
        %1000 = vmatprep.mubr.bf16.mxu0 0
        %1001 = vmatmul.mubr.bf16.gmra.mxu0 %v760
        %v1002 = vpop.f32.mrf.mxu0
        %v1003 = vpop.f32.mrf.mxu0
        %v1004 = vpop.f32.mrf.mxu0
        %v1005 = vpop.f32.mrf.mxu0
        %1006 = vmatprep.mubr.bf16.mxu0 0
        %1007 = vmatmul.mubr.bf16.gmra.mxu0 %v763
        %v1008 = vpop.f32.mrf.mxu0
        %v1009 = vadd.f32 0.0, %v1008
        %v1010 = vpop.f32.mrf.mxu0
        %v1011 = vpop.f32.mrf.mxu0
        %v1012 = vadd.f32 0.0, %v1011
        %v1013 = vpop.f32.mrf.mxu0
        %1014 = vmatprep.mubr.bf16.mxu0 0
        %1015 = vmatmul.mubr.bf16.gmra.mxu0 %v766
        %v1016 = vpop.f32.mrf.mxu0
        %v1017 = vpop.f32.mrf.mxu0
        %v1018 = vpop.f32.mrf.mxu0
        %v1019 = vpop.f32.mrf.mxu0
        %1020 = vmatprep.mubr.bf16.mxu0 0
        %1021 = vmatmul.mubr.bf16.gmra.mxu0 %v769
        %v1022 = vpop.f32.mrf.mxu0
        %v1023 = vadd.f32 0.0, %v1022
        %v1024 = vpop.f32.mrf.mxu0
        %v1025 = vpop.f32.mrf.mxu0
        %v1026 = vadd.f32 0.0, %v1025
        %v1027 = vpop.f32.mrf.mxu0
        %1028 = vmatprep.mubr.bf16.mxu0 0
        %1029 = vmatmul.mubr.bf16.gmra.mxu0 %v772
        %v1030 = vpop.f32.mrf.mxu0
        %v1031 = vpop.f32.mrf.mxu0
        %v1032 = vpop.f32.mrf.mxu0
        %v1033 = vpop.f32.mrf.mxu0
        %1034 = vdwg.mxu0
        %v1035 = vsel %vm677, %v383, 0
        %v1037 = vsel %vm677, %v384, 0
        %v1039 = vsel %vm677, %v385, 0
        %v1041 = vsel %vm677, %v386, 0
        %v1043 = vsel %vm677, %v387, 0
        %v1045 = vsel %vm677, %v388, 0
        %v1047 = vsel %vm677, %v389, 0
        %v1049 = vsel %vm677, %v390, 0
        %v1051 = vsel %vm677, %v391, 0
        %v1053 = vsel %vm677, %v392, 0
        %v1055 = vsel %vm677, %v393, 0
        %v1057 = vsel %vm677, %v394, 0
        %v1059 = vsel %vm677, %v395, 0
        %v1061 = vsel %vm677, %v396, 0
        %v1063 = vsel %vm677, %v397, 0
        %v1065 = vsel %vm677, %v398, 0
        %v1067 = vsel %vm677, %v399, 0
        %v1069 = vsel %vm677, %v400, 0
        %v1071 = vsel %vm677, %v401, 0
        %v1073 = vsel %vm677, %v402, 0
        %v1075 = vsel %vm677, %v403, 0
        %v1077 = vsel %vm677, %v404, 0
        %v1079 = vsel %vm677, %v405, 0
        %v1081 = vsel %vm677, %v406, 0
        %v1083 = vsel %vm677, %v407, 0
        %v1085 = vsel %vm677, %v408, 0
        %v1087 = vsel %vm677, %v409, 0
        %v1089 = vsel %vm677, %v410, 0
        %v1091 = vsel %vm677, %v411, 0
        %v1093 = vsel %vm677, %v412, 0
        %v1095 = vsel %vm677, %v413, 0
        %v1097 = vsel %vm677, %v414, 0
        %v1100 = vsel %vm774, %v249, 0
        %1102 = vmatprep.subr.bf16.mxu0 0
        %1103 = vmatpush1.bf16.msra.mxu0 0
        %1104 = vmatprep.subr.bf16.mxu0 0
        %1105 = vmatpush1.bf16.msra.mxu0 0
        %1106 = vmatprep.subr.bf16.mxu0 0
        %1107 = vmatpush1.bf16.msra.mxu0 0
        %1108 = vmatprep.subr.bf16.mxu0 0
        %1109 = vmatpush1.bf16.msra.mxu0 0
        %1110 = vmatprep.subr.bf16.mxu0 0
        %1111 = vmatpush1.bf16.msra.mxu0 0
        %1112 = vmatprep.subr.bf16.mxu0 0
        %1113 = vmatpush1.bf16.msra.mxu0 0
        %1114 = vmatprep.subr.bf16.mxu0 0
        %1115 = vmatpush1.bf16.msra.mxu0 0
        %1116 = vmatprep.subr.bf16.mxu0 0
        %1117 = vmatpush1.bf16.msra.mxu0 %v1100
        %1118 = vmatprep.subr.bf16.mxu0 0
        %1119 = vmatpush2.bf16.msra.mxu0 0
        %1120 = vmatprep.subr.bf16.mxu0 0
        %1121 = vmatpush2.bf16.msra.mxu0 0
        %1122 = vmatprep.subr.bf16.mxu0 0
        %1123 = vmatpush2.bf16.msra.mxu0 0
        %1124 = vmatprep.subr.bf16.mxu0 0
        %1125 = vmatpush2.bf16.msra.mxu0 0
        %1126 = vmatprep.subr.bf16.mxu0 0
        %1127 = vmatpush2.bf16.msra.mxu0 0
        %1128 = vmatprep.subr.bf16.mxu0 0
        %1129 = vmatpush2.bf16.msra.mxu0 0
        %1130 = vmatprep.subr.bf16.mxu0 0
        %1131 = vmatpush2.bf16.msra.mxu0 0
        %1132 = vmatprep.subr.bf16.mxu0 0
        %1133 = vmatpush2.bf16.msra.mxu0 0
        %1134 = vmatprep.mubr.bf16.mxu0 0
        %1135 = vmatmul.mubr.bf16.gmra.mxu0 %v1035
        %v1136 = vpop.f32.mrf.mxu0
        %v1137 = vadd.f32 %v813, %v1136
        %v1138 = vpop.f32.mrf.mxu0
        %v1139 = vpop.f32.mrf.mxu0
        %v1140 = vadd.f32 %v816, %v1139
        %v1141 = vpop.f32.mrf.mxu0
        %1142 = vmatprep.mubr.bf16.mxu0 0
        %1143 = vmatmul.mubr.bf16.gmra.mxu0 %v1037
        %v1144 = vpop.f32.mrf.mxu0
        %v1145 = vpop.f32.mrf.mxu0
        %v1146 = vpop.f32.mrf.mxu0
        %v1147 = vpop.f32.mrf.mxu0
        %1148 = vmatprep.mubr.bf16.mxu0 0
        %1149 = vmatmul.mubr.bf16.gmra.mxu0 %v1039
        %v1150 = vpop.f32.mrf.mxu0
        %v1151 = vadd.f32 %v827, %v1150
        %v1152 = vpop.f32.mrf.mxu0
        %v1153 = vpop.f32.mrf.mxu0
        %v1154 = vadd.f32 %v830, %v1153
        %v1155 = vpop.f32.mrf.mxu0
        %1156 = vmatprep.mubr.bf16.mxu0 0
        %1157 = vmatmul.mubr.bf16.gmra.mxu0 %v1041
        %v1158 = vpop.f32.mrf.mxu0
        %v1159 = vpop.f32.mrf.mxu0
        %v1160 = vpop.f32.mrf.mxu0
        %v1161 = vpop.f32.mrf.mxu0
        %1162 = vmatprep.mubr.bf16.mxu0 0
        %1163 = vmatmul.mubr.bf16.gmra.mxu0 %v1043
        %v1164 = vpop.f32.mrf.mxu0
        %v1165 = vadd.f32 %v841, %v1164
        %v1166 = vpop.f32.mrf.mxu0
        %v1167 = vpop.f32.mrf.mxu0
        %v1168 = vadd.f32 %v844, %v1167
        %v1169 = vpop.f32.mrf.mxu0
        %1170 = vmatprep.mubr.bf16.mxu0 0
        %1171 = vmatmul.mubr.bf16.gmra.mxu0 %v1045
        %v1172 = vpop.f32.mrf.mxu0
        %v1173 = vpop.f32.mrf.mxu0
        %v1174 = vpop.f32.mrf.mxu0
        %v1175 = vpop.f32.mrf.mxu0
        %1176 = vmatprep.mubr.bf16.mxu0 0
        %1177 = vmatmul.mubr.bf16.gmra.mxu0 %v1047
        %v1178 = vpop.f32.mrf.mxu0
        %v1179 = vadd.f32 %v855, %v1178
        %v1180 = vpop.f32.mrf.mxu0
        %v1181 = vpop.f32.mrf.mxu0
        %v1182 = vadd.f32 %v858, %v1181
        %v1183 = vpop.f32.mrf.mxu0
        %1184 = vmatprep.mubr.bf16.mxu0 0
        %1185 = vmatmul.mubr.bf16.gmra.mxu0 %v1049
        %v1186 = vpop.f32.mrf.mxu0
        %v1187 = vpop.f32.mrf.mxu0
        %v1188 = vpop.f32.mrf.mxu0
        %v1189 = vpop.f32.mrf.mxu0
        %1190 = vmatprep.mubr.bf16.mxu0 0
        %1191 = vmatmul.mubr.bf16.gmra.mxu0 %v1051
        %v1192 = vpop.f32.mrf.mxu0
        %v1193 = vadd.f32 %v869, %v1192
        %v1194 = vpop.f32.mrf.mxu0
        %v1195 = vpop.f32.mrf.mxu0
        %v1196 = vadd.f32 %v872, %v1195
        %v1197 = vpop.f32.mrf.mxu0
        %1198 = vmatprep.mubr.bf16.mxu0 0
        %1199 = vmatmul.mubr.bf16.gmra.mxu0 %v1053
        %v1200 = vpop.f32.mrf.mxu0
        %v1201 = vpop.f32.mrf.mxu0
        %v1202 = vpop.f32.mrf.mxu0
        %v1203 = vpop.f32.mrf.mxu0
        %1204 = vmatprep.mubr.bf16.mxu0 0
        %1205 = vmatmul.mubr.bf16.gmra.mxu0 %v1055
        %v1206 = vpop.f32.mrf.mxu0
        %v1207 = vadd.f32 %v883, %v1206
        %v1208 = vpop.f32.mrf.mxu0
        %v1209 = vpop.f32.mrf.mxu0
        %v1210 = vadd.f32 %v886, %v1209
        %v1211 = vpop.f32.mrf.mxu0
        %1212 = vmatprep.mubr.bf16.mxu0 0
        %1213 = vmatmul.mubr.bf16.gmra.mxu0 %v1057
        %v1214 = vpop.f32.mrf.mxu0
        %v1215 = vpop.f32.mrf.mxu0
        %v1216 = vpop.f32.mrf.mxu0
        %v1217 = vpop.f32.mrf.mxu0
        %1218 = vmatprep.mubr.bf16.mxu0 0
        %1219 = vmatmul.mubr.bf16.gmra.mxu0 %v1059
        %v1220 = vpop.f32.mrf.mxu0
        %v1221 = vadd.f32 %v897, %v1220
        %v1222 = vpop.f32.mrf.mxu0
        %v1223 = vpop.f32.mrf.mxu0
        %v1224 = vadd.f32 %v900, %v1223
        %v1225 = vpop.f32.mrf.mxu0
        %1226 = vmatprep.mubr.bf16.mxu0 0
        %1227 = vmatmul.mubr.bf16.gmra.mxu0 %v1061
        %v1228 = vpop.f32.mrf.mxu0
        %v1229 = vpop.f32.mrf.mxu0
        %v1230 = vpop.f32.mrf.mxu0
        %v1231 = vpop.f32.mrf.mxu0
        %1232 = vmatprep.mubr.bf16.mxu0 0
        %1233 = vmatmul.mubr.bf16.gmra.mxu0 %v1063
        %v1234 = vpop.f32.mrf.mxu0
        %v1235 = vadd.f32 %v911, %v1234
        %v1236 = vpop.f32.mrf.mxu0
        %v1237 = vpop.f32.mrf.mxu0
        %v1238 = vadd.f32 %v914, %v1237
        %v1239 = vpop.f32.mrf.mxu0
        %1240 = vmatprep.mubr.bf16.mxu0 0
        %1241 = vmatmul.mubr.bf16.gmra.mxu0 %v1065
        %v1242 = vpop.f32.mrf.mxu0
        %v1243 = vpop.f32.mrf.mxu0
        %v1244 = vpop.f32.mrf.mxu0
        %v1245 = vpop.f32.mrf.mxu0
        %1246 = vmatprep.mubr.bf16.mxu0 0
        %1247 = vmatmul.mubr.bf16.gmra.mxu0 %v1067
        %v1248 = vpop.f32.mrf.mxu0
        %v1249 = vadd.f32 %v925, %v1248
        %v1250 = vpop.f32.mrf.mxu0
        %v1251 = vpop.f32.mrf.mxu0
        %v1252 = vadd.f32 %v928, %v1251
        %v1253 = vpop.f32.mrf.mxu0
        %1254 = vmatprep.mubr.bf16.mxu0 0
        %1255 = vmatmul.mubr.bf16.gmra.mxu0 %v1069
        %v1256 = vpop.f32.mrf.mxu0
        %v1257 = vpop.f32.mrf.mxu0
        %v1258 = vpop.f32.mrf.mxu0
        %v1259 = vpop.f32.mrf.mxu0
        %1260 = vmatprep.mubr.bf16.mxu0 0
        %1261 = vmatmul.mubr.bf16.gmra.mxu0 %v1071
        %v1262 = vpop.f32.mrf.mxu0
        %v1263 = vadd.f32 %v939, %v1262
        %v1264 = vpop.f32.mrf.mxu0
        %v1265 = vpop.f32.mrf.mxu0
        %v1266 = vadd.f32 %v942, %v1265
        %v1267 = vpop.f32.mrf.mxu0
        %1268 = vmatprep.mubr.bf16.mxu0 0
        %1269 = vmatmul.mubr.bf16.gmra.mxu0 %v1073
        %v1270 = vpop.f32.mrf.mxu0
        %v1271 = vpop.f32.mrf.mxu0
        %v1272 = vpop.f32.mrf.mxu0
        %v1273 = vpop.f32.mrf.mxu0
        %1274 = vmatprep.mubr.bf16.mxu0 0
        %1275 = vmatmul.mubr.bf16.gmra.mxu0 %v1075
        %v1276 = vpop.f32.mrf.mxu0
        %v1277 = vadd.f32 %v953, %v1276
        %v1278 = vpop.f32.mrf.mxu0
        %v1279 = vpop.f32.mrf.mxu0
        %v1280 = vadd.f32 %v956, %v1279
        %v1281 = vpop.f32.mrf.mxu0
        %1282 = vmatprep.mubr.bf16.mxu0 0
        %1283 = vmatmul.mubr.bf16.gmra.mxu0 %v1077
        %v1284 = vpop.f32.mrf.mxu0
        %v1285 = vpop.f32.mrf.mxu0
        %v1286 = vpop.f32.mrf.mxu0
        %v1287 = vpop.f32.mrf.mxu0
        %1288 = vmatprep.mubr.bf16.mxu0 0
        %1289 = vmatmul.mubr.bf16.gmra.mxu0 %v1079
        %v1290 = vpop.f32.mrf.mxu0
        %v1291 = vadd.f32 %v967, %v1290
        %v1292 = vpop.f32.mrf.mxu0
        %v1293 = vpop.f32.mrf.mxu0
        %v1294 = vadd.f32 %v970, %v1293
        %v1295 = vpop.f32.mrf.mxu0
        %1296 = vmatprep.mubr.bf16.mxu0 0
        %1297 = vmatmul.mubr.bf16.gmra.mxu0 %v1081
        %v1298 = vpop.f32.mrf.mxu0
        %v1299 = vpop.f32.mrf.mxu0
        %v1300 = vpop.f32.mrf.mxu0
        %v1301 = vpop.f32.mrf.mxu0
        %1302 = vmatprep.mubr.bf16.mxu0 0
        %1303 = vmatmul.mubr.bf16.gmra.mxu0 %v1083
        %v1304 = vpop.f32.mrf.mxu0
        %v1305 = vadd.f32 %v981, %v1304
        %v1306 = vpop.f32.mrf.mxu0
        %v1307 = vpop.f32.mrf.mxu0
        %v1308 = vadd.f32 %v984, %v1307
        %v1309 = vpop.f32.mrf.mxu0
        %1310 = vmatprep.mubr.bf16.mxu0 0
        %1311 = vmatmul.mubr.bf16.gmra.mxu0 %v1085
        %v1312 = vpop.f32.mrf.mxu0
        %v1313 = vpop.f32.mrf.mxu0
        %v1314 = vpop.f32.mrf.mxu0
        %v1315 = vpop.f32.mrf.mxu0
        %1316 = vmatprep.mubr.bf16.mxu0 0
        %1317 = vmatmul.mubr.bf16.gmra.mxu0 %v1087
        %v1318 = vpop.f32.mrf.mxu0
        %v1319 = vadd.f32 %v995, %v1318
        %v1320 = vpop.f32.mrf.mxu0
        %v1321 = vpop.f32.mrf.mxu0
        %v1322 = vadd.f32 %v998, %v1321
        %v1323 = vpop.f32.mrf.mxu0
        %1324 = vmatprep.mubr.bf16.mxu0 0
        %1325 = vmatmul.mubr.bf16.gmra.mxu0 %v1089
        %v1326 = vpop.f32.mrf.mxu0
        %v1327 = vpop.f32.mrf.mxu0
        %v1328 = vpop.f32.mrf.mxu0
        %v1329 = vpop.f32.mrf.mxu0
        %1330 = vmatprep.mubr.bf16.mxu0 0
        %1331 = vmatmul.mubr.bf16.gmra.mxu0 %v1091
        %v1332 = vpop.f32.mrf.mxu0
        %v1333 = vadd.f32 %v1009, %v1332
        %v1334 = vpop.f32.mrf.mxu0
        %v1335 = vpop.f32.mrf.mxu0
        %v1336 = vadd.f32 %v1012, %v1335
        %v1337 = vpop.f32.mrf.mxu0
        %1338 = vmatprep.mubr.bf16.mxu0 0
        %1339 = vmatmul.mubr.bf16.gmra.mxu0 %v1093
        %v1340 = vpop.f32.mrf.mxu0
        %v1341 = vpop.f32.mrf.mxu0
        %v1342 = vpop.f32.mrf.mxu0
        %v1343 = vpop.f32.mrf.mxu0
        %1344 = vmatprep.mubr.bf16.mxu0 0
        %1345 = vmatmul.mubr.bf16.gmra.mxu0 %v1095
        %v1346 = vpop.f32.mrf.mxu0
        %v1347 = vadd.f32 %v1023, %v1346
        %v1348 = vpop.f32.mrf.mxu0
        %v1349 = vpop.f32.mrf.mxu0
        %v1350 = vadd.f32 %v1026, %v1349
        %v1351 = vpop.f32.mrf.mxu0
        %1352 = vmatprep.mubr.bf16.mxu0 0
        %1353 = vmatmul.mubr.bf16.gmra.mxu0 %v1097
        %v1354 = vpop.f32.mrf.mxu0
        %v1355 = vpop.f32.mrf.mxu0
        %v1356 = vpop.f32.mrf.mxu0
        %v1357 = vpop.f32.mrf.mxu0
        %1358 = vdwg.mxu0
        %v1359 = vld [vmem:[%s182] sm:$0xe]
        %s1360 = scalar_lea.vmem %s1, 4
        %v1361 = vld [vmem:[%s1360] sm:$0x3]
        %v1363 = vunpack.c.l.b16 %v1359
        %v1364 = vpack.c.b16 %v319, %v1363
        %vm1365 = vcmask 1046528
        %v1366 = vrot.slane %v1364, 1
        %v1367 = vrot.slane %v384, 1
        %v1368 = vsel %vm1365, %v1366, %v1367
        %v1369 = vrot.slane %v385, 1
        %v1370 = vsel %vm1365, %v1367, %v1369
        %v1371 = vrot.slane %v386, 1
        %v1372 = vsel %vm1365, %v1369, %v1371
        %v1373 = vrot.slane %v387, 1
        %v1374 = vsel %vm1365, %v1371, %v1373
        %v1375 = vrot.slane %v388, 1
        %v1376 = vsel %vm1365, %v1373, %v1375
        %v1377 = vrot.slane %v389, 1
        %v1378 = vsel %vm1365, %v1375, %v1377
        %v1379 = vrot.slane %v390, 1
        %v1380 = vsel %vm1365, %v1377, %v1379
        %v1381 = vrot.slane %v391, 1
        %v1382 = vsel %vm1365, %v1379, %v1381
        %v1383 = vrot.slane %v392, 1
        %v1384 = vsel %vm1365, %v1381, %v1383
        %v1385 = vrot.slane %v393, 1
        %v1386 = vsel %vm1365, %v1383, %v1385
        %v1387 = vrot.slane %v394, 1
        %v1388 = vsel %vm1365, %v1385, %v1387
        %v1389 = vrot.slane %v395, 1
        %v1390 = vsel %vm1365, %v1387, %v1389
        %v1391 = vrot.slane %v396, 1
        %v1392 = vsel %vm1365, %v1389, %v1391
        %v1393 = vrot.slane %v397, 1
        %v1394 = vsel %vm1365, %v1391, %v1393
        %v1395 = vrot.slane %v398, 1
        %v1396 = vsel %vm1365, %v1393, %v1395
        %v1397 = vrot.slane %v399, 1
        %v1398 = vsel %vm1365, %v1395, %v1397
        %v1399 = vrot.slane %v400, 1
        %v1400 = vsel %vm1365, %v1397, %v1399
        %v1401 = vrot.slane %v401, 1
        %v1402 = vsel %vm1365, %v1399, %v1401
        %v1403 = vrot.slane %v402, 1
        %v1404 = vsel %vm1365, %v1401, %v1403
        %v1405 = vrot.slane %v403, 1
        %v1406 = vsel %vm1365, %v1403, %v1405
        %v1407 = vrot.slane %v404, 1
        %v1408 = vsel %vm1365, %v1405, %v1407
        %v1409 = vrot.slane %v405, 1
        %v1410 = vsel %vm1365, %v1407, %v1409
        %v1411 = vrot.slane %v406, 1
        %v1412 = vsel %vm1365, %v1409, %v1411
        %v1413 = vrot.slane %v407, 1
        %v1414 = vsel %vm1365, %v1411, %v1413
        %v1415 = vrot.slane %v408, 1
        %v1416 = vsel %vm1365, %v1413, %v1415
        %v1417 = vrot.slane %v409, 1
        %v1418 = vsel %vm1365, %v1415, %v1417
        %v1419 = vrot.slane %v410, 1
        %v1420 = vsel %vm1365, %v1417, %v1419
        %v1421 = vrot.slane %v411, 1
        %v1422 = vsel %vm1365, %v1419, %v1421
        %v1423 = vrot.slane %v412, 1
        %v1424 = vsel %vm1365, %v1421, %v1423
        %v1425 = vrot.slane %v413, 1
        %v1426 = vsel %vm1365, %v1423, %v1425
        %v1427 = vrot.slane %v414, 1
        %v1428 = vsel %vm1365, %v1425, %v1427
        %v1429 = vrot.slane %v415, 1
        %v1430 = vsel %vm1365, %v1427, %v1429
        %v1432 = vsel %vm677, %v1368, 0
        %v1435 = vsel %vm677, %v1370, 0
        %v1438 = vsel %vm677, %v1372, 0
        %v1441 = vsel %vm677, %v1374, 0
        %v1444 = vsel %vm677, %v1376, 0
        %v1447 = vsel %vm677, %v1378, 0
        %v1450 = vsel %vm677, %v1380, 0
        %v1453 = vsel %vm677, %v1382, 0
        %v1456 = vsel %vm677, %v1384, 0
        %v1459 = vsel %vm677, %v1386, 0
        %v1462 = vsel %vm677, %v1388, 0
        %v1465 = vsel %vm677, %v1390, 0
        %v1468 = vsel %vm677, %v1392, 0
        %v1471 = vsel %vm677, %v1394, 0
        %v1474 = vsel %vm677, %v1396, 0
        %v1477 = vsel %vm677, %v1398, 0
        %v1480 = vsel %vm677, %v1400, 0
        %v1483 = vsel %vm677, %v1402, 0
        %v1486 = vsel %vm677, %v1404, 0
        %v1489 = vsel %vm677, %v1406, 0
        %v1492 = vsel %vm677, %v1408, 0
        %v1495 = vsel %vm677, %v1410, 0
        %v1498 = vsel %vm677, %v1412, 0
        %v1501 = vsel %vm677, %v1414, 0
        %v1504 = vsel %vm677, %v1416, 0
        %v1507 = vsel %vm677, %v1418, 0
        %v1510 = vsel %vm677, %v1420, 0
        %v1513 = vsel %vm677, %v1422, 0
        %v1516 = vsel %vm677, %v1424, 0
        %v1519 = vsel %vm677, %v1426, 0
        %v1522 = vsel %vm677, %v1428, 0
        %v1525 = vsel %vm677, %v1430, 0
        %v1528 = vsel %vm774, %v1361, 0
        %1530 = vmatprep.subr.bf16.mxu0 0
        %1531 = vmatpush1.bf16.msra.mxu0 0
        %1532 = vmatprep.subr.bf16.mxu0 0
        %1533 = vmatpush1.bf16.msra.mxu0 0
        %1534 = vmatprep.subr.bf16.mxu0 0
        %1535 = vmatpush1.bf16.msra.mxu0 0
        %1536 = vmatprep.subr.bf16.mxu0 0
        %1537 = vmatpush1.bf16.msra.mxu0 0
        %1538 = vmatprep.subr.bf16.mxu0 0
        %1539 = vmatpush1.bf16.msra.mxu0 0
        %1540 = vmatprep.subr.bf16.mxu0 0
        %1541 = vmatpush1.bf16.msra.mxu0 0
        %1542 = vmatprep.subr.bf16.mxu0 0
        %1543 = vmatpush1.bf16.msra.mxu0 0
        %1544 = vmatprep.subr.bf16.mxu0 0
        %1545 = vmatpush1.bf16.msra.mxu0 %v1528
        %1546 = vmatprep.subr.bf16.mxu0 0
        %1547 = vmatpush2.bf16.msra.mxu0 0
        %1548 = vmatprep.subr.bf16.mxu0 0
        %1549 = vmatpush2.bf16.msra.mxu0 0
        %1550 = vmatprep.subr.bf16.mxu0 0
        %1551 = vmatpush2.bf16.msra.mxu0 0
        %1552 = vmatprep.subr.bf16.mxu0 0
        %1553 = vmatpush2.bf16.msra.mxu0 0
        %1554 = vmatprep.subr.bf16.mxu0 0
        %1555 = vmatpush2.bf16.msra.mxu0 0
        %1556 = vmatprep.subr.bf16.mxu0 0
        %1557 = vmatpush2.bf16.msra.mxu0 0
        %1558 = vmatprep.subr.bf16.mxu0 0
        %1559 = vmatpush2.bf16.msra.mxu0 0
        %1560 = vmatprep.subr.bf16.mxu0 0
        %1561 = vmatpush2.bf16.msra.mxu0 0
        %1562 = vmatprep.mubr.bf16.mxu0 0
        %1563 = vmatmul.mubr.bf16.gmra.mxu0 %v1432
        %v1564 = vpop.f32.mrf.mxu0
        %v1565 = vadd.f32 0.0, %v1564
        %v1566 = vpop.f32.mrf.mxu0
        %v1567 = vpop.f32.mrf.mxu0
        %v1568 = vadd.f32 0.0, %v1567
        %v1569 = vpop.f32.mrf.mxu0
        %1570 = vmatprep.mubr.bf16.mxu0 0
        %1571 = vmatmul.mubr.bf16.gmra.mxu0 %v1435
        %v1572 = vpop.f32.mrf.mxu0
        %v1573 = vpop.f32.mrf.mxu0
        %v1574 = vpop.f32.mrf.mxu0
        %v1575 = vpop.f32.mrf.mxu0
        %1576 = vmatprep.mubr.bf16.mxu0 0
        %1577 = vmatmul.mubr.bf16.gmra.mxu0 %v1438
        %v1578 = vpop.f32.mrf.mxu0
        %v1579 = vadd.f32 0.0, %v1578
        %v1580 = vpop.f32.mrf.mxu0
        %v1581 = vpop.f32.mrf.mxu0
        %v1582 = vadd.f32 0.0, %v1581
        %v1583 = vpop.f32.mrf.mxu0
        %1584 = vmatprep.mubr.bf16.mxu0 0
        %1585 = vmatmul.mubr.bf16.gmra.mxu0 %v1441
        %v1586 = vpop.f32.mrf.mxu0
        %v1587 = vpop.f32.mrf.mxu0
        %v1588 = vpop.f32.mrf.mxu0
        %v1589 = vpop.f32.mrf.mxu0
        %1590 = vmatprep.mubr.bf16.mxu0 0
        %1591 = vmatmul.mubr.bf16.gmra.mxu0 %v1444
        %v1592 = vpop.f32.mrf.mxu0
        %v1593 = vadd.f32 0.0, %v1592
        %v1594 = vpop.f32.mrf.mxu0
        %v1595 = vpop.f32.mrf.mxu0
        %v1596 = vadd.f32 0.0, %v1595
        %v1597 = vpop.f32.mrf.mxu0
        %1598 = vmatprep.mubr.bf16.mxu0 0
        %1599 = vmatmul.mubr.bf16.gmra.mxu0 %v1447
        %v1600 = vpop.f32.mrf.mxu0
        %v1601 = vpop.f32.mrf.mxu0
        %v1602 = vpop.f32.mrf.mxu0
        %v1603 = vpop.f32.mrf.mxu0
        %1604 = vmatprep.mubr.bf16.mxu0 0
        %1605 = vmatmul.mubr.bf16.gmra.mxu0 %v1450
        %v1606 = vpop.f32.mrf.mxu0
        %v1607 = vadd.f32 0.0, %v1606
        %v1608 = vpop.f32.mrf.mxu0
        %v1609 = vpop.f32.mrf.mxu0
        %v1610 = vadd.f32 0.0, %v1609
        %v1611 = vpop.f32.mrf.mxu0
        %1612 = vmatprep.mubr.bf16.mxu0 0
        %1613 = vmatmul.mubr.bf16.gmra.mxu0 %v1453
        %v1614 = vpop.f32.mrf.mxu0
        %v1615 = vpop.f32.mrf.mxu0
        %v1616 = vpop.f32.mrf.mxu0
        %v1617 = vpop.f32.mrf.mxu0
        %1618 = vmatprep.mubr.bf16.mxu0 0
        %1619 = vmatmul.mubr.bf16.gmra.mxu0 %v1456
        %v1620 = vpop.f32.mrf.mxu0
        %v1621 = vadd.f32 0.0, %v1620
        %v1622 = vpop.f32.mrf.mxu0
        %v1623 = vpop.f32.mrf.mxu0
        %v1624 = vadd.f32 0.0, %v1623
        %v1625 = vpop.f32.mrf.mxu0
        %1626 = vmatprep.mubr.bf16.mxu0 0
        %1627 = vmatmul.mubr.bf16.gmra.mxu0 %v1459
        %v1628 = vpop.f32.mrf.mxu0
        %v1629 = vpop.f32.mrf.mxu0
        %v1630 = vpop.f32.mrf.mxu0
        %v1631 = vpop.f32.mrf.mxu0
        %1632 = vmatprep.mubr.bf16.mxu0 0
        %1633 = vmatmul.mubr.bf16.gmra.mxu0 %v1462
        %v1634 = vpop.f32.mrf.mxu0
        %v1635 = vadd.f32 0.0, %v1634
        %v1636 = vpop.f32.mrf.mxu0
        %v1637 = vpop.f32.mrf.mxu0
        %v1638 = vadd.f32 0.0, %v1637
        %v1639 = vpop.f32.mrf.mxu0
        %1640 = vmatprep.mubr.bf16.mxu0 0
        %1641 = vmatmul.mubr.bf16.gmra.mxu0 %v1465
        %v1642 = vpop.f32.mrf.mxu0
        %v1643 = vpop.f32.mrf.mxu0
        %v1644 = vpop.f32.mrf.mxu0
        %v1645 = vpop.f32.mrf.mxu0
        %1646 = vmatprep.mubr.bf16.mxu0 0
        %1647 = vmatmul.mubr.bf16.gmra.mxu0 %v1468
        %v1648 = vpop.f32.mrf.mxu0
        %v1649 = vadd.f32 0.0, %v1648
        %v1650 = vpop.f32.mrf.mxu0
        %v1651 = vpop.f32.mrf.mxu0
        %v1652 = vadd.f32 0.0, %v1651
        %v1653 = vpop.f32.mrf.mxu0
        %1654 = vmatprep.mubr.bf16.mxu0 0
        %1655 = vmatmul.mubr.bf16.gmra.mxu0 %v1471
        %v1656 = vpop.f32.mrf.mxu0
        %v1657 = vpop.f32.mrf.mxu0
        %v1658 = vpop.f32.mrf.mxu0
        %v1659 = vpop.f32.mrf.mxu0
        %1660 = vmatprep.mubr.bf16.mxu0 0
        %1661 = vmatmul.mubr.bf16.gmra.mxu0 %v1474
        %v1662 = vpop.f32.mrf.mxu0
        %v1663 = vadd.f32 0.0, %v1662
        %v1664 = vpop.f32.mrf.mxu0
        %v1665 = vpop.f32.mrf.mxu0
        %v1666 = vadd.f32 0.0, %v1665
        %v1667 = vpop.f32.mrf.mxu0
        %1668 = vmatprep.mubr.bf16.mxu0 0
        %1669 = vmatmul.mubr.bf16.gmra.mxu0 %v1477
        %v1670 = vpop.f32.mrf.mxu0
        %v1671 = vpop.f32.mrf.mxu0
        %v1672 = vpop.f32.mrf.mxu0
        %v1673 = vpop.f32.mrf.mxu0
        %1674 = vmatprep.mubr.bf16.mxu0 0
        %1675 = vmatmul.mubr.bf16.gmra.mxu0 %v1480
        %v1676 = vpop.f32.mrf.mxu0
        %v1677 = vadd.f32 0.0, %v1676
        %v1678 = vpop.f32.mrf.mxu0
        %v1679 = vpop.f32.mrf.mxu0
        %v1680 = vadd.f32 0.0, %v1679
        %v1681 = vpop.f32.mrf.mxu0
        %1682 = vmatprep.mubr.bf16.mxu0 0
        %1683 = vmatmul.mubr.bf16.gmra.mxu0 %v1483
        %v1684 = vpop.f32.mrf.mxu0
        %v1685 = vpop.f32.mrf.mxu0
        %v1686 = vpop.f32.mrf.mxu0
        %v1687 = vpop.f32.mrf.mxu0
        %1688 = vmatprep.mubr.bf16.mxu0 0
        %1689 = vmatmul.mubr.bf16.gmra.mxu0 %v1486
        %v1690 = vpop.f32.mrf.mxu0
        %v1691 = vadd.f32 0.0, %v1690
        %v1692 = vpop.f32.mrf.mxu0
        %v1693 = vpop.f32.mrf.mxu0
        %v1694 = vadd.f32 0.0, %v1693
        %v1695 = vpop.f32.mrf.mxu0
        %1696 = vmatprep.mubr.bf16.mxu0 0
        %1697 = vmatmul.mubr.bf16.gmra.mxu0 %v1489
        %v1698 = vpop.f32.mrf.mxu0
        %v1699 = vpop.f32.mrf.mxu0
        %v1700 = vpop.f32.mrf.mxu0
        %v1701 = vpop.f32.mrf.mxu0
        %1702 = vmatprep.mubr.bf16.mxu0 0
        %1703 = vmatmul.mubr.bf16.gmra.mxu0 %v1492
        %v1704 = vpop.f32.mrf.mxu0
        %v1705 = vadd.f32 0.0, %v1704
        %v1706 = vpop.f32.mrf.mxu0
        %v1707 = vpop.f32.mrf.mxu0
        %v1708 = vadd.f32 0.0, %v1707
        %v1709 = vpop.f32.mrf.mxu0
        %1710 = vmatprep.mubr.bf16.mxu0 0
        %1711 = vmatmul.mubr.bf16.gmra.mxu0 %v1495
        %v1712 = vpop.f32.mrf.mxu0
        %v1713 = vpop.f32.mrf.mxu0
        %v1714 = vpop.f32.mrf.mxu0
        %v1715 = vpop.f32.mrf.mxu0
        %1716 = vmatprep.mubr.bf16.mxu0 0
        %1717 = vmatmul.mubr.bf16.gmra.mxu0 %v1498
        %v1718 = vpop.f32.mrf.mxu0
        %v1719 = vadd.f32 0.0, %v1718
        %v1720 = vpop.f32.mrf.mxu0
        %v1721 = vpop.f32.mrf.mxu0
        %v1722 = vadd.f32 0.0, %v1721
        %v1723 = vpop.f32.mrf.mxu0
        %1724 = vmatprep.mubr.bf16.mxu0 0
        %1725 = vmatmul.mubr.bf16.gmra.mxu0 %v1501
        %v1726 = vpop.f32.mrf.mxu0
        %v1727 = vpop.f32.mrf.mxu0
        %v1728 = vpop.f32.mrf.mxu0
        %v1729 = vpop.f32.mrf.mxu0
        %1730 = vmatprep.mubr.bf16.mxu0 0
        %1731 = vmatmul.mubr.bf16.gmra.mxu0 %v1504
        %v1732 = vpop.f32.mrf.mxu0
        %v1733 = vadd.f32 0.0, %v1732
        %v1734 = vpop.f32.mrf.mxu0
        %v1735 = vpop.f32.mrf.mxu0
        %v1736 = vadd.f32 0.0, %v1735
        %v1737 = vpop.f32.mrf.mxu0
        %1738 = vmatprep.mubr.bf16.mxu0 0
        %1739 = vmatmul.mubr.bf16.gmra.mxu0 %v1507
        %v1740 = vpop.f32.mrf.mxu0
        %v1741 = vpop.f32.mrf.mxu0
        %v1742 = vpop.f32.mrf.mxu0
        %v1743 = vpop.f32.mrf.mxu0
        %1744 = vmatprep.mubr.bf16.mxu0 0
        %1745 = vmatmul.mubr.bf16.gmra.mxu0 %v1510
        %v1746 = vpop.f32.mrf.mxu0
        %v1747 = vadd.f32 0.0, %v1746
        %v1748 = vpop.f32.mrf.mxu0
        %v1749 = vpop.f32.mrf.mxu0
        %v1750 = vadd.f32 0.0, %v1749
        %v1751 = vpop.f32.mrf.mxu0
        %1752 = vmatprep.mubr.bf16.mxu0 0
        %1753 = vmatmul.mubr.bf16.gmra.mxu0 %v1513
        %v1754 = vpop.f32.mrf.mxu0
        %v1755 = vpop.f32.mrf.mxu0
        %v1756 = vpop.f32.mrf.mxu0
        %v1757 = vpop.f32.mrf.mxu0
        %1758 = vmatprep.mubr.bf16.mxu0 0
        %1759 = vmatmul.mubr.bf16.gmra.mxu0 %v1516
        %v1760 = vpop.f32.mrf.mxu0
        %v1761 = vadd.f32 0.0, %v1760
        %v1762 = vpop.f32.mrf.mxu0
        %v1763 = vpop.f32.mrf.mxu0
        %v1764 = vadd.f32 0.0, %v1763
        %v1765 = vpop.f32.mrf.mxu0
        %1766 = vmatprep.mubr.bf16.mxu0 0
        %1767 = vmatmul.mubr.bf16.gmra.mxu0 %v1519
        %v1768 = vpop.f32.mrf.mxu0
        %v1769 = vpop.f32.mrf.mxu0
        %v1770 = vpop.f32.mrf.mxu0
        %v1771 = vpop.f32.mrf.mxu0
        %1772 = vmatprep.mubr.bf16.mxu0 0
        %1773 = vmatmul.mubr.bf16.gmra.mxu0 %v1522
        %v1774 = vpop.f32.mrf.mxu0
        %v1775 = vadd.f32 0.0, %v1774
        %v1776 = vpop.f32.mrf.mxu0
        %v1777 = vpop.f32.mrf.mxu0
        %v1778 = vadd.f32 0.0, %v1777
        %v1779 = vpop.f32.mrf.mxu0
        %1780 = vmatprep.mubr.bf16.mxu0 0
        %1781 = vmatmul.mubr.bf16.gmra.mxu0 %v1525
        %v1782 = vpop.f32.mrf.mxu0
        %v1783 = vpop.f32.mrf.mxu0
        %v1784 = vpop.f32.mrf.mxu0
        %v1785 = vpop.f32.mrf.mxu0
        %1786 = vdwg.mxu0
        %v1787 = vadd.f32 %v1137, %v1565
        %v1788 = vadd.f32 %v1140, %v1568
        %v1789 = vadd.f32 %v1151, %v1579
        %v1790 = vadd.f32 %v1154, %v1582
        %v1791 = vadd.f32 %v1165, %v1593
        %v1792 = vadd.f32 %v1168, %v1596
        %v1793 = vadd.f32 %v1179, %v1607
        %v1794 = vadd.f32 %v1182, %v1610
        %v1795 = vadd.f32 %v1193, %v1621
        %v1796 = vadd.f32 %v1196, %v1624
        %v1797 = vadd.f32 %v1207, %v1635
        %v1798 = vadd.f32 %v1210, %v1638
        %v1799 = vadd.f32 %v1221, %v1649
        %v1800 = vadd.f32 %v1224, %v1652
        %v1801 = vadd.f32 %v1235, %v1663
        %v1802 = vadd.f32 %v1238, %v1666
        %v1803 = vadd.f32 %v1249, %v1677
        %v1804 = vadd.f32 %v1252, %v1680
        %v1805 = vadd.f32 %v1263, %v1691
        %v1806 = vadd.f32 %v1266, %v1694
        %v1807 = vadd.f32 %v1277, %v1705
        %v1808 = vadd.f32 %v1280, %v1708
        %v1809 = vadd.f32 %v1291, %v1719
        %v1810 = vadd.f32 %v1294, %v1722
        %v1811 = vadd.f32 %v1305, %v1733
        %v1812 = vadd.f32 %v1308, %v1736
        %v1813 = vadd.f32 %v1319, %v1747
        %v1814 = vadd.f32 %v1322, %v1750
        %v1815 = vadd.f32 %v1333, %v1761
        %v1816 = vadd.f32 %v1336, %v1764
        %v1817 = vadd.f32 %v1347, %v1775
        %v1818 = vadd.f32 %v1350, %v1778
        %v1819 = vld [vmem:[%s182 + $0x10] sm:$0xf]
        %v1820 = vld [vmem:[%s182 + $0x14] sm:$0xf]
        %v1821 = vld [vmem:[%s182 + $0x18] sm:$0xf]
        %v1822 = vld [vmem:[%s182 + $0x1c] sm:$0xf]
        %v1823 = vld [vmem:[%s182 + $0x20] sm:$0xf]
        %v1824 = vld [vmem:[%s182 + $0x24] sm:$0xf]
        %v1825 = vld [vmem:[%s182 + $0x28] sm:$0xf]
        %v1826 = vld [vmem:[%s182 + $0x2c] sm:$0xf]
        %v1827 = vld [vmem:[%s182 + $0x30] sm:$0xf]
        %v1828 = vld [vmem:[%s182 + $0x34] sm:$0xf]
        %v1829 = vld [vmem:[%s182 + $0x38] sm:$0xf]
        %v1830 = vld [vmem:[%s182 + $0x3c] sm:$0xf]
        %v1831 = vld [vmem:[%s182 + $0x40] sm:$0xf]
        %v1832 = vld [vmem:[%s182 + $0x44] sm:$0xf]
        %v1833 = vld [vmem:[%s182 + $0x48] sm:$0xf]
        %v1834 = vld [vmem:[%s182 + $0x4c] sm:$0xf]
        %v1835 = vld [vmem:[%s182 + $0x50] sm:$0xf]
        %v1836 = vld [vmem:[%s182 + $0x54] sm:$0xf]
        %v1837 = vld [vmem:[%s182 + $0x58] sm:$0xf]
        %v1838 = vld [vmem:[%s182 + $0x5c] sm:$0xf]
        %v1839 = vld [vmem:[%s182 + $0x60] sm:$0xf]
        %v1840 = vld [vmem:[%s182 + $0x64] sm:$0xf]
        %v1841 = vld [vmem:[%s182 + $0x68] sm:$0xf]
        %v1842 = vld [vmem:[%s182 + $0x6c] sm:$0xf]
        %v1843 = vld [vmem:[%s182 + $0x70] sm:$0xf]
        %v1844 = vld [vmem:[%s182 + $0x74] sm:$0xf]
        %v1845 = vld [vmem:[%s182 + $0x78] sm:$0xf]
        %v1846 = vld [vmem:[%s182 + $0x7c] sm:$0xf]
        %v1847 = vld [vmem:[%s182 + $0x80] sm:$0xf]
        %v1848 = vld [vmem:[%s182 + $0x84] sm:$0xf]
        %v1849 = vld [vmem:[%s182 + $0x88] sm:$0xf]
        %v1850 = vld [vmem:[%s182 + $0x8c] sm:$0xf]
        %v1851 = vld [vmem:[%s182 + $0x90] sm:$0xf]
        %v1852 = vld [vmem:[%s182 + $0x94] sm:$0xf]
        %v1853 = vld [vmem:[%s182 + $0x98] sm:$0xf]
        %v1854 = vld [vmem:[%s182 + $0x9c] sm:$0xf]
        %v1855 = vld [vmem:[%s182 + $0xa0] sm:$0xf]
        %v1856 = vld [vmem:[%s182 + $0xa4] sm:$0xf]
        %v1857 = vld [vmem:[%s182 + $0xa8] sm:$0xf]
        %v1858 = vld [vmem:[%s182 + $0xac] sm:$0xf]
        %v1859 = vld [vmem:[%s182 + $0xb0] sm:$0xf]
        %v1860 = vld [vmem:[%s182 + $0xb4] sm:$0xf]
        %v1861 = vld [vmem:[%s182 + $0xb8] sm:$0xf]
        %v1862 = vld [vmem:[%s182 + $0xbc] sm:$0xf]
        %v1863 = vld [vmem:[%s182 + $0xc0] sm:$0xf]
        %v1864 = vld [vmem:[%s182 + $0xc4] sm:$0xf]
        %v1865 = vld [vmem:[%s182 + $0xc8] sm:$0xf]
        %v1866 = vld [vmem:[%s182 + $0xcc] sm:$0xf]
        %v1867 = vld [vmem:[%s182 + $0xd0] sm:$0xf]
        %v1868 = vld [vmem:[%s182 + $0xd4] sm:$0xf]
        %v1869 = vld [vmem:[%s182 + $0xd8] sm:$0xf]
        %v1870 = vld [vmem:[%s182 + $0xdc] sm:$0xf]
        %v1871 = vld [vmem:[%s182 + $0xe0] sm:$0xf]
        %v1872 = vld [vmem:[%s182 + $0xe4] sm:$0xf]
        %v1873 = vld [vmem:[%s182 + $0xe8] sm:$0xf]
        %v1874 = vld [vmem:[%s182 + $0xec] sm:$0xf]
        %v1875 = vld [vmem:[%s182 + $0xf0] sm:$0xf]
        %v1876 = vld [vmem:[%s182 + $0xf4] sm:$0xf]
        %v1877 = vld [vmem:[%s182 + $0xf8] sm:$0xf]
        %v1878 = vld [vmem:[%s182 + $0xfc] sm:$0xf]
        %v1879 = vld [vmem:[%s182 + $0x100] sm:$0xf]
        %v1880 = vld [vmem:[%s182 + $0x104] sm:$0xf]
        %v1881 = vld [vmem:[%s182 + $0x108] sm:$0xf]
        %v1882 = vld [vmem:[%s182 + $0x10c] sm:$0xf]
        %s1883 = scalar_lea.vmem %s1, 6
        %v1884 = vld [vmem:[%s1883] sm:$0x3]
        %v1949 = vunpack.c.l.b16 %v1819
        %v1950 = vunpack.c.l.b16 %v1820
        %v1951 = vunpack.c.l.b16 %v1821
        %v1952 = vunpack.c.l.b16 %v1822
        %v1953 = vunpack.c.l.b16 %v1823
        %v1954 = vunpack.c.l.b16 %v1824
        %v1955 = vunpack.c.l.b16 %v1825
        %v1956 = vunpack.c.l.b16 %v1826
        %v1957 = vunpack.c.l.b16 %v1827
        %v1958 = vunpack.c.l.b16 %v1828
        %v1959 = vunpack.c.l.b16 %v1829
        %v1960 = vunpack.c.l.b16 %v1830
        %v1961 = vunpack.c.l.b16 %v1831
        %v1962 = vunpack.c.l.b16 %v1832
        %v1963 = vunpack.c.l.b16 %v1833
        %v1964 = vunpack.c.l.b16 %v1834
        %v1965 = vunpack.c.l.b16 %v1835
        %v1966 = vunpack.c.l.b16 %v1836
        %v1967 = vunpack.c.l.b16 %v1837
        %v1968 = vunpack.c.l.b16 %v1838
        %v1969 = vunpack.c.l.b16 %v1839
        %v1970 = vunpack.c.l.b16 %v1840
        %v1971 = vunpack.c.l.b16 %v1841
        %v1972 = vunpack.c.l.b16 %v1842
        %v1973 = vunpack.c.l.b16 %v1843
        %v1974 = vunpack.c.l.b16 %v1844
        %v1975 = vunpack.c.l.b16 %v1845
        %v1976 = vunpack.c.l.b16 %v1846
        %v1977 = vunpack.c.l.b16 %v1847
        %v1978 = vunpack.c.l.b16 %v1848
        %v1979 = vunpack.c.l.b16 %v1849
        %v1980 = vunpack.c.l.b16 %v1850
        %v1981 = vunpack.c.l.b16 %v1851
        %v1982 = vunpack.c.l.b16 %v1852
        %v1983 = vunpack.c.l.b16 %v1853
        %v1984 = vunpack.c.l.b16 %v1854
        %v1985 = vunpack.c.l.b16 %v1855
        %v1986 = vunpack.c.l.b16 %v1856
        %v1987 = vunpack.c.l.b16 %v1857
        %v1988 = vunpack.c.l.b16 %v1858
        %v1989 = vunpack.c.l.b16 %v1859
        %v1990 = vunpack.c.l.b16 %v1860
        %v1991 = vunpack.c.l.b16 %v1861
        %v1992 = vunpack.c.l.b16 %v1862
        %v1993 = vunpack.c.l.b16 %v1863
        %v1994 = vunpack.c.l.b16 %v1864
        %v1995 = vunpack.c.l.b16 %v1865
        %v1996 = vunpack.c.l.b16 %v1866
        %v1997 = vunpack.c.l.b16 %v1867
        %v1998 = vunpack.c.l.b16 %v1868
        %v1999 = vunpack.c.l.b16 %v1869
        %v2000 = vunpack.c.l.b16 %v1870
        %v2001 = vunpack.c.l.b16 %v1871
        %v2002 = vunpack.c.l.b16 %v1872
        %v2003 = vunpack.c.l.b16 %v1873
        %v2004 = vunpack.c.l.b16 %v1874
        %v2005 = vunpack.c.l.b16 %v1875
        %v2006 = vunpack.c.l.b16 %v1876
        %v2007 = vunpack.c.l.b16 %v1877
        %v2008 = vunpack.c.l.b16 %v1878
        %v2009 = vunpack.c.l.b16 %v1879
        %v2010 = vunpack.c.l.b16 %v1880
        %v2011 = vunpack.c.l.b16 %v1881
        %v2012 = vunpack.c.l.b16 %v1882
        %v2013 = vpack.c.b16 %v1950, %v1949
        %v2014 = vpack.c.b16 %v1952, %v1951
        %v2015 = vpack.c.b16 %v1954, %v1953
        %v2016 = vpack.c.b16 %v1956, %v1955
        %v2017 = vpack.c.b16 %v1958, %v1957
        %v2018 = vpack.c.b16 %v1960, %v1959
        %v2019 = vpack.c.b16 %v1962, %v1961
        %v2020 = vpack.c.b16 %v1964, %v1963
        %v2021 = vpack.c.b16 %v1966, %v1965
        %v2022 = vpack.c.b16 %v1968, %v1967
        %v2023 = vpack.c.b16 %v1970, %v1969
        %v2024 = vpack.c.b16 %v1972, %v1971
        %v2025 = vpack.c.b16 %v1974, %v1973
        %v2026 = vpack.c.b16 %v1976, %v1975
        %v2027 = vpack.c.b16 %v1978, %v1977
        %v2028 = vpack.c.b16 %v1980, %v1979
        %v2029 = vpack.c.b16 %v1982, %v1981
        %v2030 = vpack.c.b16 %v1984, %v1983
        %v2031 = vpack.c.b16 %v1986, %v1985
        %v2032 = vpack.c.b16 %v1988, %v1987
        %v2033 = vpack.c.b16 %v1990, %v1989
        %v2034 = vpack.c.b16 %v1992, %v1991
        %v2035 = vpack.c.b16 %v1994, %v1993
        %v2036 = vpack.c.b16 %v1996, %v1995
        %v2037 = vpack.c.b16 %v1998, %v1997
        %v2038 = vpack.c.b16 %v2000, %v1999
        %v2039 = vpack.c.b16 %v2002, %v2001
        %v2040 = vpack.c.b16 %v2004, %v2003
        %v2041 = vpack.c.b16 %v2006, %v2005
        %v2042 = vpack.c.b16 %v2008, %v2007
        %v2043 = vpack.c.b16 %v2010, %v2009
        %v2044 = vpack.c.b16 %v2012, %v2011
        %v2046 = vsel %vm677, %v2013, 0
        %v2049 = vsel %vm677, %v2014, 0
        %v2052 = vsel %vm677, %v2015, 0
        %v2055 = vsel %vm677, %v2016, 0
        %v2058 = vsel %vm677, %v2017, 0
        %v2061 = vsel %vm677, %v2018, 0
        %v2064 = vsel %vm677, %v2019, 0
        %v2067 = vsel %vm677, %v2020, 0
        %v2070 = vsel %vm677, %v2021, 0
        %v2073 = vsel %vm677, %v2022, 0
        %v2076 = vsel %vm677, %v2023, 0
        %v2079 = vsel %vm677, %v2024, 0
        %v2082 = vsel %vm677, %v2025, 0
        %v2085 = vsel %vm677, %v2026, 0
        %v2088 = vsel %vm677, %v2027, 0
        %v2091 = vsel %vm677, %v2028, 0
        %v2094 = vsel %vm677, %v2029, 0
        %v2097 = vsel %vm677, %v2030, 0
        %v2100 = vsel %vm677, %v2031, 0
        %v2103 = vsel %vm677, %v2032, 0
        %v2106 = vsel %vm677, %v2033, 0
        %v2109 = vsel %vm677, %v2034, 0
        %v2112 = vsel %vm677, %v2035, 0
        %v2115 = vsel %vm677, %v2036, 0
        %v2118 = vsel %vm677, %v2037, 0
        %v2121 = vsel %vm677, %v2038, 0
        %v2124 = vsel %vm677, %v2039, 0
        %v2127 = vsel %vm677, %v2040, 0
        %v2130 = vsel %vm677, %v2041, 0
        %v2133 = vsel %vm677, %v2042, 0
        %v2136 = vsel %vm677, %v2043, 0
        %v2139 = vsel %vm677, %v2044, 0
        %v2142 = vsel %vm774, %v1884, 0
        %2144 = vmatprep.subr.bf16.mxu0 0
        %2145 = vmatpush1.bf16.msra.mxu0 0
        %2146 = vmatprep.subr.bf16.mxu0 0
        %2147 = vmatpush1.bf16.msra.mxu0 0
        %2148 = vmatprep.subr.bf16.mxu0 0
        %2149 = vmatpush1.bf16.msra.mxu0 0
        %2150 = vmatprep.subr.bf16.mxu0 0
        %2151 = vmatpush1.bf16.msra.mxu0 0
        %2152 = vmatprep.subr.bf16.mxu0 0
        %2153 = vmatpush1.bf16.msra.mxu0 0
        %2154 = vmatprep.subr.bf16.mxu0 0
        %2155 = vmatpush1.bf16.msra.mxu0 0
        %2156 = vmatprep.subr.bf16.mxu0 0
        %2157 = vmatpush1.bf16.msra.mxu0 0
        %2158 = vmatprep.subr.bf16.mxu0 0
        %2159 = vmatpush1.bf16.msra.mxu0 %v2142
        %2160 = vmatprep.subr.bf16.mxu0 0
        %2161 = vmatpush2.bf16.msra.mxu0 0
        %2162 = vmatprep.subr.bf16.mxu0 0
        %2163 = vmatpush2.bf16.msra.mxu0 0
        %2164 = vmatprep.subr.bf16.mxu0 0
        %2165 = vmatpush2.bf16.msra.mxu0 0
        %2166 = vmatprep.subr.bf16.mxu0 0
        %2167 = vmatpush2.bf16.msra.mxu0 0
        %2168 = vmatprep.subr.bf16.mxu0 0
        %2169 = vmatpush2.bf16.msra.mxu0 0
        %2170 = vmatprep.subr.bf16.mxu0 0
        %2171 = vmatpush2.bf16.msra.mxu0 0
        %2172 = vmatprep.subr.bf16.mxu0 0
        %2173 = vmatpush2.bf16.msra.mxu0 0
        %2174 = vmatprep.subr.bf16.mxu0 0
        %2175 = vmatpush2.bf16.msra.mxu0 0
        %2176 = vmatprep.mubr.bf16.mxu0 0
        %2177 = vmatmul.mubr.bf16.gmra.mxu0 %v2046
        %v2178 = vpop.f32.mrf.mxu0
        %v2179 = vadd.f32 0.0, %v2178
        %v2180 = vpop.f32.mrf.mxu0
        %v2181 = vpop.f32.mrf.mxu0
        %v2182 = vadd.f32 0.0, %v2181
        %v2183 = vpop.f32.mrf.mxu0
        %2184 = vmatprep.mubr.bf16.mxu0 0
        %2185 = vmatmul.mubr.bf16.gmra.mxu0 %v2049
        %v2186 = vpop.f32.mrf.mxu0
        %v2187 = vpop.f32.mrf.mxu0
        %v2188 = vpop.f32.mrf.mxu0
        %v2189 = vpop.f32.mrf.mxu0
        %2190 = vmatprep.mubr.bf16.mxu0 0
        %2191 = vmatmul.mubr.bf16.gmra.mxu0 %v2052
        %v2192 = vpop.f32.mrf.mxu0
        %v2193 = vadd.f32 0.0, %v2192
        %v2194 = vpop.f32.mrf.mxu0
        %v2195 = vpop.f32.mrf.mxu0
        %v2196 = vadd.f32 0.0, %v2195
        %v2197 = vpop.f32.mrf.mxu0
        %2198 = vmatprep.mubr.bf16.mxu0 0
        %2199 = vmatmul.mubr.bf16.gmra.mxu0 %v2055
        %v2200 = vpop.f32.mrf.mxu0
        %v2201 = vpop.f32.mrf.mxu0
        %v2202 = vpop.f32.mrf.mxu0
        %v2203 = vpop.f32.mrf.mxu0
        %2204 = vmatprep.mubr.bf16.mxu0 0
        %2205 = vmatmul.mubr.bf16.gmra.mxu0 %v2058
        %v2206 = vpop.f32.mrf.mxu0
        %v2207 = vadd.f32 0.0, %v2206
        %v2208 = vpop.f32.mrf.mxu0
        %v2209 = vpop.f32.mrf.mxu0
        %v2210 = vadd.f32 0.0, %v2209
        %v2211 = vpop.f32.mrf.mxu0
        %2212 = vmatprep.mubr.bf16.mxu0 0
        %2213 = vmatmul.mubr.bf16.gmra.mxu0 %v2061
        %v2214 = vpop.f32.mrf.mxu0
        %v2215 = vpop.f32.mrf.mxu0
        %v2216 = vpop.f32.mrf.mxu0
        %v2217 = vpop.f32.mrf.mxu0
        %2218 = vmatprep.mubr.bf16.mxu0 0
        %2219 = vmatmul.mubr.bf16.gmra.mxu0 %v2064
        %v2220 = vpop.f32.mrf.mxu0
        %v2221 = vadd.f32 0.0, %v2220
        %v2222 = vpop.f32.mrf.mxu0
        %v2223 = vpop.f32.mrf.mxu0
        %v2224 = vadd.f32 0.0, %v2223
        %v2225 = vpop.f32.mrf.mxu0
        %2226 = vmatprep.mubr.bf16.mxu0 0
        %2227 = vmatmul.mubr.bf16.gmra.mxu0 %v2067
        %v2228 = vpop.f32.mrf.mxu0
        %v2229 = vpop.f32.mrf.mxu0
        %v2230 = vpop.f32.mrf.mxu0
        %v2231 = vpop.f32.mrf.mxu0
        %2232 = vmatprep.mubr.bf16.mxu0 0
        %2233 = vmatmul.mubr.bf16.gmra.mxu0 %v2070
        %v2234 = vpop.f32.mrf.mxu0
        %v2235 = vadd.f32 0.0, %v2234
        %v2236 = vpop.f32.mrf.mxu0
        %v2237 = vpop.f32.mrf.mxu0
        %v2238 = vadd.f32 0.0, %v2237
        %v2239 = vpop.f32.mrf.mxu0
        %2240 = vmatprep.mubr.bf16.mxu0 0
        %2241 = vmatmul.mubr.bf16.gmra.mxu0 %v2073
        %v2242 = vpop.f32.mrf.mxu0
        %v2243 = vpop.f32.mrf.mxu0
        %v2244 = vpop.f32.mrf.mxu0
        %v2245 = vpop.f32.mrf.mxu0
        %2246 = vmatprep.mubr.bf16.mxu0 0
        %2247 = vmatmul.mubr.bf16.gmra.mxu0 %v2076
        %v2248 = vpop.f32.mrf.mxu0
        %v2249 = vadd.f32 0.0, %v2248
        %v2250 = vpop.f32.mrf.mxu0
        %v2251 = vpop.f32.mrf.mxu0
        %v2252 = vadd.f32 0.0, %v2251
        %v2253 = vpop.f32.mrf.mxu0
        %2254 = vmatprep.mubr.bf16.mxu0 0
        %2255 = vmatmul.mubr.bf16.gmra.mxu0 %v2079
        %v2256 = vpop.f32.mrf.mxu0
        %v2257 = vpop.f32.mrf.mxu0
        %v2258 = vpop.f32.mrf.mxu0
        %v2259 = vpop.f32.mrf.mxu0
        %2260 = vmatprep.mubr.bf16.mxu0 0
        %2261 = vmatmul.mubr.bf16.gmra.mxu0 %v2082
        %v2262 = vpop.f32.mrf.mxu0
        %v2263 = vadd.f32 0.0, %v2262
        %v2264 = vpop.f32.mrf.mxu0
        %v2265 = vpop.f32.mrf.mxu0
        %v2266 = vadd.f32 0.0, %v2265
        %v2267 = vpop.f32.mrf.mxu0
        %2268 = vmatprep.mubr.bf16.mxu0 0
        %2269 = vmatmul.mubr.bf16.gmra.mxu0 %v2085
        %v2270 = vpop.f32.mrf.mxu0
        %v2271 = vpop.f32.mrf.mxu0
        %v2272 = vpop.f32.mrf.mxu0
        %v2273 = vpop.f32.mrf.mxu0
        %2274 = vmatprep.mubr.bf16.mxu0 0
        %2275 = vmatmul.mubr.bf16.gmra.mxu0 %v2088
        %v2276 = vpop.f32.mrf.mxu0
        %v2277 = vadd.f32 0.0, %v2276
        %v2278 = vpop.f32.mrf.mxu0
        %v2279 = vpop.f32.mrf.mxu0
        %v2280 = vadd.f32 0.0, %v2279
        %v2281 = vpop.f32.mrf.mxu0
        %2282 = vmatprep.mubr.bf16.mxu0 0
        %2283 = vmatmul.mubr.bf16.gmra.mxu0 %v2091
        %v2284 = vpop.f32.mrf.mxu0
        %v2285 = vpop.f32.mrf.mxu0
        %v2286 = vpop.f32.mrf.mxu0
        %v2287 = vpop.f32.mrf.mxu0
        %2288 = vmatprep.mubr.bf16.mxu0 0
        %2289 = vmatmul.mubr.bf16.gmra.mxu0 %v2094
        %v2290 = vpop.f32.mrf.mxu0
        %v2291 = vadd.f32 0.0, %v2290
        %v2292 = vpop.f32.mrf.mxu0
        %v2293 = vpop.f32.mrf.mxu0
        %v2294 = vadd.f32 0.0, %v2293
        %v2295 = vpop.f32.mrf.mxu0
        %2296 = vmatprep.mubr.bf16.mxu0 0
        %2297 = vmatmul.mubr.bf16.gmra.mxu0 %v2097
        %v2298 = vpop.f32.mrf.mxu0
        %v2299 = vpop.f32.mrf.mxu0
        %v2300 = vpop.f32.mrf.mxu0
        %v2301 = vpop.f32.mrf.mxu0
        %2302 = vmatprep.mubr.bf16.mxu0 0
        %2303 = vmatmul.mubr.bf16.gmra.mxu0 %v2100
        %v2304 = vpop.f32.mrf.mxu0
        %v2305 = vadd.f32 0.0, %v2304
        %v2306 = vpop.f32.mrf.mxu0
        %v2307 = vpop.f32.mrf.mxu0
        %v2308 = vadd.f32 0.0, %v2307
        %v2309 = vpop.f32.mrf.mxu0
        %2310 = vmatprep.mubr.bf16.mxu0 0
        %2311 = vmatmul.mubr.bf16.gmra.mxu0 %v2103
        %v2312 = vpop.f32.mrf.mxu0
        %v2313 = vpop.f32.mrf.mxu0
        %v2314 = vpop.f32.mrf.mxu0
        %v2315 = vpop.f32.mrf.mxu0
        %2316 = vmatprep.mubr.bf16.mxu0 0
        %2317 = vmatmul.mubr.bf16.gmra.mxu0 %v2106
        %v2318 = vpop.f32.mrf.mxu0
        %v2319 = vadd.f32 0.0, %v2318
        %v2320 = vpop.f32.mrf.mxu0
        %v2321 = vpop.f32.mrf.mxu0
        %v2322 = vadd.f32 0.0, %v2321
        %v2323 = vpop.f32.mrf.mxu0
        %2324 = vmatprep.mubr.bf16.mxu0 0
        %2325 = vmatmul.mubr.bf16.gmra.mxu0 %v2109
        %v2326 = vpop.f32.mrf.mxu0
        %v2327 = vpop.f32.mrf.mxu0
        %v2328 = vpop.f32.mrf.mxu0
        %v2329 = vpop.f32.mrf.mxu0
        %2330 = vmatprep.mubr.bf16.mxu0 0
        %2331 = vmatmul.mubr.bf16.gmra.mxu0 %v2112
        %v2332 = vpop.f32.mrf.mxu0
        %v2333 = vadd.f32 0.0, %v2332
        %v2334 = vpop.f32.mrf.mxu0
        %v2335 = vpop.f32.mrf.mxu0
        %v2336 = vadd.f32 0.0, %v2335
        %v2337 = vpop.f32.mrf.mxu0
        %2338 = vmatprep.mubr.bf16.mxu0 0
        %2339 = vmatmul.mubr.bf16.gmra.mxu0 %v2115
        %v2340 = vpop.f32.mrf.mxu0
        %v2341 = vpop.f32.mrf.mxu0
        %v2342 = vpop.f32.mrf.mxu0
        %v2343 = vpop.f32.mrf.mxu0
        %2344 = vmatprep.mubr.bf16.mxu0 0
        %2345 = vmatmul.mubr.bf16.gmra.mxu0 %v2118
        %v2346 = vpop.f32.mrf.mxu0
        %v2347 = vadd.f32 0.0, %v2346
        %v2348 = vpop.f32.mrf.mxu0
        %v2349 = vpop.f32.mrf.mxu0
        %v2350 = vadd.f32 0.0, %v2349
        %v2351 = vpop.f32.mrf.mxu0
        %2352 = vmatprep.mubr.bf16.mxu0 0
        %2353 = vmatmul.mubr.bf16.gmra.mxu0 %v2121
        %v2354 = vpop.f32.mrf.mxu0
        %v2355 = vpop.f32.mrf.mxu0
        %v2356 = vpop.f32.mrf.mxu0
        %v2357 = vpop.f32.mrf.mxu0
        %2358 = vmatprep.mubr.bf16.mxu0 0
        %2359 = vmatmul.mubr.bf16.gmra.mxu0 %v2124
        %v2360 = vpop.f32.mrf.mxu0
        %v2361 = vadd.f32 0.0, %v2360
        %v2362 = vpop.f32.mrf.mxu0
        %v2363 = vpop.f32.mrf.mxu0
        %v2364 = vadd.f32 0.0, %v2363
        %v2365 = vpop.f32.mrf.mxu0
        %2366 = vmatprep.mubr.bf16.mxu0 0
        %2367 = vmatmul.mubr.bf16.gmra.mxu0 %v2127
        %v2368 = vpop.f32.mrf.mxu0
        %v2369 = vpop.f32.mrf.mxu0
        %v2370 = vpop.f32.mrf.mxu0
        %v2371 = vpop.f32.mrf.mxu0
        %2372 = vmatprep.mubr.bf16.mxu0 0
        %2373 = vmatmul.mubr.bf16.gmra.mxu0 %v2130
        %v2374 = vpop.f32.mrf.mxu0
        %v2375 = vadd.f32 0.0, %v2374
        %v2376 = vpop.f32.mrf.mxu0
        %v2377 = vpop.f32.mrf.mxu0
        %v2378 = vadd.f32 0.0, %v2377
        %v2379 = vpop.f32.mrf.mxu0
        %2380 = vmatprep.mubr.bf16.mxu0 0
        %2381 = vmatmul.mubr.bf16.gmra.mxu0 %v2133
        %v2382 = vpop.f32.mrf.mxu0
        %v2383 = vpop.f32.mrf.mxu0
        %v2384 = vpop.f32.mrf.mxu0
        %v2385 = vpop.f32.mrf.mxu0
        %2386 = vmatprep.mubr.bf16.mxu0 0
        %2387 = vmatmul.mubr.bf16.gmra.mxu0 %v2136
        %v2388 = vpop.f32.mrf.mxu0
        %v2389 = vadd.f32 0.0, %v2388
        %v2390 = vpop.f32.mrf.mxu0
        %v2391 = vpop.f32.mrf.mxu0
        %v2392 = vadd.f32 0.0, %v2391
        %v2393 = vpop.f32.mrf.mxu0
        %2394 = vmatprep.mubr.bf16.mxu0 0
        %2395 = vmatmul.mubr.bf16.gmra.mxu0 %v2139
        %v2396 = vpop.f32.mrf.mxu0
        %v2397 = vpop.f32.mrf.mxu0
        %v2398 = vpop.f32.mrf.mxu0
        %v2399 = vpop.f32.mrf.mxu0
        %2400 = vdwg.mxu0
        %v2401 = vadd.f32 %v1787, %v2179
        %v2402 = vadd.f32 %v1788, %v2182
        %v2403 = vadd.f32 %v1789, %v2193
        %v2404 = vadd.f32 %v1790, %v2196
        %v2405 = vadd.f32 %v1791, %v2207
        %v2406 = vadd.f32 %v1792, %v2210
        %v2407 = vadd.f32 %v1793, %v2221
        %v2408 = vadd.f32 %v1794, %v2224
        %v2409 = vadd.f32 %v1795, %v2235
        %v2410 = vadd.f32 %v1796, %v2238
        %v2411 = vadd.f32 %v1797, %v2249
        %v2412 = vadd.f32 %v1798, %v2252
        %v2413 = vadd.f32 %v1799, %v2263
        %v2414 = vadd.f32 %v1800, %v2266
        %v2415 = vadd.f32 %v1801, %v2277
        %v2416 = vadd.f32 %v1802, %v2280
        %v2417 = vadd.f32 %v1803, %v2291
        %v2418 = vadd.f32 %v1804, %v2294
        %v2419 = vadd.f32 %v1805, %v2305
        %v2420 = vadd.f32 %v1806, %v2308
        %v2421 = vadd.f32 %v1807, %v2319
        %v2422 = vadd.f32 %v1808, %v2322
        %v2423 = vadd.f32 %v1809, %v2333
        %v2424 = vadd.f32 %v1810, %v2336
        %v2425 = vadd.f32 %v1811, %v2347
        %v2426 = vadd.f32 %v1812, %v2350
        %v2427 = vadd.f32 %v1813, %v2361
        %v2428 = vadd.f32 %v1814, %v2364
        %v2429 = vadd.f32 %v1815, %v2375
        %v2430 = vadd.f32 %v1816, %v2378
        %v2431 = vadd.f32 %v1817, %v2389
        %v2432 = vadd.f32 %v1818, %v2392
        %v2433 = vld [vmem:[%s182 + $0x10] sm:$0xf]
        %v2434 = vld [vmem:[%s182 + $0x14] sm:$0xf]
        %v2435 = vld [vmem:[%s182 + $0x18] sm:$0xf]
        %v2436 = vld [vmem:[%s182 + $0x1c] sm:$0xf]
        %v2437 = vld [vmem:[%s182 + $0x20] sm:$0xf]
        %v2438 = vld [vmem:[%s182 + $0x24] sm:$0xf]
        %v2439 = vld [vmem:[%s182 + $0x28] sm:$0xf]
        %v2440 = vld [vmem:[%s182 + $0x2c] sm:$0xf]
        %v2441 = vld [vmem:[%s182 + $0x30] sm:$0xf]
        %v2442 = vld [vmem:[%s182 + $0x34] sm:$0xf]
        %v2443 = vld [vmem:[%s182 + $0x38] sm:$0xf]
        %v2444 = vld [vmem:[%s182 + $0x3c] sm:$0xf]
        %v2445 = vld [vmem:[%s182 + $0x40] sm:$0xf]
        %v2446 = vld [vmem:[%s182 + $0x44] sm:$0xf]
        %v2447 = vld [vmem:[%s182 + $0x48] sm:$0xf]
        %v2448 = vld [vmem:[%s182 + $0x4c] sm:$0xf]
        %v2449 = vld [vmem:[%s182 + $0x50] sm:$0xf]
        %v2450 = vld [vmem:[%s182 + $0x54] sm:$0xf]
        %v2451 = vld [vmem:[%s182 + $0x58] sm:$0xf]
        %v2452 = vld [vmem:[%s182 + $0x5c] sm:$0xf]
        %v2453 = vld [vmem:[%s182 + $0x60] sm:$0xf]
        %v2454 = vld [vmem:[%s182 + $0x64] sm:$0xf]
        %v2455 = vld [vmem:[%s182 + $0x68] sm:$0xf]
        %v2456 = vld [vmem:[%s182 + $0x6c] sm:$0xf]
        %v2457 = vld [vmem:[%s182 + $0x70] sm:$0xf]
        %v2458 = vld [vmem:[%s182 + $0x74] sm:$0xf]
        %v2459 = vld [vmem:[%s182 + $0x78] sm:$0xf]
        %v2460 = vld [vmem:[%s182 + $0x7c] sm:$0xf]
        %v2461 = vld [vmem:[%s182 + $0x80] sm:$0xf]
        %v2462 = vld [vmem:[%s182 + $0x84] sm:$0xf]
        %v2463 = vld [vmem:[%s182 + $0x88] sm:$0xf]
        %v2464 = vld [vmem:[%s182 + $0x8c] sm:$0xf]
        %v2465 = vld [vmem:[%s182 + $0x90] sm:$0xf]
        %v2466 = vld [vmem:[%s182 + $0x94] sm:$0xf]
        %v2467 = vld [vmem:[%s182 + $0x98] sm:$0xf]
        %v2468 = vld [vmem:[%s182 + $0x9c] sm:$0xf]
        %v2469 = vld [vmem:[%s182 + $0xa0] sm:$0xf]
        %v2470 = vld [vmem:[%s182 + $0xa4] sm:$0xf]
        %v2471 = vld [vmem:[%s182 + $0xa8] sm:$0xf]
        %v2472 = vld [vmem:[%s182 + $0xac] sm:$0xf]
        %v2473 = vld [vmem:[%s182 + $0xb0] sm:$0xf]
        %v2474 = vld [vmem:[%s182 + $0xb4] sm:$0xf]
        %v2475 = vld [vmem:[%s182 + $0xb8] sm:$0xf]
        %v2476 = vld [vmem:[%s182 + $0xbc] sm:$0xf]
        %v2477 = vld [vmem:[%s182 + $0xc0] sm:$0xf]
        %v2478 = vld [vmem:[%s182 + $0xc4] sm:$0xf]
        %v2479 = vld [vmem:[%s182 + $0xc8] sm:$0xf]
        %v2480 = vld [vmem:[%s182 + $0xcc] sm:$0xf]
        %v2481 = vld [vmem:[%s182 + $0xd0] sm:$0xf]
        %v2482 = vld [vmem:[%s182 + $0xd4] sm:$0xf]
        %v2483 = vld [vmem:[%s182 + $0xd8] sm:$0xf]
        %v2484 = vld [vmem:[%s182 + $0xdc] sm:$0xf]
        %v2485 = vld [vmem:[%s182 + $0xe0] sm:$0xf]
        %v2486 = vld [vmem:[%s182 + $0xe4] sm:$0xf]
        %v2487 = vld [vmem:[%s182 + $0xe8] sm:$0xf]
        %v2488 = vld [vmem:[%s182 + $0xec] sm:$0xf]
        %v2489 = vld [vmem:[%s182 + $0xf0] sm:$0xf]
        %v2490 = vld [vmem:[%s182 + $0xf4] sm:$0xf]
        %v2491 = vld [vmem:[%s182 + $0xf8] sm:$0xf]
        %v2492 = vld [vmem:[%s182 + $0xfc] sm:$0xf]
        %v2493 = vld [vmem:[%s182 + $0x100] sm:$0xf]
        %v2494 = vld [vmem:[%s182 + $0x104] sm:$0xf]
        %v2495 = vld [vmem:[%s182 + $0x108] sm:$0xf]
        %v2496 = vld [vmem:[%s182 + $0x10c] sm:$0xf]
        %v2497 = vld [vmem:[%s182 + $0x110] sm:$0x1]
        %s2498 = scalar_lea.vmem %s1, 8
        %v2499 = vld [vmem:[%s2498] sm:$0x3]
        %v2565 = vunpack.c.l.b16 %v2433
        %v2566 = vunpack.c.l.b16 %v2434
        %v2567 = vunpack.c.l.b16 %v2435
        %v2568 = vunpack.c.l.b16 %v2436
        %v2569 = vunpack.c.l.b16 %v2437
        %v2570 = vunpack.c.l.b16 %v2438
        %v2571 = vunpack.c.l.b16 %v2439
        %v2572 = vunpack.c.l.b16 %v2440
        %v2573 = vunpack.c.l.b16 %v2441
        %v2574 = vunpack.c.l.b16 %v2442
        %v2575 = vunpack.c.l.b16 %v2443
        %v2576 = vunpack.c.l.b16 %v2444
        %v2577 = vunpack.c.l.b16 %v2445
        %v2578 = vunpack.c.l.b16 %v2446
        %v2579 = vunpack.c.l.b16 %v2447
        %v2580 = vunpack.c.l.b16 %v2448
        %v2581 = vunpack.c.l.b16 %v2449
        %v2582 = vunpack.c.l.b16 %v2450
        %v2583 = vunpack.c.l.b16 %v2451
        %v2584 = vunpack.c.l.b16 %v2452
        %v2585 = vunpack.c.l.b16 %v2453
        %v2586 = vunpack.c.l.b16 %v2454
        %v2587 = vunpack.c.l.b16 %v2455
        %v2588 = vunpack.c.l.b16 %v2456
        %v2589 = vunpack.c.l.b16 %v2457
        %v2590 = vunpack.c.l.b16 %v2458
        %v2591 = vunpack.c.l.b16 %v2459
        %v2592 = vunpack.c.l.b16 %v2460
        %v2593 = vunpack.c.l.b16 %v2461
        %v2594 = vunpack.c.l.b16 %v2462
        %v2595 = vunpack.c.l.b16 %v2463
        %v2596 = vunpack.c.l.b16 %v2464
        %v2597 = vunpack.c.l.b16 %v2465
        %v2598 = vunpack.c.l.b16 %v2466
        %v2599 = vunpack.c.l.b16 %v2467
        %v2600 = vunpack.c.l.b16 %v2468
        %v2601 = vunpack.c.l.b16 %v2469
        %v2602 = vunpack.c.l.b16 %v2470
        %v2603 = vunpack.c.l.b16 %v2471
        %v2604 = vunpack.c.l.b16 %v2472
        %v2605 = vunpack.c.l.b16 %v2473
        %v2606 = vunpack.c.l.b16 %v2474
        %v2607 = vunpack.c.l.b16 %v2475
        %v2608 = vunpack.c.l.b16 %v2476
        %v2609 = vunpack.c.l.b16 %v2477
        %v2610 = vunpack.c.l.b16 %v2478
        %v2611 = vunpack.c.l.b16 %v2479
        %v2612 = vunpack.c.l.b16 %v2480
        %v2613 = vunpack.c.l.b16 %v2481
        %v2614 = vunpack.c.l.b16 %v2482
        %v2615 = vunpack.c.l.b16 %v2483
        %v2616 = vunpack.c.l.b16 %v2484
        %v2617 = vunpack.c.l.b16 %v2485
        %v2618 = vunpack.c.l.b16 %v2486
        %v2619 = vunpack.c.l.b16 %v2487
        %v2620 = vunpack.c.l.b16 %v2488
        %v2621 = vunpack.c.l.b16 %v2489
        %v2622 = vunpack.c.l.b16 %v2490
        %v2623 = vunpack.c.l.b16 %v2491
        %v2624 = vunpack.c.l.b16 %v2492
        %v2625 = vunpack.c.l.b16 %v2493
        %v2626 = vunpack.c.l.b16 %v2494
        %v2627 = vunpack.c.l.b16 %v2495
        %v2628 = vunpack.c.l.b16 %v2496
        %v2629 = vunpack.c.l.b16 %v2497
        %v2630 = vpack.c.b16 %v2566, %v2565
        %v2631 = vpack.c.b16 %v2568, %v2567
        %v2632 = vpack.c.b16 %v2570, %v2569
        %v2633 = vpack.c.b16 %v2572, %v2571
        %v2634 = vpack.c.b16 %v2574, %v2573
        %v2635 = vpack.c.b16 %v2576, %v2575
        %v2636 = vpack.c.b16 %v2578, %v2577
        %v2637 = vpack.c.b16 %v2580, %v2579
        %v2638 = vpack.c.b16 %v2582, %v2581
        %v2639 = vpack.c.b16 %v2584, %v2583
        %v2640 = vpack.c.b16 %v2586, %v2585
        %v2641 = vpack.c.b16 %v2588, %v2587
        %v2642 = vpack.c.b16 %v2590, %v2589
        %v2643 = vpack.c.b16 %v2592, %v2591
        %v2644 = vpack.c.b16 %v2594, %v2593
        %v2645 = vpack.c.b16 %v2596, %v2595
        %v2646 = vpack.c.b16 %v2598, %v2597
        %v2647 = vpack.c.b16 %v2600, %v2599
        %v2648 = vpack.c.b16 %v2602, %v2601
        %v2649 = vpack.c.b16 %v2604, %v2603
        %v2650 = vpack.c.b16 %v2606, %v2605
        %v2651 = vpack.c.b16 %v2608, %v2607
        %v2652 = vpack.c.b16 %v2610, %v2609
        %v2653 = vpack.c.b16 %v2612, %v2611
        %v2654 = vpack.c.b16 %v2614, %v2613
        %v2655 = vpack.c.b16 %v2616, %v2615
        %v2656 = vpack.c.b16 %v2618, %v2617
        %v2657 = vpack.c.b16 %v2620, %v2619
        %v2658 = vpack.c.b16 %v2622, %v2621
        %v2659 = vpack.c.b16 %v2624, %v2623
        %v2660 = vpack.c.b16 %v2626, %v2625
        %v2661 = vpack.c.b16 %v2628, %v2627
        %v2662 = vpack.c.b16 %v2629, %v2629
        %v2664 = vshrl.u32 %v2630, 16
        %v2666 = vshll.u32 %v2630, 16
        %v2668 = vrot.slane %v2666, 1
        %v2669 = vor.u32 %v2664, %v2668
        %v2671 = vshll.u32 %v2631, 16
        %v2673 = vrot.slane %v2671, 1
        %v2674 = vsel %vm416, %v2669, %v2673
        %v2675 = vshrl.u32 %v2631, 16
        %v2677 = vor.u32 %v2675, %v2673
        %v2679 = vshll.u32 %v2632, 16
        %v2681 = vrot.slane %v2679, 1
        %v2682 = vsel %vm416, %v2677, %v2681
        %v2683 = vshrl.u32 %v2632, 16
        %v2685 = vor.u32 %v2683, %v2681
        %v2687 = vshll.u32 %v2633, 16
        %v2689 = vrot.slane %v2687, 1
        %v2690 = vsel %vm416, %v2685, %v2689
        %v2691 = vshrl.u32 %v2633, 16
        %v2693 = vor.u32 %v2691, %v2689
        %v2695 = vshll.u32 %v2634, 16
        %v2697 = vrot.slane %v2695, 1
        %v2698 = vsel %vm416, %v2693, %v2697
        %v2699 = vshrl.u32 %v2634, 16
        %v2701 = vor.u32 %v2699, %v2697
        %v2703 = vshll.u32 %v2635, 16
        %v2705 = vrot.slane %v2703, 1
        %v2706 = vsel %vm416, %v2701, %v2705
        %v2707 = vshrl.u32 %v2635, 16
        %v2709 = vor.u32 %v2707, %v2705
        %v2711 = vshll.u32 %v2636, 16
        %v2713 = vrot.slane %v2711, 1
        %v2714 = vsel %vm416, %v2709, %v2713
        %v2715 = vshrl.u32 %v2636, 16
        %v2717 = vor.u32 %v2715, %v2713
        %v2719 = vshll.u32 %v2637, 16
        %v2721 = vrot.slane %v2719, 1
        %v2722 = vsel %vm416, %v2717, %v2721
        %v2723 = vshrl.u32 %v2637, 16
        %v2725 = vor.u32 %v2723, %v2721
        %v2727 = vshll.u32 %v2638, 16
        %v2729 = vrot.slane %v2727, 1
        %v2730 = vsel %vm416, %v2725, %v2729
        %v2731 = vshrl.u32 %v2638, 16
        %v2733 = vor.u32 %v2731, %v2729
        %v2735 = vshll.u32 %v2639, 16
        %v2737 = vrot.slane %v2735, 1
        %v2738 = vsel %vm416, %v2733, %v2737
        %v2739 = vshrl.u32 %v2639, 16
        %v2741 = vor.u32 %v2739, %v2737
        %v2743 = vshll.u32 %v2640, 16
        %v2745 = vrot.slane %v2743, 1
        %v2746 = vsel %vm416, %v2741, %v2745
        %v2747 = vshrl.u32 %v2640, 16
        %v2749 = vor.u32 %v2747, %v2745
        %v2751 = vshll.u32 %v2641, 16
        %v2753 = vrot.slane %v2751, 1
        %v2754 = vsel %vm416, %v2749, %v2753
        %v2755 = vshrl.u32 %v2641, 16
        %v2757 = vor.u32 %v2755, %v2753
        %v2759 = vshll.u32 %v2642, 16
        %v2761 = vrot.slane %v2759, 1
        %v2762 = vsel %vm416, %v2757, %v2761
        %v2763 = vshrl.u32 %v2642, 16
        %v2765 = vor.u32 %v2763, %v2761
        %v2767 = vshll.u32 %v2643, 16
        %v2769 = vrot.slane %v2767, 1
        %v2770 = vsel %vm416, %v2765, %v2769
        %v2771 = vshrl.u32 %v2643, 16
        %v2773 = vor.u32 %v2771, %v2769
        %v2775 = vshll.u32 %v2644, 16
        %v2777 = vrot.slane %v2775, 1
        %v2778 = vsel %vm416, %v2773, %v2777
        %v2779 = vshrl.u32 %v2644, 16
        %v2781 = vor.u32 %v2779, %v2777
        %v2783 = vshll.u32 %v2645, 16
        %v2785 = vrot.slane %v2783, 1
        %v2786 = vsel %vm416, %v2781, %v2785
        %v2787 = vshrl.u32 %v2645, 16
        %v2789 = vor.u32 %v2787, %v2785
        %v2791 = vshll.u32 %v2646, 16
        %v2793 = vrot.slane %v2791, 1
        %v2794 = vsel %vm416, %v2789, %v2793
        %v2795 = vshrl.u32 %v2646, 16
        %v2797 = vor.u32 %v2795, %v2793
        %v2799 = vshll.u32 %v2647, 16
        %v2801 = vrot.slane %v2799, 1
        %v2802 = vsel %vm416, %v2797, %v2801
        %v2803 = vshrl.u32 %v2647, 16
        %v2805 = vor.u32 %v2803, %v2801
        %v2807 = vshll.u32 %v2648, 16
        %v2809 = vrot.slane %v2807, 1
        %v2810 = vsel %vm416, %v2805, %v2809
        %v2811 = vshrl.u32 %v2648, 16
        %v2813 = vor.u32 %v2811, %v2809
        %v2815 = vshll.u32 %v2649, 16
        %v2817 = vrot.slane %v2815, 1
        %v2818 = vsel %vm416, %v2813, %v2817
        %v2819 = vshrl.u32 %v2649, 16
        %v2821 = vor.u32 %v2819, %v2817
        %v2823 = vshll.u32 %v2650, 16
        %v2825 = vrot.slane %v2823, 1
        %v2826 = vsel %vm416, %v2821, %v2825
        %v2827 = vshrl.u32 %v2650, 16
        %v2829 = vor.u32 %v2827, %v2825
        %v2831 = vshll.u32 %v2651, 16
        %v2833 = vrot.slane %v2831, 1
        %v2834 = vsel %vm416, %v2829, %v2833
        %v2835 = vshrl.u32 %v2651, 16
        %v2837 = vor.u32 %v2835, %v2833
        %v2839 = vshll.u32 %v2652, 16
        %v2841 = vrot.slane %v2839, 1
        %v2842 = vsel %vm416, %v2837, %v2841
        %v2843 = vshrl.u32 %v2652, 16
        %v2845 = vor.u32 %v2843, %v2841
        %v2847 = vshll.u32 %v2653, 16
        %v2849 = vrot.slane %v2847, 1
        %v2850 = vsel %vm416, %v2845, %v2849
        %v2851 = vshrl.u32 %v2653, 16
        %v2853 = vor.u32 %v2851, %v2849
        %v2855 = vshll.u32 %v2654, 16
        %v2857 = vrot.slane %v2855, 1
        %v2858 = vsel %vm416, %v2853, %v2857
        %v2859 = vshrl.u32 %v2654, 16
        %v2861 = vor.u32 %v2859, %v2857
        %v2863 = vshll.u32 %v2655, 16
        %v2865 = vrot.slane %v2863, 1
        %v2866 = vsel %vm416, %v2861, %v2865
        %v2867 = vshrl.u32 %v2655, 16
        %v2869 = vor.u32 %v2867, %v2865
        %v2871 = vshll.u32 %v2656, 16
        %v2873 = vrot.slane %v2871, 1
        %v2874 = vsel %vm416, %v2869, %v2873
        %v2875 = vshrl.u32 %v2656, 16
        %v2877 = vor.u32 %v2875, %v2873
        %v2879 = vshll.u32 %v2657, 16
        %v2881 = vrot.slane %v2879, 1
        %v2882 = vsel %vm416, %v2877, %v2881
        %v2883 = vshrl.u32 %v2657, 16
        %v2885 = vor.u32 %v2883, %v2881
        %v2887 = vshll.u32 %v2658, 16
        %v2889 = vrot.slane %v2887, 1
        %v2890 = vsel %vm416, %v2885, %v2889
        %v2891 = vshrl.u32 %v2658, 16
        %v2893 = vor.u32 %v2891, %v2889
        %v2895 = vshll.u32 %v2659, 16
        %v2897 = vrot.slane %v2895, 1
        %v2898 = vsel %vm416, %v2893, %v2897
        %v2899 = vshrl.u32 %v2659, 16
        %v2901 = vor.u32 %v2899, %v2897
        %v2903 = vshll.u32 %v2660, 16
        %v2905 = vrot.slane %v2903, 1
        %v2906 = vsel %vm416, %v2901, %v2905
        %v2907 = vshrl.u32 %v2660, 16
        %v2909 = vor.u32 %v2907, %v2905
        %v2911 = vshll.u32 %v2661, 16
        %v2913 = vrot.slane %v2911, 1
        %v2914 = vsel %vm416, %v2909, %v2913
        %v2915 = vshrl.u32 %v2661, 16
        %v2917 = vor.u32 %v2915, %v2913
        %v2919 = vshll.u32 %v2662, 16
        %v2921 = vrot.slane %v2919, 1
        %v2922 = vsel %vm416, %v2917, %v2921
        %v2924 = vsel %vm677, %v2674, 0
        %v2927 = vsel %vm677, %v2682, 0
        %v2930 = vsel %vm677, %v2690, 0
        %v2933 = vsel %vm677, %v2698, 0
        %v2936 = vsel %vm677, %v2706, 0
        %v2939 = vsel %vm677, %v2714, 0
        %v2942 = vsel %vm677, %v2722, 0
        %v2945 = vsel %vm677, %v2730, 0
        %v2948 = vsel %vm677, %v2738, 0
        %v2951 = vsel %vm677, %v2746, 0
        %v2954 = vsel %vm677, %v2754, 0
        %v2957 = vsel %vm677, %v2762, 0
        %v2960 = vsel %vm677, %v2770, 0
        %v2963 = vsel %vm677, %v2778, 0
        %v2966 = vsel %vm677, %v2786, 0
        %v2969 = vsel %vm677, %v2794, 0
        %v2972 = vsel %vm677, %v2802, 0
        %v2975 = vsel %vm677, %v2810, 0
        %v2978 = vsel %vm677, %v2818, 0
        %v2981 = vsel %vm677, %v2826, 0
        %v2984 = vsel %vm677, %v2834, 0
        %v2987 = vsel %vm677, %v2842, 0
        %v2990 = vsel %vm677, %v2850, 0
        %v2993 = vsel %vm677, %v2858, 0
        %v2996 = vsel %vm677, %v2866, 0
        %v2999 = vsel %vm677, %v2874, 0
        %v3002 = vsel %vm677, %v2882, 0
        %v3005 = vsel %vm677, %v2890, 0
        %v3008 = vsel %vm677, %v2898, 0
        %v3011 = vsel %vm677, %v2906, 0
        %v3014 = vsel %vm677, %v2914, 0
        %v3017 = vsel %vm677, %v2922, 0
        %v3020 = vsel %vm774, %v2499, 0
        %3022 = vmatprep.subr.bf16.mxu0 0
        %3023 = vmatpush1.bf16.msra.mxu0 0
        %3024 = vmatprep.subr.bf16.mxu0 0
        %3025 = vmatpush1.bf16.msra.mxu0 0
        %3026 = vmatprep.subr.bf16.mxu0 0
        %3027 = vmatpush1.bf16.msra.mxu0 0
        %3028 = vmatprep.subr.bf16.mxu0 0
        %3029 = vmatpush1.bf16.msra.mxu0 0
        %3030 = vmatprep.subr.bf16.mxu0 0
        %3031 = vmatpush1.bf16.msra.mxu0 0
        %3032 = vmatprep.subr.bf16.mxu0 0
        %3033 = vmatpush1.bf16.msra.mxu0 0
        %3034 = vmatprep.subr.bf16.mxu0 0
        %3035 = vmatpush1.bf16.msra.mxu0 0
        %3036 = vmatprep.subr.bf16.mxu0 0
        %3037 = vmatpush1.bf16.msra.mxu0 %v3020
        %3038 = vmatprep.subr.bf16.mxu0 0
        %3039 = vmatpush2.bf16.msra.mxu0 0
        %3040 = vmatprep.subr.bf16.mxu0 0
        %3041 = vmatpush2.bf16.msra.mxu0 0
        %3042 = vmatprep.subr.bf16.mxu0 0
        %3043 = vmatpush2.bf16.msra.mxu0 0
        %3044 = vmatprep.subr.bf16.mxu0 0
        %3045 = vmatpush2.bf16.msra.mxu0 0
        %3046 = vmatprep.subr.bf16.mxu0 0
        %3047 = vmatpush2.bf16.msra.mxu0 0
        %3048 = vmatprep.subr.bf16.mxu0 0
        %3049 = vmatpush2.bf16.msra.mxu0 0
        %3050 = vmatprep.subr.bf16.mxu0 0
        %3051 = vmatpush2.bf16.msra.mxu0 0
        %3052 = vmatprep.subr.bf16.mxu0 0
        %3053 = vmatpush2.bf16.msra.mxu0 0
        %3054 = vmatprep.mubr.bf16.mxu0 0
        %3055 = vmatmul.mubr.bf16.gmra.mxu0 %v2924
        %v3056 = vpop.f32.mrf.mxu0
        %v3057 = vadd.f32 0.0, %v3056
        %v3058 = vpop.f32.mrf.mxu0
        %v3059 = vpop.f32.mrf.mxu0
        %v3060 = vadd.f32 0.0, %v3059
        %v3061 = vpop.f32.mrf.mxu0
        %3062 = vmatprep.mubr.bf16.mxu0 0
        %3063 = vmatmul.mubr.bf16.gmra.mxu0 %v2927
        %v3064 = vpop.f32.mrf.mxu0
        %v3065 = vpop.f32.mrf.mxu0
        %v3066 = vpop.f32.mrf.mxu0
        %v3067 = vpop.f32.mrf.mxu0
        %3068 = vmatprep.mubr.bf16.mxu0 0
        %3069 = vmatmul.mubr.bf16.gmra.mxu0 %v2930
        %v3070 = vpop.f32.mrf.mxu0
        %v3071 = vadd.f32 0.0, %v3070
        %v3072 = vpop.f32.mrf.mxu0
        %v3073 = vpop.f32.mrf.mxu0
        %v3074 = vadd.f32 0.0, %v3073
        %v3075 = vpop.f32.mrf.mxu0
        %3076 = vmatprep.mubr.bf16.mxu0 0
        %3077 = vmatmul.mubr.bf16.gmra.mxu0 %v2933
        %v3078 = vpop.f32.mrf.mxu0
        %v3079 = vpop.f32.mrf.mxu0
        %v3080 = vpop.f32.mrf.mxu0
        %v3081 = vpop.f32.mrf.mxu0
        %3082 = vmatprep.mubr.bf16.mxu0 0
        %3083 = vmatmul.mubr.bf16.gmra.mxu0 %v2936
        %v3084 = vpop.f32.mrf.mxu0
        %v3085 = vadd.f32 0.0, %v3084
        %v3086 = vpop.f32.mrf.mxu0
        %v3087 = vpop.f32.mrf.mxu0
        %v3088 = vadd.f32 0.0, %v3087
        %v3089 = vpop.f32.mrf.mxu0
        %3090 = vmatprep.mubr.bf16.mxu0 0
        %3091 = vmatmul.mubr.bf16.gmra.mxu0 %v2939
        %v3092 = vpop.f32.mrf.mxu0
        %v3093 = vpop.f32.mrf.mxu0
        %v3094 = vpop.f32.mrf.mxu0
        %v3095 = vpop.f32.mrf.mxu0
        %3096 = vmatprep.mubr.bf16.mxu0 0
        %3097 = vmatmul.mubr.bf16.gmra.mxu0 %v2942
        %v3098 = vpop.f32.mrf.mxu0
        %v3099 = vadd.f32 0.0, %v3098
        %v3100 = vpop.f32.mrf.mxu0
        %v3101 = vpop.f32.mrf.mxu0
        %v3102 = vadd.f32 0.0, %v3101
        %v3103 = vpop.f32.mrf.mxu0
        %3104 = vmatprep.mubr.bf16.mxu0 0
        %3105 = vmatmul.mubr.bf16.gmra.mxu0 %v2945
        %v3106 = vpop.f32.mrf.mxu0
        %v3107 = vpop.f32.mrf.mxu0
        %v3108 = vpop.f32.mrf.mxu0
        %v3109 = vpop.f32.mrf.mxu0
        %3110 = vmatprep.mubr.bf16.mxu0 0
        %3111 = vmatmul.mubr.bf16.gmra.mxu0 %v2948
        %v3112 = vpop.f32.mrf.mxu0
        %v3113 = vadd.f32 0.0, %v3112
        %v3114 = vpop.f32.mrf.mxu0
        %v3115 = vpop.f32.mrf.mxu0
        %v3116 = vadd.f32 0.0, %v3115
        %v3117 = vpop.f32.mrf.mxu0
        %3118 = vmatprep.mubr.bf16.mxu0 0
        %3119 = vmatmul.mubr.bf16.gmra.mxu0 %v2951
        %v3120 = vpop.f32.mrf.mxu0
        %v3121 = vpop.f32.mrf.mxu0
        %v3122 = vpop.f32.mrf.mxu0
        %v3123 = vpop.f32.mrf.mxu0
        %3124 = vmatprep.mubr.bf16.mxu0 0
        %3125 = vmatmul.mubr.bf16.gmra.mxu0 %v2954
        %v3126 = vpop.f32.mrf.mxu0
        %v3127 = vadd.f32 0.0, %v3126
        %v3128 = vpop.f32.mrf.mxu0
        %v3129 = vpop.f32.mrf.mxu0
        %v3130 = vadd.f32 0.0, %v3129
        %v3131 = vpop.f32.mrf.mxu0
        %3132 = vmatprep.mubr.bf16.mxu0 0
        %3133 = vmatmul.mubr.bf16.gmra.mxu0 %v2957
        %v3134 = vpop.f32.mrf.mxu0
        %v3135 = vpop.f32.mrf.mxu0
        %v3136 = vpop.f32.mrf.mxu0
        %v3137 = vpop.f32.mrf.mxu0
        %3138 = vmatprep.mubr.bf16.mxu0 0
        %3139 = vmatmul.mubr.bf16.gmra.mxu0 %v2960
        %v3140 = vpop.f32.mrf.mxu0
        %v3141 = vadd.f32 0.0, %v3140
        %v3142 = vpop.f32.mrf.mxu0
        %v3143 = vpop.f32.mrf.mxu0
        %v3144 = vadd.f32 0.0, %v3143
        %v3145 = vpop.f32.mrf.mxu0
        %3146 = vmatprep.mubr.bf16.mxu0 0
        %3147 = vmatmul.mubr.bf16.gmra.mxu0 %v2963
        %v3148 = vpop.f32.mrf.mxu0
        %v3149 = vpop.f32.mrf.mxu0
        %v3150 = vpop.f32.mrf.mxu0
        %v3151 = vpop.f32.mrf.mxu0
        %3152 = vmatprep.mubr.bf16.mxu0 0
        %3153 = vmatmul.mubr.bf16.gmra.mxu0 %v2966
        %v3154 = vpop.f32.mrf.mxu0
        %v3155 = vadd.f32 0.0, %v3154
        %v3156 = vpop.f32.mrf.mxu0
        %v3157 = vpop.f32.mrf.mxu0
        %v3158 = vadd.f32 0.0, %v3157
        %v3159 = vpop.f32.mrf.mxu0
        %3160 = vmatprep.mubr.bf16.mxu0 0
        %3161 = vmatmul.mubr.bf16.gmra.mxu0 %v2969
        %v3162 = vpop.f32.mrf.mxu0
        %v3163 = vpop.f32.mrf.mxu0
        %v3164 = vpop.f32.mrf.mxu0
        %v3165 = vpop.f32.mrf.mxu0
        %3166 = vmatprep.mubr.bf16.mxu0 0
        %3167 = vmatmul.mubr.bf16.gmra.mxu0 %v2972
        %v3168 = vpop.f32.mrf.mxu0
        %v3169 = vadd.f32 0.0, %v3168
        %v3170 = vpop.f32.mrf.mxu0
        %v3171 = vpop.f32.mrf.mxu0
        %v3172 = vadd.f32 0.0, %v3171
        %v3173 = vpop.f32.mrf.mxu0
        %3174 = vmatprep.mubr.bf16.mxu0 0
        %3175 = vmatmul.mubr.bf16.gmra.mxu0 %v2975
        %v3176 = vpop.f32.mrf.mxu0
        %v3177 = vpop.f32.mrf.mxu0
        %v3178 = vpop.f32.mrf.mxu0
        %v3179 = vpop.f32.mrf.mxu0
        %3180 = vmatprep.mubr.bf16.mxu0 0
        %3181 = vmatmul.mubr.bf16.gmra.mxu0 %v2978
        %v3182 = vpop.f32.mrf.mxu0
        %v3183 = vadd.f32 0.0, %v3182
        %v3184 = vpop.f32.mrf.mxu0
        %v3185 = vpop.f32.mrf.mxu0
        %v3186 = vadd.f32 0.0, %v3185
        %v3187 = vpop.f32.mrf.mxu0
        %3188 = vmatprep.mubr.bf16.mxu0 0
        %3189 = vmatmul.mubr.bf16.gmra.mxu0 %v2981
        %v3190 = vpop.f32.mrf.mxu0
        %v3191 = vpop.f32.mrf.mxu0
        %v3192 = vpop.f32.mrf.mxu0
        %v3193 = vpop.f32.mrf.mxu0
        %3194 = vmatprep.mubr.bf16.mxu0 0
        %3195 = vmatmul.mubr.bf16.gmra.mxu0 %v2984
        %v3196 = vpop.f32.mrf.mxu0
        %v3197 = vadd.f32 0.0, %v3196
        %v3198 = vpop.f32.mrf.mxu0
        %v3199 = vpop.f32.mrf.mxu0
        %v3200 = vadd.f32 0.0, %v3199
        %v3201 = vpop.f32.mrf.mxu0
        %3202 = vmatprep.mubr.bf16.mxu0 0
        %3203 = vmatmul.mubr.bf16.gmra.mxu0 %v2987
        %v3204 = vpop.f32.mrf.mxu0
        %v3205 = vpop.f32.mrf.mxu0
        %v3206 = vpop.f32.mrf.mxu0
        %v3207 = vpop.f32.mrf.mxu0
        %3208 = vmatprep.mubr.bf16.mxu0 0
        %3209 = vmatmul.mubr.bf16.gmra.mxu0 %v2990
        %v3210 = vpop.f32.mrf.mxu0
        %v3211 = vadd.f32 0.0, %v3210
        %v3212 = vpop.f32.mrf.mxu0
        %v3213 = vpop.f32.mrf.mxu0
        %v3214 = vadd.f32 0.0, %v3213
        %v3215 = vpop.f32.mrf.mxu0
        %3216 = vmatprep.mubr.bf16.mxu0 0
        %3217 = vmatmul.mubr.bf16.gmra.mxu0 %v2993
        %v3218 = vpop.f32.mrf.mxu0
        %v3219 = vpop.f32.mrf.mxu0
        %v3220 = vpop.f32.mrf.mxu0
        %v3221 = vpop.f32.mrf.mxu0
        %3222 = vmatprep.mubr.bf16.mxu0 0
        %3223 = vmatmul.mubr.bf16.gmra.mxu0 %v2996
        %v3224 = vpop.f32.mrf.mxu0
        %v3225 = vadd.f32 0.0, %v3224
        %v3226 = vpop.f32.mrf.mxu0
        %v3227 = vpop.f32.mrf.mxu0
        %v3228 = vadd.f32 0.0, %v3227
        %v3229 = vpop.f32.mrf.mxu0
        %3230 = vmatprep.mubr.bf16.mxu0 0
        %3231 = vmatmul.mubr.bf16.gmra.mxu0 %v2999
        %v3232 = vpop.f32.mrf.mxu0
        %v3233 = vpop.f32.mrf.mxu0
        %v3234 = vpop.f32.mrf.mxu0
        %v3235 = vpop.f32.mrf.mxu0
        %3236 = vmatprep.mubr.bf16.mxu0 0
        %3237 = vmatmul.mubr.bf16.gmra.mxu0 %v3002
        %v3238 = vpop.f32.mrf.mxu0
        %v3239 = vadd.f32 0.0, %v3238
        %v3240 = vpop.f32.mrf.mxu0
        %v3241 = vpop.f32.mrf.mxu0
        %v3242 = vadd.f32 0.0, %v3241
        %v3243 = vpop.f32.mrf.mxu0
        %3244 = vmatprep.mubr.bf16.mxu0 0
        %3245 = vmatmul.mubr.bf16.gmra.mxu0 %v3005
        %v3246 = vpop.f32.mrf.mxu0
        %v3247 = vpop.f32.mrf.mxu0
        %v3248 = vpop.f32.mrf.mxu0
        %v3249 = vpop.f32.mrf.mxu0
        %3250 = vmatprep.mubr.bf16.mxu0 0
        %3251 = vmatmul.mubr.bf16.gmra.mxu0 %v3008
        %v3252 = vpop.f32.mrf.mxu0
        %v3253 = vadd.f32 0.0, %v3252
        %v3254 = vpop.f32.mrf.mxu0
        %v3255 = vpop.f32.mrf.mxu0
        %v3256 = vadd.f32 0.0, %v3255
        %v3257 = vpop.f32.mrf.mxu0
        %3258 = vmatprep.mubr.bf16.mxu0 0
        %3259 = vmatmul.mubr.bf16.gmra.mxu0 %v3011
        %v3260 = vpop.f32.mrf.mxu0
        %v3261 = vpop.f32.mrf.mxu0
        %v3262 = vpop.f32.mrf.mxu0
        %v3263 = vpop.f32.mrf.mxu0
        %3264 = vmatprep.mubr.bf16.mxu0 0
        %3265 = vmatmul.mubr.bf16.gmra.mxu0 %v3014
        %v3266 = vpop.f32.mrf.mxu0
        %v3267 = vadd.f32 0.0, %v3266
        %v3268 = vpop.f32.mrf.mxu0
        %v3269 = vpop.f32.mrf.mxu0
        %v3270 = vadd.f32 0.0, %v3269
        %v3271 = vpop.f32.mrf.mxu0
        %3272 = vmatprep.mubr.bf16.mxu0 0
        %3273 = vmatmul.mubr.bf16.gmra.mxu0 %v3017
        %v3274 = vpop.f32.mrf.mxu0
        %v3275 = vpop.f32.mrf.mxu0
        %v3276 = vpop.f32.mrf.mxu0
        %v3277 = vpop.f32.mrf.mxu0
        %3278 = vdwg.mxu0
        %v3279 = vadd.f32 %v2401, %v3057
        %v3280 = vadd.f32 %v2402, %v3060
        %v3281 = vadd.f32 %v2403, %v3071
        %v3282 = vadd.f32 %v2404, %v3074
        %v3283 = vadd.f32 %v2405, %v3085
        %v3284 = vadd.f32 %v2406, %v3088
        %v3285 = vadd.f32 %v2407, %v3099
        %v3286 = vadd.f32 %v2408, %v3102
        %v3287 = vadd.f32 %v2409, %v3113
        %v3288 = vadd.f32 %v2410, %v3116
        %v3289 = vadd.f32 %v2411, %v3127
        %v3290 = vadd.f32 %v2412, %v3130
        %v3291 = vadd.f32 %v2413, %v3141
        %v3292 = vadd.f32 %v2414, %v3144
        %v3293 = vadd.f32 %v2415, %v3155
        %v3294 = vadd.f32 %v2416, %v3158
        %v3295 = vadd.f32 %v2417, %v3169
        %v3296 = vadd.f32 %v2418, %v3172
        %v3297 = vadd.f32 %v2419, %v3183
        %v3298 = vadd.f32 %v2420, %v3186
        %v3299 = vadd.f32 %v2421, %v3197
        %v3300 = vadd.f32 %v2422, %v3200
        %v3301 = vadd.f32 %v2423, %v3211
        %v3302 = vadd.f32 %v2424, %v3214
        %v3303 = vadd.f32 %v2425, %v3225
        %v3304 = vadd.f32 %v2426, %v3228
        %v3305 = vadd.f32 %v2427, %v3239
        %v3306 = vadd.f32 %v2428, %v3242
        %v3307 = vadd.f32 %v2429, %v3253
        %v3308 = vadd.f32 %v2430, %v3256
        %v3309 = vadd.f32 %v2431, %v3267
        %v3310 = vadd.f32 %v2432, %v3270
        %v3311 = vld [vmem:[%s182 + $0x10] sm:$0xe]
        %s3312 = scalar_lea.vmem %s1, 10
        %v3313 = vld [vmem:[%s3312] sm:$0x3]
        %v3315 = vunpack.c.l.b16 %v3311
        %v3316 = vpack.c.b16 %v2566, %v3315
        %v3317 = vrot.slane %v3316, 1
        %v3318 = vrot.slane %v2631, 1
        %v3319 = vsel %vm1365, %v3317, %v3318
        %v3320 = vrot.slane %v2632, 1
        %v3321 = vsel %vm1365, %v3318, %v3320
        %v3322 = vrot.slane %v2633, 1
        %v3323 = vsel %vm1365, %v3320, %v3322
        %v3324 = vrot.slane %v2634, 1
        %v3325 = vsel %vm1365, %v3322, %v3324
        %v3326 = vrot.slane %v2635, 1
        %v3327 = vsel %vm1365, %v3324, %v3326
        %v3328 = vrot.slane %v2636, 1
        %v3329 = vsel %vm1365, %v3326, %v3328
        %v3330 = vrot.slane %v2637, 1
        %v3331 = vsel %vm1365, %v3328, %v3330
        %v3332 = vrot.slane %v2638, 1
        %v3333 = vsel %vm1365, %v3330, %v3332
        %v3334 = vrot.slane %v2639, 1
        %v3335 = vsel %vm1365, %v3332, %v3334
        %v3336 = vrot.slane %v2640, 1
        %v3337 = vsel %vm1365, %v3334, %v3336
        %v3338 = vrot.slane %v2641, 1
        %v3339 = vsel %vm1365, %v3336, %v3338
        %v3340 = vrot.slane %v2642, 1
        %v3341 = vsel %vm1365, %v3338, %v3340
        %v3342 = vrot.slane %v2643, 1
        %v3343 = vsel %vm1365, %v3340, %v3342
        %v3344 = vrot.slane %v2644, 1
        %v3345 = vsel %vm1365, %v3342, %v3344
        %v3346 = vrot.slane %v2645, 1
        %v3347 = vsel %vm1365, %v3344, %v3346
        %v3348 = vrot.slane %v2646, 1
        %v3349 = vsel %vm1365, %v3346, %v3348
        %v3350 = vrot.slane %v2647, 1
        %v3351 = vsel %vm1365, %v3348, %v3350
        %v3352 = vrot.slane %v2648, 1
        %v3353 = vsel %vm1365, %v3350, %v3352
        %v3354 = vrot.slane %v2649, 1
        %v3355 = vsel %vm1365, %v3352, %v3354
        %v3356 = vrot.slane %v2650, 1
        %v3357 = vsel %vm1365, %v3354, %v3356
        %v3358 = vrot.slane %v2651, 1
        %v3359 = vsel %vm1365, %v3356, %v3358
        %v3360 = vrot.slane %v2652, 1
        %v3361 = vsel %vm1365, %v3358, %v3360
        %v3362 = vrot.slane %v2653, 1
        %v3363 = vsel %vm1365, %v3360, %v3362
        %v3364 = vrot.slane %v2654, 1
        %v3365 = vsel %vm1365, %v3362, %v3364
        %v3366 = vrot.slane %v2655, 1
        %v3367 = vsel %vm1365, %v3364, %v3366
        %v3368 = vrot.slane %v2656, 1
        %v3369 = vsel %vm1365, %v3366, %v3368
        %v3370 = vrot.slane %v2657, 1
        %v3371 = vsel %vm1365, %v3368, %v3370
        %v3372 = vrot.slane %v2658, 1
        %v3373 = vsel %vm1365, %v3370, %v3372
        %v3374 = vrot.slane %v2659, 1
        %v3375 = vsel %vm1365, %v3372, %v3374
        %v3376 = vrot.slane %v2660, 1
        %v3377 = vsel %vm1365, %v3374, %v3376
        %v3378 = vrot.slane %v2661, 1
        %v3379 = vsel %vm1365, %v3376, %v3378
        %v3380 = vrot.slane %v2662, 1
        %v3381 = vsel %vm1365, %v3378, %v3380
        %v3383 = vsel %vm677, %v3319, 0
        %v3386 = vsel %vm677, %v3321, 0
        %v3389 = vsel %vm677, %v3323, 0
        %v3392 = vsel %vm677, %v3325, 0
        %v3395 = vsel %vm677, %v3327, 0
        %v3398 = vsel %vm677, %v3329, 0
        %v3401 = vsel %vm677, %v3331, 0
        %v3404 = vsel %vm677, %v3333, 0
        %v3407 = vsel %vm677, %v3335, 0
        %v3410 = vsel %vm677, %v3337, 0
        %v3413 = vsel %vm677, %v3339, 0
        %v3416 = vsel %vm677, %v3341, 0
        %v3419 = vsel %vm677, %v3343, 0
        %v3422 = vsel %vm677, %v3345, 0
        %v3425 = vsel %vm677, %v3347, 0
        %v3428 = vsel %vm677, %v3349, 0
        %v3431 = vsel %vm677, %v3351, 0
        %v3434 = vsel %vm677, %v3353, 0
        %v3437 = vsel %vm677, %v3355, 0
        %v3440 = vsel %vm677, %v3357, 0
        %v3443 = vsel %vm677, %v3359, 0
        %v3446 = vsel %vm677, %v3361, 0
        %v3449 = vsel %vm677, %v3363, 0
        %v3452 = vsel %vm677, %v3365, 0
        %v3455 = vsel %vm677, %v3367, 0
        %v3458 = vsel %vm677, %v3369, 0
        %v3461 = vsel %vm677, %v3371, 0
        %v3464 = vsel %vm677, %v3373, 0
        %v3467 = vsel %vm677, %v3375, 0
        %v3470 = vsel %vm677, %v3377, 0
        %v3473 = vsel %vm677, %v3379, 0
        %v3476 = vsel %vm677, %v3381, 0
        %v3479 = vsel %vm774, %v3313, 0
        %3481 = vmatprep.subr.bf16.mxu0 0
        %3482 = vmatpush1.bf16.msra.mxu0 0
        %3483 = vmatprep.subr.bf16.mxu0 0
        %3484 = vmatpush1.bf16.msra.mxu0 0
        %3485 = vmatprep.subr.bf16.mxu0 0
        %3486 = vmatpush1.bf16.msra.mxu0 0
        %3487 = vmatprep.subr.bf16.mxu0 0
        %3488 = vmatpush1.bf16.msra.mxu0 0
        %3489 = vmatprep.subr.bf16.mxu0 0
        %3490 = vmatpush1.bf16.msra.mxu0 0
        %3491 = vmatprep.subr.bf16.mxu0 0
        %3492 = vmatpush1.bf16.msra.mxu0 0
        %3493 = vmatprep.subr.bf16.mxu0 0
        %3494 = vmatpush1.bf16.msra.mxu0 0
        %3495 = vmatprep.subr.bf16.mxu0 0
        %3496 = vmatpush1.bf16.msra.mxu0 %v3479
        %3497 = vmatprep.subr.bf16.mxu0 0
        %3498 = vmatpush2.bf16.msra.mxu0 0
        %3499 = vmatprep.subr.bf16.mxu0 0
        %3500 = vmatpush2.bf16.msra.mxu0 0
        %3501 = vmatprep.subr.bf16.mxu0 0
        %3502 = vmatpush2.bf16.msra.mxu0 0
        %3503 = vmatprep.subr.bf16.mxu0 0
        %3504 = vmatpush2.bf16.msra.mxu0 0
        %3505 = vmatprep.subr.bf16.mxu0 0
        %3506 = vmatpush2.bf16.msra.mxu0 0
        %3507 = vmatprep.subr.bf16.mxu0 0
        %3508 = vmatpush2.bf16.msra.mxu0 0
        %3509 = vmatprep.subr.bf16.mxu0 0
        %3510 = vmatpush2.bf16.msra.mxu0 0
        %3511 = vmatprep.subr.bf16.mxu0 0
        %3512 = vmatpush2.bf16.msra.mxu0 0
        %3513 = vmatprep.mubr.bf16.mxu0 0
        %3514 = vmatmul.mubr.bf16.gmra.mxu0 %v3383
        %v3515 = vpop.f32.mrf.mxu0
        %v3516 = vadd.f32 0.0, %v3515
        %v3517 = vpop.f32.mrf.mxu0
        %v3518 = vpop.f32.mrf.mxu0
        %v3519 = vadd.f32 0.0, %v3518
        %v3520 = vpop.f32.mrf.mxu0
        %3521 = vmatprep.mubr.bf16.mxu0 0
        %3522 = vmatmul.mubr.bf16.gmra.mxu0 %v3386
        %v3523 = vpop.f32.mrf.mxu0
        %v3524 = vpop.f32.mrf.mxu0
        %v3525 = vpop.f32.mrf.mxu0
        %v3526 = vpop.f32.mrf.mxu0
        %3527 = vmatprep.mubr.bf16.mxu0 0
        %3528 = vmatmul.mubr.bf16.gmra.mxu0 %v3389
        %v3529 = vpop.f32.mrf.mxu0
        %v3530 = vadd.f32 0.0, %v3529
        %v3531 = vpop.f32.mrf.mxu0
        %v3532 = vpop.f32.mrf.mxu0
        %v3533 = vadd.f32 0.0, %v3532
        %v3534 = vpop.f32.mrf.mxu0
        %3535 = vmatprep.mubr.bf16.mxu0 0
        %3536 = vmatmul.mubr.bf16.gmra.mxu0 %v3392
        %v3537 = vpop.f32.mrf.mxu0
        %v3538 = vpop.f32.mrf.mxu0
        %v3539 = vpop.f32.mrf.mxu0
        %v3540 = vpop.f32.mrf.mxu0
        %3541 = vmatprep.mubr.bf16.mxu0 0
        %3542 = vmatmul.mubr.bf16.gmra.mxu0 %v3395
        %v3543 = vpop.f32.mrf.mxu0
        %v3544 = vadd.f32 0.0, %v3543
        %v3545 = vpop.f32.mrf.mxu0
        %v3546 = vpop.f32.mrf.mxu0
        %v3547 = vadd.f32 0.0, %v3546
        %v3548 = vpop.f32.mrf.mxu0
        %3549 = vmatprep.mubr.bf16.mxu0 0
        %3550 = vmatmul.mubr.bf16.gmra.mxu0 %v3398
        %v3551 = vpop.f32.mrf.mxu0
        %v3552 = vpop.f32.mrf.mxu0
        %v3553 = vpop.f32.mrf.mxu0
        %v3554 = vpop.f32.mrf.mxu0
        %3555 = vmatprep.mubr.bf16.mxu0 0
        %3556 = vmatmul.mubr.bf16.gmra.mxu0 %v3401
        %v3557 = vpop.f32.mrf.mxu0
        %v3558 = vadd.f32 0.0, %v3557
        %v3559 = vpop.f32.mrf.mxu0
        %v3560 = vpop.f32.mrf.mxu0
        %v3561 = vadd.f32 0.0, %v3560
        %v3562 = vpop.f32.mrf.mxu0
        %3563 = vmatprep.mubr.bf16.mxu0 0
        %3564 = vmatmul.mubr.bf16.gmra.mxu0 %v3404
        %v3565 = vpop.f32.mrf.mxu0
        %v3566 = vpop.f32.mrf.mxu0
        %v3567 = vpop.f32.mrf.mxu0
        %v3568 = vpop.f32.mrf.mxu0
        %3569 = vmatprep.mubr.bf16.mxu0 0
        %3570 = vmatmul.mubr.bf16.gmra.mxu0 %v3407
        %v3571 = vpop.f32.mrf.mxu0
        %v3572 = vadd.f32 0.0, %v3571
        %v3573 = vpop.f32.mrf.mxu0
        %v3574 = vpop.f32.mrf.mxu0
        %v3575 = vadd.f32 0.0, %v3574
        %v3576 = vpop.f32.mrf.mxu0
        %3577 = vmatprep.mubr.bf16.mxu0 0
        %3578 = vmatmul.mubr.bf16.gmra.mxu0 %v3410
        %v3579 = vpop.f32.mrf.mxu0
        %v3580 = vpop.f32.mrf.mxu0
        %v3581 = vpop.f32.mrf.mxu0
        %v3582 = vpop.f32.mrf.mxu0
        %3583 = vmatprep.mubr.bf16.mxu0 0
        %3584 = vmatmul.mubr.bf16.gmra.mxu0 %v3413
        %v3585 = vpop.f32.mrf.mxu0
        %v3586 = vadd.f32 0.0, %v3585
        %v3587 = vpop.f32.mrf.mxu0
        %v3588 = vpop.f32.mrf.mxu0
        %v3589 = vadd.f32 0.0, %v3588
        %v3590 = vpop.f32.mrf.mxu0
        %3591 = vmatprep.mubr.bf16.mxu0 0
        %3592 = vmatmul.mubr.bf16.gmra.mxu0 %v3416
        %v3593 = vpop.f32.mrf.mxu0
        %v3594 = vpop.f32.mrf.mxu0
        %v3595 = vpop.f32.mrf.mxu0
        %v3596 = vpop.f32.mrf.mxu0
        %3597 = vmatprep.mubr.bf16.mxu0 0
        %3598 = vmatmul.mubr.bf16.gmra.mxu0 %v3419
        %v3599 = vpop.f32.mrf.mxu0
        %v3600 = vadd.f32 0.0, %v3599
        %v3601 = vpop.f32.mrf.mxu0
        %v3602 = vpop.f32.mrf.mxu0
        %v3603 = vadd.f32 0.0, %v3602
        %v3604 = vpop.f32.mrf.mxu0
        %3605 = vmatprep.mubr.bf16.mxu0 0
        %3606 = vmatmul.mubr.bf16.gmra.mxu0 %v3422
        %v3607 = vpop.f32.mrf.mxu0
        %v3608 = vpop.f32.mrf.mxu0
        %v3609 = vpop.f32.mrf.mxu0
        %v3610 = vpop.f32.mrf.mxu0
        %3611 = vmatprep.mubr.bf16.mxu0 0
        %3612 = vmatmul.mubr.bf16.gmra.mxu0 %v3425
        %v3613 = vpop.f32.mrf.mxu0
        %v3614 = vadd.f32 0.0, %v3613
        %v3615 = vpop.f32.mrf.mxu0
        %v3616 = vpop.f32.mrf.mxu0
        %v3617 = vadd.f32 0.0, %v3616
        %v3618 = vpop.f32.mrf.mxu0
        %3619 = vmatprep.mubr.bf16.mxu0 0
        %3620 = vmatmul.mubr.bf16.gmra.mxu0 %v3428
        %v3621 = vpop.f32.mrf.mxu0
        %v3622 = vpop.f32.mrf.mxu0
        %v3623 = vpop.f32.mrf.mxu0
        %v3624 = vpop.f32.mrf.mxu0
        %3625 = vmatprep.mubr.bf16.mxu0 0
        %3626 = vmatmul.mubr.bf16.gmra.mxu0 %v3431
        %v3627 = vpop.f32.mrf.mxu0
        %v3628 = vadd.f32 0.0, %v3627
        %v3629 = vpop.f32.mrf.mxu0
        %v3630 = vpop.f32.mrf.mxu0
        %v3631 = vadd.f32 0.0, %v3630
        %v3632 = vpop.f32.mrf.mxu0
        %3633 = vmatprep.mubr.bf16.mxu0 0
        %3634 = vmatmul.mubr.bf16.gmra.mxu0 %v3434
        %v3635 = vpop.f32.mrf.mxu0
        %v3636 = vpop.f32.mrf.mxu0
        %v3637 = vpop.f32.mrf.mxu0
        %v3638 = vpop.f32.mrf.mxu0
        %3639 = vmatprep.mubr.bf16.mxu0 0
        %3640 = vmatmul.mubr.bf16.gmra.mxu0 %v3437
        %v3641 = vpop.f32.mrf.mxu0
        %v3642 = vadd.f32 0.0, %v3641
        %v3643 = vpop.f32.mrf.mxu0
        %v3644 = vpop.f32.mrf.mxu0
        %v3645 = vadd.f32 0.0, %v3644
        %v3646 = vpop.f32.mrf.mxu0
        %3647 = vmatprep.mubr.bf16.mxu0 0
        %3648 = vmatmul.mubr.bf16.gmra.mxu0 %v3440
        %v3649 = vpop.f32.mrf.mxu0
        %v3650 = vpop.f32.mrf.mxu0
        %v3651 = vpop.f32.mrf.mxu0
        %v3652 = vpop.f32.mrf.mxu0
        %3653 = vmatprep.mubr.bf16.mxu0 0
        %3654 = vmatmul.mubr.bf16.gmra.mxu0 %v3443
        %v3655 = vpop.f32.mrf.mxu0
        %v3656 = vadd.f32 0.0, %v3655
        %v3657 = vpop.f32.mrf.mxu0
        %v3658 = vpop.f32.mrf.mxu0
        %v3659 = vadd.f32 0.0, %v3658
        %v3660 = vpop.f32.mrf.mxu0
        %3661 = vmatprep.mubr.bf16.mxu0 0
        %3662 = vmatmul.mubr.bf16.gmra.mxu0 %v3446
        %v3663 = vpop.f32.mrf.mxu0
        %v3664 = vpop.f32.mrf.mxu0
        %v3665 = vpop.f32.mrf.mxu0
        %v3666 = vpop.f32.mrf.mxu0
        %3667 = vmatprep.mubr.bf16.mxu0 0
        %3668 = vmatmul.mubr.bf16.gmra.mxu0 %v3449
        %v3669 = vpop.f32.mrf.mxu0
        %v3670 = vadd.f32 0.0, %v3669
        %v3671 = vpop.f32.mrf.mxu0
        %v3672 = vpop.f32.mrf.mxu0
        %v3673 = vadd.f32 0.0, %v3672
        %v3674 = vpop.f32.mrf.mxu0
        %3675 = vmatprep.mubr.bf16.mxu0 0
        %3676 = vmatmul.mubr.bf16.gmra.mxu0 %v3452
        %v3677 = vpop.f32.mrf.mxu0
        %v3678 = vpop.f32.mrf.mxu0
        %v3679 = vpop.f32.mrf.mxu0
        %v3680 = vpop.f32.mrf.mxu0
        %3681 = vmatprep.mubr.bf16.mxu0 0
        %3682 = vmatmul.mubr.bf16.gmra.mxu0 %v3455
        %v3683 = vpop.f32.mrf.mxu0
        %v3684 = vadd.f32 0.0, %v3683
        %v3685 = vpop.f32.mrf.mxu0
        %v3686 = vpop.f32.mrf.mxu0
        %v3687 = vadd.f32 0.0, %v3686
        %v3688 = vpop.f32.mrf.mxu0
        %3689 = vmatprep.mubr.bf16.mxu0 0
        %3690 = vmatmul.mubr.bf16.gmra.mxu0 %v3458
        %v3691 = vpop.f32.mrf.mxu0
        %v3692 = vpop.f32.mrf.mxu0
        %v3693 = vpop.f32.mrf.mxu0
        %v3694 = vpop.f32.mrf.mxu0
        %3695 = vmatprep.mubr.bf16.mxu0 0
        %3696 = vmatmul.mubr.bf16.gmra.mxu0 %v3461
        %v3697 = vpop.f32.mrf.mxu0
        %v3698 = vadd.f32 0.0, %v3697
        %v3699 = vpop.f32.mrf.mxu0
        %v3700 = vpop.f32.mrf.mxu0
        %v3701 = vadd.f32 0.0, %v3700
        %v3702 = vpop.f32.mrf.mxu0
        %3703 = vmatprep.mubr.bf16.mxu0 0
        %3704 = vmatmul.mubr.bf16.gmra.mxu0 %v3464
        %v3705 = vpop.f32.mrf.mxu0
        %v3706 = vpop.f32.mrf.mxu0
        %v3707 = vpop.f32.mrf.mxu0
        %v3708 = vpop.f32.mrf.mxu0
        %3709 = vmatprep.mubr.bf16.mxu0 0
        %3710 = vmatmul.mubr.bf16.gmra.mxu0 %v3467
        %v3711 = vpop.f32.mrf.mxu0
        %v3712 = vadd.f32 0.0, %v3711
        %v3713 = vpop.f32.mrf.mxu0
        %v3714 = vpop.f32.mrf.mxu0
        %v3715 = vadd.f32 0.0, %v3714
        %v3716 = vpop.f32.mrf.mxu0
        %3717 = vmatprep.mubr.bf16.mxu0 0
        %3718 = vmatmul.mubr.bf16.gmra.mxu0 %v3470
        %v3719 = vpop.f32.mrf.mxu0
        %v3720 = vpop.f32.mrf.mxu0
        %v3721 = vpop.f32.mrf.mxu0
        %v3722 = vpop.f32.mrf.mxu0
        %3723 = vmatprep.mubr.bf16.mxu0 0
        %3724 = vmatmul.mubr.bf16.gmra.mxu0 %v3473
        %v3725 = vpop.f32.mrf.mxu0
        %v3726 = vadd.f32 0.0, %v3725
        %v3727 = vpop.f32.mrf.mxu0
        %v3728 = vpop.f32.mrf.mxu0
        %v3729 = vadd.f32 0.0, %v3728
        %v3730 = vpop.f32.mrf.mxu0
        %3731 = vmatprep.mubr.bf16.mxu0 0
        %3732 = vmatmul.mubr.bf16.gmra.mxu0 %v3476
        %v3733 = vpop.f32.mrf.mxu0
        %v3734 = vpop.f32.mrf.mxu0
        %v3735 = vpop.f32.mrf.mxu0
        %v3736 = vpop.f32.mrf.mxu0
        %3737 = vdwg.mxu0
        %v3738 = vadd.f32 %v3279, %v3516
        %v3739 = vadd.f32 %v3280, %v3519
        %v3740 = vadd.f32 %v3281, %v3530
        %v3741 = vadd.f32 %v3282, %v3533
        %v3742 = vadd.f32 %v3283, %v3544
        %v3743 = vadd.f32 %v3284, %v3547
        %v3744 = vadd.f32 %v3285, %v3558
        %v3745 = vadd.f32 %v3286, %v3561
        %v3746 = vadd.f32 %v3287, %v3572
        %v3747 = vadd.f32 %v3288, %v3575
        %v3748 = vadd.f32 %v3289, %v3586
        %v3749 = vadd.f32 %v3290, %v3589
        %v3750 = vadd.f32 %v3291, %v3600
        %v3751 = vadd.f32 %v3292, %v3603
        %v3752 = vadd.f32 %v3293, %v3614
        %v3753 = vadd.f32 %v3294, %v3617
        %v3754 = vadd.f32 %v3295, %v3628
        %v3755 = vadd.f32 %v3296, %v3631
        %v3756 = vadd.f32 %v3297, %v3642
        %v3757 = vadd.f32 %v3298, %v3645
        %v3758 = vadd.f32 %v3299, %v3656
        %v3759 = vadd.f32 %v3300, %v3659
        %v3760 = vadd.f32 %v3301, %v3670
        %v3761 = vadd.f32 %v3302, %v3673
        %v3762 = vadd.f32 %v3303, %v3684
        %v3763 = vadd.f32 %v3304, %v3687
        %v3764 = vadd.f32 %v3305, %v3698
        %v3765 = vadd.f32 %v3306, %v3701
        %v3766 = vadd.f32 %v3307, %v3712
        %v3767 = vadd.f32 %v3308, %v3715
        %v3768 = vadd.f32 %v3309, %v3726
        %v3769 = vadd.f32 %v3310, %v3729
        %v3770 = vld [vmem:[%s182 + $0x20] sm:$0xf]
        %v3771 = vld [vmem:[%s182 + $0x24] sm:$0xf]
        %v3772 = vld [vmem:[%s182 + $0x28] sm:$0xf]
        %v3773 = vld [vmem:[%s182 + $0x2c] sm:$0xf]
        %v3774 = vld [vmem:[%s182 + $0x30] sm:$0xf]
        %v3775 = vld [vmem:[%s182 + $0x34] sm:$0xf]
        %v3776 = vld [vmem:[%s182 + $0x38] sm:$0xf]
        %v3777 = vld [vmem:[%s182 + $0x3c] sm:$0xf]
        %v3778 = vld [vmem:[%s182 + $0x40] sm:$0xf]
        %v3779 = vld [vmem:[%s182 + $0x44] sm:$0xf]
        %v3780 = vld [vmem:[%s182 + $0x48] sm:$0xf]
        %v3781 = vld [vmem:[%s182 + $0x4c] sm:$0xf]
        %v3782 = vld [vmem:[%s182 + $0x50] sm:$0xf]
        %v3783 = vld [vmem:[%s182 + $0x54] sm:$0xf]
        %v3784 = vld [vmem:[%s182 + $0x58] sm:$0xf]
        %v3785 = vld [vmem:[%s182 + $0x5c] sm:$0xf]
        %v3786 = vld [vmem:[%s182 + $0x60] sm:$0xf]
        %v3787 = vld [vmem:[%s182 + $0x64] sm:$0xf]
        %v3788 = vld [vmem:[%s182 + $0x68] sm:$0xf]
        %v3789 = vld [vmem:[%s182 + $0x6c] sm:$0xf]
        %v3790 = vld [vmem:[%s182 + $0x70] sm:$0xf]
        %v3791 = vld [vmem:[%s182 + $0x74] sm:$0xf]
        %v3792 = vld [vmem:[%s182 + $0x78] sm:$0xf]
        %v3793 = vld [vmem:[%s182 + $0x7c] sm:$0xf]
        %v3794 = vld [vmem:[%s182 + $0x80] sm:$0xf]
        %v3795 = vld [vmem:[%s182 + $0x84] sm:$0xf]
        %v3796 = vld [vmem:[%s182 + $0x88] sm:$0xf]
        %v3797 = vld [vmem:[%s182 + $0x8c] sm:$0xf]
        %v3798 = vld [vmem:[%s182 + $0x90] sm:$0xf]
        %v3799 = vld [vmem:[%s182 + $0x94] sm:$0xf]
        %v3800 = vld [vmem:[%s182 + $0x98] sm:$0xf]
        %v3801 = vld [vmem:[%s182 + $0x9c] sm:$0xf]
        %v3802 = vld [vmem:[%s182 + $0xa0] sm:$0xf]
        %v3803 = vld [vmem:[%s182 + $0xa4] sm:$0xf]
        %v3804 = vld [vmem:[%s182 + $0xa8] sm:$0xf]
        %v3805 = vld [vmem:[%s182 + $0xac] sm:$0xf]
        %v3806 = vld [vmem:[%s182 + $0xb0] sm:$0xf]
        %v3807 = vld [vmem:[%s182 + $0xb4] sm:$0xf]
        %v3808 = vld [vmem:[%s182 + $0xb8] sm:$0xf]
        %v3809 = vld [vmem:[%s182 + $0xbc] sm:$0xf]
        %v3810 = vld [vmem:[%s182 + $0xc0] sm:$0xf]
        %v3811 = vld [vmem:[%s182 + $0xc4] sm:$0xf]
        %v3812 = vld [vmem:[%s182 + $0xc8] sm:$0xf]
        %v3813 = vld [vmem:[%s182 + $0xcc] sm:$0xf]
        %v3814 = vld [vmem:[%s182 + $0xd0] sm:$0xf]
        %v3815 = vld [vmem:[%s182 + $0xd4] sm:$0xf]
        %v3816 = vld [vmem:[%s182 + $0xd8] sm:$0xf]
        %v3817 = vld [vmem:[%s182 + $0xdc] sm:$0xf]
        %v3818 = vld [vmem:[%s182 + $0xe0] sm:$0xf]
        %v3819 = vld [vmem:[%s182 + $0xe4] sm:$0xf]
        %v3820 = vld [vmem:[%s182 + $0xe8] sm:$0xf]
        %v3821 = vld [vmem:[%s182 + $0xec] sm:$0xf]
        %v3822 = vld [vmem:[%s182 + $0xf0] sm:$0xf]
        %v3823 = vld [vmem:[%s182 + $0xf4] sm:$0xf]
        %v3824 = vld [vmem:[%s182 + $0xf8] sm:$0xf]
        %v3825 = vld [vmem:[%s182 + $0xfc] sm:$0xf]
        %v3826 = vld [vmem:[%s182 + $0x100] sm:$0xf]
        %v3827 = vld [vmem:[%s182 + $0x104] sm:$0xf]
        %v3828 = vld [vmem:[%s182 + $0x108] sm:$0xf]
        %v3829 = vld [vmem:[%s182 + $0x10c] sm:$0xf]
        %v3830 = vld [vmem:[%s182 + $0x110] sm:$0xf]
        %v3831 = vld [vmem:[%s182 + $0x114] sm:$0xf]
        %v3832 = vld [vmem:[%s182 + $0x118] sm:$0xf]
        %v3833 = vld [vmem:[%s182 + $0x11c] sm:$0xf]
        %s3834 = scalar_lea.vmem %s1, 12
        %v3835 = vld [vmem:[%s3834] sm:$0x3]
        %v3900 = vunpack.c.l.b16 %v3770
        %v3901 = vunpack.c.l.b16 %v3771
        %v3902 = vunpack.c.l.b16 %v3772
        %v3903 = vunpack.c.l.b16 %v3773
        %v3904 = vunpack.c.l.b16 %v3774
        %v3905 = vunpack.c.l.b16 %v3775
        %v3906 = vunpack.c.l.b16 %v3776
        %v3907 = vunpack.c.l.b16 %v3777
        %v3908 = vunpack.c.l.b16 %v3778
        %v3909 = vunpack.c.l.b16 %v3779
        %v3910 = vunpack.c.l.b16 %v3780
        %v3911 = vunpack.c.l.b16 %v3781
        %v3912 = vunpack.c.l.b16 %v3782
        %v3913 = vunpack.c.l.b16 %v3783
        %v3914 = vunpack.c.l.b16 %v3784
        %v3915 = vunpack.c.l.b16 %v3785
        %v3916 = vunpack.c.l.b16 %v3786
        %v3917 = vunpack.c.l.b16 %v3787
        %v3918 = vunpack.c.l.b16 %v3788
        %v3919 = vunpack.c.l.b16 %v3789
        %v3920 = vunpack.c.l.b16 %v3790
        %v3921 = vunpack.c.l.b16 %v3791
        %v3922 = vunpack.c.l.b16 %v3792
        %v3923 = vunpack.c.l.b16 %v3793
        %v3924 = vunpack.c.l.b16 %v3794
        %v3925 = vunpack.c.l.b16 %v3795
        %v3926 = vunpack.c.l.b16 %v3796
        %v3927 = vunpack.c.l.b16 %v3797
        %v3928 = vunpack.c.l.b16 %v3798
        %v3929 = vunpack.c.l.b16 %v3799
        %v3930 = vunpack.c.l.b16 %v3800
        %v3931 = vunpack.c.l.b16 %v3801
        %v3932 = vunpack.c.l.b16 %v3802
        %v3933 = vunpack.c.l.b16 %v3803
        %v3934 = vunpack.c.l.b16 %v3804
        %v3935 = vunpack.c.l.b16 %v3805
        %v3936 = vunpack.c.l.b16 %v3806
        %v3937 = vunpack.c.l.b16 %v3807
        %v3938 = vunpack.c.l.b16 %v3808
        %v3939 = vunpack.c.l.b16 %v3809
        %v3940 = vunpack.c.l.b16 %v3810
        %v3941 = vunpack.c.l.b16 %v3811
        %v3942 = vunpack.c.l.b16 %v3812
        %v3943 = vunpack.c.l.b16 %v3813
        %v3944 = vunpack.c.l.b16 %v3814
        %v3945 = vunpack.c.l.b16 %v3815
        %v3946 = vunpack.c.l.b16 %v3816
        %v3947 = vunpack.c.l.b16 %v3817
        %v3948 = vunpack.c.l.b16 %v3818
        %v3949 = vunpack.c.l.b16 %v3819
        %v3950 = vunpack.c.l.b16 %v3820
        %v3951 = vunpack.c.l.b16 %v3821
        %v3952 = vunpack.c.l.b16 %v3822
        %v3953 = vunpack.c.l.b16 %v3823
        %v3954 = vunpack.c.l.b16 %v3824
        %v3955 = vunpack.c.l.b16 %v3825
        %v3956 = vunpack.c.l.b16 %v3826
        %v3957 = vunpack.c.l.b16 %v3827
        %v3958 = vunpack.c.l.b16 %v3828
        %v3959 = vunpack.c.l.b16 %v3829
        %v3960 = vunpack.c.l.b16 %v3830
        %v3961 = vunpack.c.l.b16 %v3831
        %v3962 = vunpack.c.l.b16 %v3832
        %v3963 = vunpack.c.l.b16 %v3833
        %v3964 = vpack.c.b16 %v3901, %v3900
        %v3965 = vpack.c.b16 %v3903, %v3902
        %v3966 = vpack.c.b16 %v3905, %v3904
        %v3967 = vpack.c.b16 %v3907, %v3906
        %v3968 = vpack.c.b16 %v3909, %v3908
        %v3969 = vpack.c.b16 %v3911, %v3910
        %v3970 = vpack.c.b16 %v3913, %v3912
        %v3971 = vpack.c.b16 %v3915, %v3914
        %v3972 = vpack.c.b16 %v3917, %v3916
        %v3973 = vpack.c.b16 %v3919, %v3918
        %v3974 = vpack.c.b16 %v3921, %v3920
        %v3975 = vpack.c.b16 %v3923, %v3922
        %v3976 = vpack.c.b16 %v3925, %v3924
        %v3977 = vpack.c.b16 %v3927, %v3926
        %v3978 = vpack.c.b16 %v3929, %v3928
        %v3979 = vpack.c.b16 %v3931, %v3930
        %v3980 = vpack.c.b16 %v3933, %v3932
        %v3981 = vpack.c.b16 %v3935, %v3934
        %v3982 = vpack.c.b16 %v3937, %v3936
        %v3983 = vpack.c.b16 %v3939, %v3938
        %v3984 = vpack.c.b16 %v3941, %v3940
        %v3985 = vpack.c.b16 %v3943, %v3942
        %v3986 = vpack.c.b16 %v3945, %v3944
        %v3987 = vpack.c.b16 %v3947, %v3946
        %v3988 = vpack.c.b16 %v3949, %v3948
        %v3989 = vpack.c.b16 %v3951, %v3950
        %v3990 = vpack.c.b16 %v3953, %v3952
        %v3991 = vpack.c.b16 %v3955, %v3954
        %v3992 = vpack.c.b16 %v3957, %v3956
        %v3993 = vpack.c.b16 %v3959, %v3958
        %v3994 = vpack.c.b16 %v3961, %v3960
        %v3995 = vpack.c.b16 %v3963, %v3962
        %v3997 = vsel %vm677, %v3964, 0
        %v4000 = vsel %vm677, %v3965, 0
        %v4003 = vsel %vm677, %v3966, 0
        %v4006 = vsel %vm677, %v3967, 0
        %v4009 = vsel %vm677, %v3968, 0
        %v4012 = vsel %vm677, %v3969, 0
        %v4015 = vsel %vm677, %v3970, 0
        %v4018 = vsel %vm677, %v3971, 0
        %v4021 = vsel %vm677, %v3972, 0
        %v4024 = vsel %vm677, %v3973, 0
        %v4027 = vsel %vm677, %v3974, 0
        %v4030 = vsel %vm677, %v3975, 0
        %v4033 = vsel %vm677, %v3976, 0
        %v4036 = vsel %vm677, %v3977, 0
        %v4039 = vsel %vm677, %v3978, 0
        %v4042 = vsel %vm677, %v3979, 0
        %v4045 = vsel %vm677, %v3980, 0
        %v4048 = vsel %vm677, %v3981, 0
        %v4051 = vsel %vm677, %v3982, 0
        %v4054 = vsel %vm677, %v3983, 0
        %v4057 = vsel %vm677, %v3984, 0
        %v4060 = vsel %vm677, %v3985, 0
        %v4063 = vsel %vm677, %v3986, 0
        %v4066 = vsel %vm677, %v3987, 0
        %v4069 = vsel %vm677, %v3988, 0
        %v4072 = vsel %vm677, %v3989, 0
        %v4075 = vsel %vm677, %v3990, 0
        %v4078 = vsel %vm677, %v3991, 0
        %v4081 = vsel %vm677, %v3992, 0
        %v4084 = vsel %vm677, %v3993, 0
        %v4087 = vsel %vm677, %v3994, 0
        %v4090 = vsel %vm677, %v3995, 0
        %v4093 = vsel %vm774, %v3835, 0
        %4095 = vmatprep.subr.bf16.mxu0 0
        %4096 = vmatpush1.bf16.msra.mxu0 0
        %4097 = vmatprep.subr.bf16.mxu0 0
        %4098 = vmatpush1.bf16.msra.mxu0 0
        %4099 = vmatprep.subr.bf16.mxu0 0
        %4100 = vmatpush1.bf16.msra.mxu0 0
        %4101 = vmatprep.subr.bf16.mxu0 0
        %4102 = vmatpush1.bf16.msra.mxu0 0
        %4103 = vmatprep.subr.bf16.mxu0 0
        %4104 = vmatpush1.bf16.msra.mxu0 0
        %4105 = vmatprep.subr.bf16.mxu0 0
        %4106 = vmatpush1.bf16.msra.mxu0 0
        %4107 = vmatprep.subr.bf16.mxu0 0
        %4108 = vmatpush1.bf16.msra.mxu0 0
        %4109 = vmatprep.subr.bf16.mxu0 0
        %4110 = vmatpush1.bf16.msra.mxu0 %v4093
        %4111 = vmatprep.subr.bf16.mxu0 0
        %4112 = vmatpush2.bf16.msra.mxu0 0
        %4113 = vmatprep.subr.bf16.mxu0 0
        %4114 = vmatpush2.bf16.msra.mxu0 0
        %4115 = vmatprep.subr.bf16.mxu0 0
        %4116 = vmatpush2.bf16.msra.mxu0 0
        %4117 = vmatprep.subr.bf16.mxu0 0
        %4118 = vmatpush2.bf16.msra.mxu0 0
        %4119 = vmatprep.subr.bf16.mxu0 0
        %4120 = vmatpush2.bf16.msra.mxu0 0
        %4121 = vmatprep.subr.bf16.mxu0 0
        %4122 = vmatpush2.bf16.msra.mxu0 0
        %4123 = vmatprep.subr.bf16.mxu0 0
        %4124 = vmatpush2.bf16.msra.mxu0 0
        %4125 = vmatprep.subr.bf16.mxu0 0
        %4126 = vmatpush2.bf16.msra.mxu0 0
        %4127 = vmatprep.mubr.bf16.mxu0 0
        %4128 = vmatmul.mubr.bf16.gmra.mxu0 %v3997
        %v4129 = vpop.f32.mrf.mxu0
        %v4130 = vadd.f32 0.0, %v4129
        %v4131 = vpop.f32.mrf.mxu0
        %v4132 = vpop.f32.mrf.mxu0
        %v4133 = vadd.f32 0.0, %v4132
        %v4134 = vpop.f32.mrf.mxu0
        %4135 = vmatprep.mubr.bf16.mxu0 0
        %4136 = vmatmul.mubr.bf16.gmra.mxu0 %v4000
        %v4137 = vpop.f32.mrf.mxu0
        %v4138 = vpop.f32.mrf.mxu0
        %v4139 = vpop.f32.mrf.mxu0
        %v4140 = vpop.f32.mrf.mxu0
        %4141 = vmatprep.mubr.bf16.mxu0 0
        %4142 = vmatmul.mubr.bf16.gmra.mxu0 %v4003
        %v4143 = vpop.f32.mrf.mxu0
        %v4144 = vadd.f32 0.0, %v4143
        %v4145 = vpop.f32.mrf.mxu0
        %v4146 = vpop.f32.mrf.mxu0
        %v4147 = vadd.f32 0.0, %v4146
        %v4148 = vpop.f32.mrf.mxu0
        %4149 = vmatprep.mubr.bf16.mxu0 0
        %4150 = vmatmul.mubr.bf16.gmra.mxu0 %v4006
        %v4151 = vpop.f32.mrf.mxu0
        %v4152 = vpop.f32.mrf.mxu0
        %v4153 = vpop.f32.mrf.mxu0
        %v4154 = vpop.f32.mrf.mxu0
        %4155 = vmatprep.mubr.bf16.mxu0 0
        %4156 = vmatmul.mubr.bf16.gmra.mxu0 %v4009
        %v4157 = vpop.f32.mrf.mxu0
        %v4158 = vadd.f32 0.0, %v4157
        %v4159 = vpop.f32.mrf.mxu0
        %v4160 = vpop.f32.mrf.mxu0
        %v4161 = vadd.f32 0.0, %v4160
        %v4162 = vpop.f32.mrf.mxu0
        %4163 = vmatprep.mubr.bf16.mxu0 0
        %4164 = vmatmul.mubr.bf16.gmra.mxu0 %v4012
        %v4165 = vpop.f32.mrf.mxu0
        %v4166 = vpop.f32.mrf.mxu0
        %v4167 = vpop.f32.mrf.mxu0
        %v4168 = vpop.f32.mrf.mxu0
        %4169 = vmatprep.mubr.bf16.mxu0 0
        %4170 = vmatmul.mubr.bf16.gmra.mxu0 %v4015
        %v4171 = vpop.f32.mrf.mxu0
        %v4172 = vadd.f32 0.0, %v4171
        %v4173 = vpop.f32.mrf.mxu0
        %v4174 = vpop.f32.mrf.mxu0
        %v4175 = vadd.f32 0.0, %v4174
        %v4176 = vpop.f32.mrf.mxu0
        %4177 = vmatprep.mubr.bf16.mxu0 0
        %4178 = vmatmul.mubr.bf16.gmra.mxu0 %v4018
        %v4179 = vpop.f32.mrf.mxu0
        %v4180 = vpop.f32.mrf.mxu0
        %v4181 = vpop.f32.mrf.mxu0
        %v4182 = vpop.f32.mrf.mxu0
        %4183 = vmatprep.mubr.bf16.mxu0 0
        %4184 = vmatmul.mubr.bf16.gmra.mxu0 %v4021
        %v4185 = vpop.f32.mrf.mxu0
        %v4186 = vadd.f32 0.0, %v4185
        %v4187 = vpop.f32.mrf.mxu0
        %v4188 = vpop.f32.mrf.mxu0
        %v4189 = vadd.f32 0.0, %v4188
        %v4190 = vpop.f32.mrf.mxu0
        %4191 = vmatprep.mubr.bf16.mxu0 0
        %4192 = vmatmul.mubr.bf16.gmra.mxu0 %v4024
        %v4193 = vpop.f32.mrf.mxu0
        %v4194 = vpop.f32.mrf.mxu0
        %v4195 = vpop.f32.mrf.mxu0
        %v4196 = vpop.f32.mrf.mxu0
        %4197 = vmatprep.mubr.bf16.mxu0 0
        %4198 = vmatmul.mubr.bf16.gmra.mxu0 %v4027
        %v4199 = vpop.f32.mrf.mxu0
        %v4200 = vadd.f32 0.0, %v4199
        %v4201 = vpop.f32.mrf.mxu0
        %v4202 = vpop.f32.mrf.mxu0
        %v4203 = vadd.f32 0.0, %v4202
        %v4204 = vpop.f32.mrf.mxu0
        %4205 = vmatprep.mubr.bf16.mxu0 0
        %4206 = vmatmul.mubr.bf16.gmra.mxu0 %v4030
        %v4207 = vpop.f32.mrf.mxu0
        %v4208 = vpop.f32.mrf.mxu0
        %v4209 = vpop.f32.mrf.mxu0
        %v4210 = vpop.f32.mrf.mxu0
        %4211 = vmatprep.mubr.bf16.mxu0 0
        %4212 = vmatmul.mubr.bf16.gmra.mxu0 %v4033
        %v4213 = vpop.f32.mrf.mxu0
        %v4214 = vadd.f32 0.0, %v4213
        %v4215 = vpop.f32.mrf.mxu0
        %v4216 = vpop.f32.mrf.mxu0
        %v4217 = vadd.f32 0.0, %v4216
        %v4218 = vpop.f32.mrf.mxu0
        %4219 = vmatprep.mubr.bf16.mxu0 0
        %4220 = vmatmul.mubr.bf16.gmra.mxu0 %v4036
        %v4221 = vpop.f32.mrf.mxu0
        %v4222 = vpop.f32.mrf.mxu0
        %v4223 = vpop.f32.mrf.mxu0
        %v4224 = vpop.f32.mrf.mxu0
        %4225 = vmatprep.mubr.bf16.mxu0 0
        %4226 = vmatmul.mubr.bf16.gmra.mxu0 %v4039
        %v4227 = vpop.f32.mrf.mxu0
        %v4228 = vadd.f32 0.0, %v4227
        %v4229 = vpop.f32.mrf.mxu0
        %v4230 = vpop.f32.mrf.mxu0
        %v4231 = vadd.f32 0.0, %v4230
        %v4232 = vpop.f32.mrf.mxu0
        %4233 = vmatprep.mubr.bf16.mxu0 0
        %4234 = vmatmul.mubr.bf16.gmra.mxu0 %v4042
        %v4235 = vpop.f32.mrf.mxu0
        %v4236 = vpop.f32.mrf.mxu0
        %v4237 = vpop.f32.mrf.mxu0
        %v4238 = vpop.f32.mrf.mxu0
        %4239 = vmatprep.mubr.bf16.mxu0 0
        %4240 = vmatmul.mubr.bf16.gmra.mxu0 %v4045
        %v4241 = vpop.f32.mrf.mxu0
        %v4242 = vadd.f32 0.0, %v4241
        %v4243 = vpop.f32.mrf.mxu0
        %v4244 = vpop.f32.mrf.mxu0
        %v4245 = vadd.f32 0.0, %v4244
        %v4246 = vpop.f32.mrf.mxu0
        %4247 = vmatprep.mubr.bf16.mxu0 0
        %4248 = vmatmul.mubr.bf16.gmra.mxu0 %v4048
        %v4249 = vpop.f32.mrf.mxu0
        %v4250 = vpop.f32.mrf.mxu0
        %v4251 = vpop.f32.mrf.mxu0
        %v4252 = vpop.f32.mrf.mxu0
        %4253 = vmatprep.mubr.bf16.mxu0 0
        %4254 = vmatmul.mubr.bf16.gmra.mxu0 %v4051
        %v4255 = vpop.f32.mrf.mxu0
        %v4256 = vadd.f32 0.0, %v4255
        %v4257 = vpop.f32.mrf.mxu0
        %v4258 = vpop.f32.mrf.mxu0
        %v4259 = vadd.f32 0.0, %v4258
        %v4260 = vpop.f32.mrf.mxu0
        %4261 = vmatprep.mubr.bf16.mxu0 0
        %4262 = vmatmul.mubr.bf16.gmra.mxu0 %v4054
        %v4263 = vpop.f32.mrf.mxu0
        %v4264 = vpop.f32.mrf.mxu0
        %v4265 = vpop.f32.mrf.mxu0
        %v4266 = vpop.f32.mrf.mxu0
        %4267 = vmatprep.mubr.bf16.mxu0 0
        %4268 = vmatmul.mubr.bf16.gmra.mxu0 %v4057
        %v4269 = vpop.f32.mrf.mxu0
        %v4270 = vadd.f32 0.0, %v4269
        %v4271 = vpop.f32.mrf.mxu0
        %v4272 = vpop.f32.mrf.mxu0
        %v4273 = vadd.f32 0.0, %v4272
        %v4274 = vpop.f32.mrf.mxu0
        %4275 = vmatprep.mubr.bf16.mxu0 0
        %4276 = vmatmul.mubr.bf16.gmra.mxu0 %v4060
        %v4277 = vpop.f32.mrf.mxu0
        %v4278 = vpop.f32.mrf.mxu0
        %v4279 = vpop.f32.mrf.mxu0
        %v4280 = vpop.f32.mrf.mxu0
        %4281 = vmatprep.mubr.bf16.mxu0 0
        %4282 = vmatmul.mubr.bf16.gmra.mxu0 %v4063
        %v4283 = vpop.f32.mrf.mxu0
        %v4284 = vadd.f32 0.0, %v4283
        %v4285 = vpop.f32.mrf.mxu0
        %v4286 = vpop.f32.mrf.mxu0
        %v4287 = vadd.f32 0.0, %v4286
        %v4288 = vpop.f32.mrf.mxu0
        %4289 = vmatprep.mubr.bf16.mxu0 0
        %4290 = vmatmul.mubr.bf16.gmra.mxu0 %v4066
        %v4291 = vpop.f32.mrf.mxu0
        %v4292 = vpop.f32.mrf.mxu0
        %v4293 = vpop.f32.mrf.mxu0
        %v4294 = vpop.f32.mrf.mxu0
        %4295 = vmatprep.mubr.bf16.mxu0 0
        %4296 = vmatmul.mubr.bf16.gmra.mxu0 %v4069
        %v4297 = vpop.f32.mrf.mxu0
        %v4298 = vadd.f32 0.0, %v4297
        %v4299 = vpop.f32.mrf.mxu0
        %v4300 = vpop.f32.mrf.mxu0
        %v4301 = vadd.f32 0.0, %v4300
        %v4302 = vpop.f32.mrf.mxu0
        %4303 = vmatprep.mubr.bf16.mxu0 0
        %4304 = vmatmul.mubr.bf16.gmra.mxu0 %v4072
        %v4305 = vpop.f32.mrf.mxu0
        %v4306 = vpop.f32.mrf.mxu0
        %v4307 = vpop.f32.mrf.mxu0
        %v4308 = vpop.f32.mrf.mxu0
        %4309 = vmatprep.mubr.bf16.mxu0 0
        %4310 = vmatmul.mubr.bf16.gmra.mxu0 %v4075
        %v4311 = vpop.f32.mrf.mxu0
        %v4312 = vadd.f32 0.0, %v4311
        %v4313 = vpop.f32.mrf.mxu0
        %v4314 = vpop.f32.mrf.mxu0
        %v4315 = vadd.f32 0.0, %v4314
        %v4316 = vpop.f32.mrf.mxu0
        %4317 = vmatprep.mubr.bf16.mxu0 0
        %4318 = vmatmul.mubr.bf16.gmra.mxu0 %v4078
        %v4319 = vpop.f32.mrf.mxu0
        %v4320 = vpop.f32.mrf.mxu0
        %v4321 = vpop.f32.mrf.mxu0
        %v4322 = vpop.f32.mrf.mxu0
        %4323 = vmatprep.mubr.bf16.mxu0 0
        %4324 = vmatmul.mubr.bf16.gmra.mxu0 %v4081
        %v4325 = vpop.f32.mrf.mxu0
        %v4326 = vadd.f32 0.0, %v4325
        %v4327 = vpop.f32.mrf.mxu0
        %v4328 = vpop.f32.mrf.mxu0
        %v4329 = vadd.f32 0.0, %v4328
        %v4330 = vpop.f32.mrf.mxu0
        %4331 = vmatprep.mubr.bf16.mxu0 0
        %4332 = vmatmul.mubr.bf16.gmra.mxu0 %v4084
        %v4333 = vpop.f32.mrf.mxu0
        %v4334 = vpop.f32.mrf.mxu0
        %v4335 = vpop.f32.mrf.mxu0
        %v4336 = vpop.f32.mrf.mxu0
        %4337 = vmatprep.mubr.bf16.mxu0 0
        %4338 = vmatmul.mubr.bf16.gmra.mxu0 %v4087
        %v4339 = vpop.f32.mrf.mxu0
        %v4340 = vadd.f32 0.0, %v4339
        %v4341 = vpop.f32.mrf.mxu0
        %v4342 = vpop.f32.mrf.mxu0
        %v4343 = vadd.f32 0.0, %v4342
        %v4344 = vpop.f32.mrf.mxu0
        %4345 = vmatprep.mubr.bf16.mxu0 0
        %4346 = vmatmul.mubr.bf16.gmra.mxu0 %v4090
        %v4347 = vpop.f32.mrf.mxu0
        %v4348 = vpop.f32.mrf.mxu0
        %v4349 = vpop.f32.mrf.mxu0
        %v4350 = vpop.f32.mrf.mxu0
        %4351 = vdwg.mxu0
        %v4352 = vadd.f32 %v3738, %v4130
        %v4353 = vadd.f32 %v3739, %v4133
        %v4354 = vadd.f32 %v3740, %v4144
        %v4355 = vadd.f32 %v3741, %v4147
        %v4356 = vadd.f32 %v3742, %v4158
        %v4357 = vadd.f32 %v3743, %v4161
        %v4358 = vadd.f32 %v3744, %v4172
        %v4359 = vadd.f32 %v3745, %v4175
        %v4360 = vadd.f32 %v3746, %v4186
        %v4361 = vadd.f32 %v3747, %v4189
        %v4362 = vadd.f32 %v3748, %v4200
        %v4363 = vadd.f32 %v3749, %v4203
        %v4364 = vadd.f32 %v3750, %v4214
        %v4365 = vadd.f32 %v3751, %v4217
        %v4366 = vadd.f32 %v3752, %v4228
        %v4367 = vadd.f32 %v3753, %v4231
        %v4368 = vadd.f32 %v3754, %v4242
        %v4369 = vadd.f32 %v3755, %v4245
        %v4370 = vadd.f32 %v3756, %v4256
        %v4371 = vadd.f32 %v3757, %v4259
        %v4372 = vadd.f32 %v3758, %v4270
        %v4373 = vadd.f32 %v3759, %v4273
        %v4374 = vadd.f32 %v3760, %v4284
        %v4375 = vadd.f32 %v3761, %v4287
        %v4376 = vadd.f32 %v3762, %v4298
        %v4377 = vadd.f32 %v3763, %v4301
        %v4378 = vadd.f32 %v3764, %v4312
        %v4379 = vadd.f32 %v3765, %v4315
        %v4380 = vadd.f32 %v3766, %v4326
        %v4381 = vadd.f32 %v3767, %v4329
        %v4382 = vadd.f32 %v3768, %v4340
        %v4383 = vadd.f32 %v3769, %v4343
        %v4384 = vld [vmem:[%s182 + $0x20] sm:$0xf]
        %v4385 = vld [vmem:[%s182 + $0x24] sm:$0xf]
        %v4386 = vld [vmem:[%s182 + $0x28] sm:$0xf]
        %v4387 = vld [vmem:[%s182 + $0x2c] sm:$0xf]
        %v4388 = vld [vmem:[%s182 + $0x30] sm:$0xf]
        %v4389 = vld [vmem:[%s182 + $0x34] sm:$0xf]
        %v4390 = vld [vmem:[%s182 + $0x38] sm:$0xf]
        %v4391 = vld [vmem:[%s182 + $0x3c] sm:$0xf]
        %v4392 = vld [vmem:[%s182 + $0x40] sm:$0xf]
        %v4393 = vld [vmem:[%s182 + $0x44] sm:$0xf]
        %v4394 = vld [vmem:[%s182 + $0x48] sm:$0xf]
        %v4395 = vld [vmem:[%s182 + $0x4c] sm:$0xf]
        %v4396 = vld [vmem:[%s182 + $0x50] sm:$0xf]
        %v4397 = vld [vmem:[%s182 + $0x54] sm:$0xf]
        %v4398 = vld [vmem:[%s182 + $0x58] sm:$0xf]
        %v4399 = vld [vmem:[%s182 + $0x5c] sm:$0xf]
        %v4400 = vld [vmem:[%s182 + $0x60] sm:$0xf]
        %v4401 = vld [vmem:[%s182 + $0x64] sm:$0xf]
        %v4402 = vld [vmem:[%s182 + $0x68] sm:$0xf]
        %v4403 = vld [vmem:[%s182 + $0x6c] sm:$0xf]
        %v4404 = vld [vmem:[%s182 + $0x70] sm:$0xf]
        %v4405 = vld [vmem:[%s182 + $0x74] sm:$0xf]
        %v4406 = vld [vmem:[%s182 + $0x78] sm:$0xf]
        %v4407 = vld [vmem:[%s182 + $0x7c] sm:$0xf]
        %v4408 = vld [vmem:[%s182 + $0x80] sm:$0xf]
        %v4409 = vld [vmem:[%s182 + $0x84] sm:$0xf]
        %v4410 = vld [vmem:[%s182 + $0x88] sm:$0xf]
        %v4411 = vld [vmem:[%s182 + $0x8c] sm:$0xf]
        %v4412 = vld [vmem:[%s182 + $0x90] sm:$0xf]
        %v4413 = vld [vmem:[%s182 + $0x94] sm:$0xf]
        %v4414 = vld [vmem:[%s182 + $0x98] sm:$0xf]
        %v4415 = vld [vmem:[%s182 + $0x9c] sm:$0xf]
        %v4416 = vld [vmem:[%s182 + $0xa0] sm:$0xf]
        %v4417 = vld [vmem:[%s182 + $0xa4] sm:$0xf]
        %v4418 = vld [vmem:[%s182 + $0xa8] sm:$0xf]
        %v4419 = vld [vmem:[%s182 + $0xac] sm:$0xf]
        %v4420 = vld [vmem:[%s182 + $0xb0] sm:$0xf]
        %v4421 = vld [vmem:[%s182 + $0xb4] sm:$0xf]
        %v4422 = vld [vmem:[%s182 + $0xb8] sm:$0xf]
        %v4423 = vld [vmem:[%s182 + $0xbc] sm:$0xf]
        %v4424 = vld [vmem:[%s182 + $0xc0] sm:$0xf]
        %v4425 = vld [vmem:[%s182 + $0xc4] sm:$0xf]
        %v4426 = vld [vmem:[%s182 + $0xc8] sm:$0xf]
        %v4427 = vld [vmem:[%s182 + $0xcc] sm:$0xf]
        %v4428 = vld [vmem:[%s182 + $0xd0] sm:$0xf]
        %v4429 = vld [vmem:[%s182 + $0xd4] sm:$0xf]
        %v4430 = vld [vmem:[%s182 + $0xd8] sm:$0xf]
        %v4431 = vld [vmem:[%s182 + $0xdc] sm:$0xf]
        %v4432 = vld [vmem:[%s182 + $0xe0] sm:$0xf]
        %v4433 = vld [vmem:[%s182 + $0xe4] sm:$0xf]
        %v4434 = vld [vmem:[%s182 + $0xe8] sm:$0xf]
        %v4435 = vld [vmem:[%s182 + $0xec] sm:$0xf]
        %v4436 = vld [vmem:[%s182 + $0xf0] sm:$0xf]
        %v4437 = vld [vmem:[%s182 + $0xf4] sm:$0xf]
        %v4438 = vld [vmem:[%s182 + $0xf8] sm:$0xf]
        %v4439 = vld [vmem:[%s182 + $0xfc] sm:$0xf]
        %v4440 = vld [vmem:[%s182 + $0x100] sm:$0xf]
        %v4441 = vld [vmem:[%s182 + $0x104] sm:$0xf]
        %v4442 = vld [vmem:[%s182 + $0x108] sm:$0xf]
        %v4443 = vld [vmem:[%s182 + $0x10c] sm:$0xf]
        %v4444 = vld [vmem:[%s182 + $0x110] sm:$0xf]
        %v4445 = vld [vmem:[%s182 + $0x114] sm:$0xf]
        %v4446 = vld [vmem:[%s182 + $0x118] sm:$0xf]
        %v4447 = vld [vmem:[%s182 + $0x11c] sm:$0xf]
        %v4448 = vld [vmem:[%s182 + $0x120] sm:$0x1]
        %s4449 = scalar_lea.vmem %s1, 14
        %v4450 = vld [vmem:[%s4449] sm:$0x3]
        %v4516 = vunpack.c.l.b16 %v4384
        %v4517 = vunpack.c.l.b16 %v4385
        %v4518 = vunpack.c.l.b16 %v4386
        %v4519 = vunpack.c.l.b16 %v4387
        %v4520 = vunpack.c.l.b16 %v4388
        %v4521 = vunpack.c.l.b16 %v4389
        %v4522 = vunpack.c.l.b16 %v4390
        %v4523 = vunpack.c.l.b16 %v4391
        %v4524 = vunpack.c.l.b16 %v4392
        %v4525 = vunpack.c.l.b16 %v4393
        %v4526 = vunpack.c.l.b16 %v4394
        %v4527 = vunpack.c.l.b16 %v4395
        %v4528 = vunpack.c.l.b16 %v4396
        %v4529 = vunpack.c.l.b16 %v4397
        %v4530 = vunpack.c.l.b16 %v4398
        %v4531 = vunpack.c.l.b16 %v4399
        %v4532 = vunpack.c.l.b16 %v4400
        %v4533 = vunpack.c.l.b16 %v4401
        %v4534 = vunpack.c.l.b16 %v4402
        %v4535 = vunpack.c.l.b16 %v4403
        %v4536 = vunpack.c.l.b16 %v4404
        %v4537 = vunpack.c.l.b16 %v4405
        %v4538 = vunpack.c.l.b16 %v4406
        %v4539 = vunpack.c.l.b16 %v4407
        %v4540 = vunpack.c.l.b16 %v4408
        %v4541 = vunpack.c.l.b16 %v4409
        %v4542 = vunpack.c.l.b16 %v4410
        %v4543 = vunpack.c.l.b16 %v4411
        %v4544 = vunpack.c.l.b16 %v4412
        %v4545 = vunpack.c.l.b16 %v4413
        %v4546 = vunpack.c.l.b16 %v4414
        %v4547 = vunpack.c.l.b16 %v4415
        %v4548 = vunpack.c.l.b16 %v4416
        %v4549 = vunpack.c.l.b16 %v4417
        %v4550 = vunpack.c.l.b16 %v4418
        %v4551 = vunpack.c.l.b16 %v4419
        %v4552 = vunpack.c.l.b16 %v4420
        %v4553 = vunpack.c.l.b16 %v4421
        %v4554 = vunpack.c.l.b16 %v4422
        %v4555 = vunpack.c.l.b16 %v4423
        %v4556 = vunpack.c.l.b16 %v4424
        %v4557 = vunpack.c.l.b16 %v4425
        %v4558 = vunpack.c.l.b16 %v4426
        %v4559 = vunpack.c.l.b16 %v4427
        %v4560 = vunpack.c.l.b16 %v4428
        %v4561 = vunpack.c.l.b16 %v4429
        %v4562 = vunpack.c.l.b16 %v4430
        %v4563 = vunpack.c.l.b16 %v4431
        %v4564 = vunpack.c.l.b16 %v4432
        %v4565 = vunpack.c.l.b16 %v4433
        %v4566 = vunpack.c.l.b16 %v4434
        %v4567 = vunpack.c.l.b16 %v4435
        %v4568 = vunpack.c.l.b16 %v4436
        %v4569 = vunpack.c.l.b16 %v4437
        %v4570 = vunpack.c.l.b16 %v4438
        %v4571 = vunpack.c.l.b16 %v4439
        %v4572 = vunpack.c.l.b16 %v4440
        %v4573 = vunpack.c.l.b16 %v4441
        %v4574 = vunpack.c.l.b16 %v4442
        %v4575 = vunpack.c.l.b16 %v4443
        %v4576 = vunpack.c.l.b16 %v4444
        %v4577 = vunpack.c.l.b16 %v4445
        %v4578 = vunpack.c.l.b16 %v4446
        %v4579 = vunpack.c.l.b16 %v4447
        %v4580 = vunpack.c.l.b16 %v4448
        %v4581 = vpack.c.b16 %v4517, %v4516
        %v4582 = vpack.c.b16 %v4519, %v4518
        %v4583 = vpack.c.b16 %v4521, %v4520
        %v4584 = vpack.c.b16 %v4523, %v4522
        %v4585 = vpack.c.b16 %v4525, %v4524
        %v4586 = vpack.c.b16 %v4527, %v4526
        %v4587 = vpack.c.b16 %v4529, %v4528
        %v4588 = vpack.c.b16 %v4531, %v4530
        %v4589 = vpack.c.b16 %v4533, %v4532
        %v4590 = vpack.c.b16 %v4535, %v4534
        %v4591 = vpack.c.b16 %v4537, %v4536
        %v4592 = vpack.c.b16 %v4539, %v4538
        %v4593 = vpack.c.b16 %v4541, %v4540
        %v4594 = vpack.c.b16 %v4543, %v4542
        %v4595 = vpack.c.b16 %v4545, %v4544
        %v4596 = vpack.c.b16 %v4547, %v4546
        %v4597 = vpack.c.b16 %v4549, %v4548
        %v4598 = vpack.c.b16 %v4551, %v4550
        %v4599 = vpack.c.b16 %v4553, %v4552
        %v4600 = vpack.c.b16 %v4555, %v4554
        %v4601 = vpack.c.b16 %v4557, %v4556
        %v4602 = vpack.c.b16 %v4559, %v4558
        %v4603 = vpack.c.b16 %v4561, %v4560
        %v4604 = vpack.c.b16 %v4563, %v4562
        %v4605 = vpack.c.b16 %v4565, %v4564
        %v4606 = vpack.c.b16 %v4567, %v4566
        %v4607 = vpack.c.b16 %v4569, %v4568
        %v4608 = vpack.c.b16 %v4571, %v4570
        %v4609 = vpack.c.b16 %v4573, %v4572
        %v4610 = vpack.c.b16 %v4575, %v4574
        %v4611 = vpack.c.b16 %v4577, %v4576
        %v4612 = vpack.c.b16 %v4579, %v4578
        %v4613 = vpack.c.b16 %v4580, %v4580
        %v4615 = vshrl.u32 %v4581, 16
        %v4617 = vshll.u32 %v4581, 16
        %v4619 = vrot.slane %v4617, 1
        %v4620 = vor.u32 %v4615, %v4619
        %v4622 = vshll.u32 %v4582, 16
        %v4624 = vrot.slane %v4622, 1
        %v4625 = vsel %vm416, %v4620, %v4624
        %v4626 = vshrl.u32 %v4582, 16
        %v4628 = vor.u32 %v4626, %v4624
        %v4630 = vshll.u32 %v4583, 16
        %v4632 = vrot.slane %v4630, 1
        %v4633 = vsel %vm416, %v4628, %v4632
        %v4634 = vshrl.u32 %v4583, 16
        %v4636 = vor.u32 %v4634, %v4632
        %v4638 = vshll.u32 %v4584, 16
        %v4640 = vrot.slane %v4638, 1
        %v4641 = vsel %vm416, %v4636, %v4640
        %v4642 = vshrl.u32 %v4584, 16
        %v4644 = vor.u32 %v4642, %v4640
        %v4646 = vshll.u32 %v4585, 16
        %v4648 = vrot.slane %v4646, 1
        %v4649 = vsel %vm416, %v4644, %v4648
        %v4650 = vshrl.u32 %v4585, 16
        %v4652 = vor.u32 %v4650, %v4648
        %v4654 = vshll.u32 %v4586, 16
        %v4656 = vrot.slane %v4654, 1
        %v4657 = vsel %vm416, %v4652, %v4656
        %v4658 = vshrl.u32 %v4586, 16
        %v4660 = vor.u32 %v4658, %v4656
        %v4662 = vshll.u32 %v4587, 16
        %v4664 = vrot.slane %v4662, 1
        %v4665 = vsel %vm416, %v4660, %v4664
        %v4666 = vshrl.u32 %v4587, 16
        %v4668 = vor.u32 %v4666, %v4664
        %v4670 = vshll.u32 %v4588, 16
        %v4672 = vrot.slane %v4670, 1
        %v4673 = vsel %vm416, %v4668, %v4672
        %v4674 = vshrl.u32 %v4588, 16
        %v4676 = vor.u32 %v4674, %v4672
        %v4678 = vshll.u32 %v4589, 16
        %v4680 = vrot.slane %v4678, 1
        %v4681 = vsel %vm416, %v4676, %v4680
        %v4682 = vshrl.u32 %v4589, 16
        %v4684 = vor.u32 %v4682, %v4680
        %v4686 = vshll.u32 %v4590, 16
        %v4688 = vrot.slane %v4686, 1
        %v4689 = vsel %vm416, %v4684, %v4688
        %v4690 = vshrl.u32 %v4590, 16
        %v4692 = vor.u32 %v4690, %v4688
        %v4694 = vshll.u32 %v4591, 16
        %v4696 = vrot.slane %v4694, 1
        %v4697 = vsel %vm416, %v4692, %v4696
        %v4698 = vshrl.u32 %v4591, 16
        %v4700 = vor.u32 %v4698, %v4696
        %v4702 = vshll.u32 %v4592, 16
        %v4704 = vrot.slane %v4702, 1
        %v4705 = vsel %vm416, %v4700, %v4704
        %v4706 = vshrl.u32 %v4592, 16
        %v4708 = vor.u32 %v4706, %v4704
        %v4710 = vshll.u32 %v4593, 16
        %v4712 = vrot.slane %v4710, 1
        %v4713 = vsel %vm416, %v4708, %v4712
        %v4714 = vshrl.u32 %v4593, 16
        %v4716 = vor.u32 %v4714, %v4712
        %v4718 = vshll.u32 %v4594, 16
        %v4720 = vrot.slane %v4718, 1
        %v4721 = vsel %vm416, %v4716, %v4720
        %v4722 = vshrl.u32 %v4594, 16
        %v4724 = vor.u32 %v4722, %v4720
        %v4726 = vshll.u32 %v4595, 16
        %v4728 = vrot.slane %v4726, 1
        %v4729 = vsel %vm416, %v4724, %v4728
        %v4730 = vshrl.u32 %v4595, 16
        %v4732 = vor.u32 %v4730, %v4728
        %v4734 = vshll.u32 %v4596, 16
        %v4736 = vrot.slane %v4734, 1
        %v4737 = vsel %vm416, %v4732, %v4736
        %v4738 = vshrl.u32 %v4596, 16
        %v4740 = vor.u32 %v4738, %v4736
        %v4742 = vshll.u32 %v4597, 16
        %v4744 = vrot.slane %v4742, 1
        %v4745 = vsel %vm416, %v4740, %v4744
        %v4746 = vshrl.u32 %v4597, 16
        %v4748 = vor.u32 %v4746, %v4744
        %v4750 = vshll.u32 %v4598, 16
        %v4752 = vrot.slane %v4750, 1
        %v4753 = vsel %vm416, %v4748, %v4752
        %v4754 = vshrl.u32 %v4598, 16
        %v4756 = vor.u32 %v4754, %v4752
        %v4758 = vshll.u32 %v4599, 16
        %v4760 = vrot.slane %v4758, 1
        %v4761 = vsel %vm416, %v4756, %v4760
        %v4762 = vshrl.u32 %v4599, 16
        %v4764 = vor.u32 %v4762, %v4760
        %v4766 = vshll.u32 %v4600, 16
        %v4768 = vrot.slane %v4766, 1
        %v4769 = vsel %vm416, %v4764, %v4768
        %v4770 = vshrl.u32 %v4600, 16
        %v4772 = vor.u32 %v4770, %v4768
        %v4774 = vshll.u32 %v4601, 16
        %v4776 = vrot.slane %v4774, 1
        %v4777 = vsel %vm416, %v4772, %v4776
        %v4778 = vshrl.u32 %v4601, 16
        %v4780 = vor.u32 %v4778, %v4776
        %v4782 = vshll.u32 %v4602, 16
        %v4784 = vrot.slane %v4782, 1
        %v4785 = vsel %vm416, %v4780, %v4784
        %v4786 = vshrl.u32 %v4602, 16
        %v4788 = vor.u32 %v4786, %v4784
        %v4790 = vshll.u32 %v4603, 16
        %v4792 = vrot.slane %v4790, 1
        %v4793 = vsel %vm416, %v4788, %v4792
        %v4794 = vshrl.u32 %v4603, 16
        %v4796 = vor.u32 %v4794, %v4792
        %v4798 = vshll.u32 %v4604, 16
        %v4800 = vrot.slane %v4798, 1
        %v4801 = vsel %vm416, %v4796, %v4800
        %v4802 = vshrl.u32 %v4604, 16
        %v4804 = vor.u32 %v4802, %v4800
        %v4806 = vshll.u32 %v4605, 16
        %v4808 = vrot.slane %v4806, 1
        %v4809 = vsel %vm416, %v4804, %v4808
        %v4810 = vshrl.u32 %v4605, 16
        %v4812 = vor.u32 %v4810, %v4808
        %v4814 = vshll.u32 %v4606, 16
        %v4816 = vrot.slane %v4814, 1
        %v4817 = vsel %vm416, %v4812, %v4816
        %v4818 = vshrl.u32 %v4606, 16
        %v4820 = vor.u32 %v4818, %v4816
        %v4822 = vshll.u32 %v4607, 16
        %v4824 = vrot.slane %v4822, 1
        %v4825 = vsel %vm416, %v4820, %v4824
        %v4826 = vshrl.u32 %v4607, 16
        %v4828 = vor.u32 %v4826, %v4824
        %v4830 = vshll.u32 %v4608, 16
        %v4832 = vrot.slane %v4830, 1
        %v4833 = vsel %vm416, %v4828, %v4832
        %v4834 = vshrl.u32 %v4608, 16
        %v4836 = vor.u32 %v4834, %v4832
        %v4838 = vshll.u32 %v4609, 16
        %v4840 = vrot.slane %v4838, 1
        %v4841 = vsel %vm416, %v4836, %v4840
        %v4842 = vshrl.u32 %v4609, 16
        %v4844 = vor.u32 %v4842, %v4840
        %v4846 = vshll.u32 %v4610, 16
        %v4848 = vrot.slane %v4846, 1
        %v4849 = vsel %vm416, %v4844, %v4848
        %v4850 = vshrl.u32 %v4610, 16
        %v4852 = vor.u32 %v4850, %v4848
        %v4854 = vshll.u32 %v4611, 16
        %v4856 = vrot.slane %v4854, 1
        %v4857 = vsel %vm416, %v4852, %v4856
        %v4858 = vshrl.u32 %v4611, 16
        %v4860 = vor.u32 %v4858, %v4856
        %v4862 = vshll.u32 %v4612, 16
        %v4864 = vrot.slane %v4862, 1
        %v4865 = vsel %vm416, %v4860, %v4864
        %v4866 = vshrl.u32 %v4612, 16
        %v4868 = vor.u32 %v4866, %v4864
        %v4870 = vshll.u32 %v4613, 16
        %v4872 = vrot.slane %v4870, 1
        %v4873 = vsel %vm416, %v4868, %v4872
        %v4875 = vsel %vm677, %v4625, 0
        %v4878 = vsel %vm677, %v4633, 0
        %v4881 = vsel %vm677, %v4641, 0
        %v4884 = vsel %vm677, %v4649, 0
        %v4887 = vsel %vm677, %v4657, 0
        %v4890 = vsel %vm677, %v4665, 0
        %v4893 = vsel %vm677, %v4673, 0
        %v4896 = vsel %vm677, %v4681, 0
        %v4899 = vsel %vm677, %v4689, 0
        %v4902 = vsel %vm677, %v4697, 0
        %v4905 = vsel %vm677, %v4705, 0
        %v4908 = vsel %vm677, %v4713, 0
        %v4911 = vsel %vm677, %v4721, 0
        %v4914 = vsel %vm677, %v4729, 0
        %v4917 = vsel %vm677, %v4737, 0
        %v4920 = vsel %vm677, %v4745, 0
        %v4923 = vsel %vm677, %v4753, 0
        %v4926 = vsel %vm677, %v4761, 0
        %v4929 = vsel %vm677, %v4769, 0
        %v4932 = vsel %vm677, %v4777, 0
        %v4935 = vsel %vm677, %v4785, 0
        %v4938 = vsel %vm677, %v4793, 0
        %v4941 = vsel %vm677, %v4801, 0
        %v4944 = vsel %vm677, %v4809, 0
        %v4947 = vsel %vm677, %v4817, 0
        %v4950 = vsel %vm677, %v4825, 0
        %v4953 = vsel %vm677, %v4833, 0
        %v4956 = vsel %vm677, %v4841, 0
        %v4959 = vsel %vm677, %v4849, 0
        %v4962 = vsel %vm677, %v4857, 0
        %v4965 = vsel %vm677, %v4865, 0
        %v4968 = vsel %vm677, %v4873, 0
        %v4971 = vsel %vm774, %v4450, 0
        %4973 = vmatprep.subr.bf16.mxu0 0
        %4974 = vmatpush1.bf16.msra.mxu0 0
        %4975 = vmatprep.subr.bf16.mxu0 0
        %4976 = vmatpush1.bf16.msra.mxu0 0
        %4977 = vmatprep.subr.bf16.mxu0 0
        %4978 = vmatpush1.bf16.msra.mxu0 0
        %4979 = vmatprep.subr.bf16.mxu0 0
        %4980 = vmatpush1.bf16.msra.mxu0 0
        %4981 = vmatprep.subr.bf16.mxu0 0
        %4982 = vmatpush1.bf16.msra.mxu0 0
        %4983 = vmatprep.subr.bf16.mxu0 0
        %4984 = vmatpush1.bf16.msra.mxu0 0
        %4985 = vmatprep.subr.bf16.mxu0 0
        %4986 = vmatpush1.bf16.msra.mxu0 0
        %4987 = vmatprep.subr.bf16.mxu0 0
        %4988 = vmatpush1.bf16.msra.mxu0 %v4971
        %4989 = vmatprep.subr.bf16.mxu0 0
        %4990 = vmatpush2.bf16.msra.mxu0 0
        %4991 = vmatprep.subr.bf16.mxu0 0
        %4992 = vmatpush2.bf16.msra.mxu0 0
        %4993 = vmatprep.subr.bf16.mxu0 0
        %4994 = vmatpush2.bf16.msra.mxu0 0
        %4995 = vmatprep.subr.bf16.mxu0 0
        %4996 = vmatpush2.bf16.msra.mxu0 0
        %4997 = vmatprep.subr.bf16.mxu0 0
        %4998 = vmatpush2.bf16.msra.mxu0 0
        %4999 = vmatprep.subr.bf16.mxu0 0
        %5000 = vmatpush2.bf16.msra.mxu0 0
        %5001 = vmatprep.subr.bf16.mxu0 0
        %5002 = vmatpush2.bf16.msra.mxu0 0
        %5003 = vmatprep.subr.bf16.mxu0 0
        %5004 = vmatpush2.bf16.msra.mxu0 0
        %5005 = vmatprep.mubr.bf16.mxu0 0
        %5006 = vmatmul.mubr.bf16.gmra.mxu0 %v4875
        %v5007 = vpop.f32.mrf.mxu0
        %v5008 = vadd.f32 0.0, %v5007
        %v5009 = vpop.f32.mrf.mxu0
        %v5010 = vpop.f32.mrf.mxu0
        %v5011 = vadd.f32 0.0, %v5010
        %v5012 = vpop.f32.mrf.mxu0
        %5013 = vmatprep.mubr.bf16.mxu0 0
        %5014 = vmatmul.mubr.bf16.gmra.mxu0 %v4878
        %v5015 = vpop.f32.mrf.mxu0
        %v5016 = vpop.f32.mrf.mxu0
        %v5017 = vpop.f32.mrf.mxu0
        %v5018 = vpop.f32.mrf.mxu0
        %5019 = vmatprep.mubr.bf16.mxu0 0
        %5020 = vmatmul.mubr.bf16.gmra.mxu0 %v4881
        %v5021 = vpop.f32.mrf.mxu0
        %v5022 = vadd.f32 0.0, %v5021
        %v5023 = vpop.f32.mrf.mxu0
        %v5024 = vpop.f32.mrf.mxu0
        %v5025 = vadd.f32 0.0, %v5024
        %v5026 = vpop.f32.mrf.mxu0
        %5027 = vmatprep.mubr.bf16.mxu0 0
        %5028 = vmatmul.mubr.bf16.gmra.mxu0 %v4884
        %v5029 = vpop.f32.mrf.mxu0
        %v5030 = vpop.f32.mrf.mxu0
        %v5031 = vpop.f32.mrf.mxu0
        %v5032 = vpop.f32.mrf.mxu0
        %5033 = vmatprep.mubr.bf16.mxu0 0
        %5034 = vmatmul.mubr.bf16.gmra.mxu0 %v4887
        %v5035 = vpop.f32.mrf.mxu0
        %v5036 = vadd.f32 0.0, %v5035
        %v5037 = vpop.f32.mrf.mxu0
        %v5038 = vpop.f32.mrf.mxu0
        %v5039 = vadd.f32 0.0, %v5038
        %v5040 = vpop.f32.mrf.mxu0
        %5041 = vmatprep.mubr.bf16.mxu0 0
        %5042 = vmatmul.mubr.bf16.gmra.mxu0 %v4890
        %v5043 = vpop.f32.mrf.mxu0
        %v5044 = vpop.f32.mrf.mxu0
        %v5045 = vpop.f32.mrf.mxu0
        %v5046 = vpop.f32.mrf.mxu0
        %5047 = vmatprep.mubr.bf16.mxu0 0
        %5048 = vmatmul.mubr.bf16.gmra.mxu0 %v4893
        %v5049 = vpop.f32.mrf.mxu0
        %v5050 = vadd.f32 0.0, %v5049
        %v5051 = vpop.f32.mrf.mxu0
        %v5052 = vpop.f32.mrf.mxu0
        %v5053 = vadd.f32 0.0, %v5052
        %v5054 = vpop.f32.mrf.mxu0
        %5055 = vmatprep.mubr.bf16.mxu0 0
        %5056 = vmatmul.mubr.bf16.gmra.mxu0 %v4896
        %v5057 = vpop.f32.mrf.mxu0
        %v5058 = vpop.f32.mrf.mxu0
        %v5059 = vpop.f32.mrf.mxu0
        %v5060 = vpop.f32.mrf.mxu0
        %5061 = vmatprep.mubr.bf16.mxu0 0
        %5062 = vmatmul.mubr.bf16.gmra.mxu0 %v4899
        %v5063 = vpop.f32.mrf.mxu0
        %v5064 = vadd.f32 0.0, %v5063
        %v5065 = vpop.f32.mrf.mxu0
        %v5066 = vpop.f32.mrf.mxu0
        %v5067 = vadd.f32 0.0, %v5066
        %v5068 = vpop.f32.mrf.mxu0
        %5069 = vmatprep.mubr.bf16.mxu0 0
        %5070 = vmatmul.mubr.bf16.gmra.mxu0 %v4902
        %v5071 = vpop.f32.mrf.mxu0
        %v5072 = vpop.f32.mrf.mxu0
        %v5073 = vpop.f32.mrf.mxu0
        %v5074 = vpop.f32.mrf.mxu0
        %5075 = vmatprep.mubr.bf16.mxu0 0
        %5076 = vmatmul.mubr.bf16.gmra.mxu0 %v4905
        %v5077 = vpop.f32.mrf.mxu0
        %v5078 = vadd.f32 0.0, %v5077
        %v5079 = vpop.f32.mrf.mxu0
        %v5080 = vpop.f32.mrf.mxu0
        %v5081 = vadd.f32 0.0, %v5080
        %v5082 = vpop.f32.mrf.mxu0
        %5083 = vmatprep.mubr.bf16.mxu0 0
        %5084 = vmatmul.mubr.bf16.gmra.mxu0 %v4908
        %v5085 = vpop.f32.mrf.mxu0
        %v5086 = vpop.f32.mrf.mxu0
        %v5087 = vpop.f32.mrf.mxu0
        %v5088 = vpop.f32.mrf.mxu0
        %5089 = vmatprep.mubr.bf16.mxu0 0
        %5090 = vmatmul.mubr.bf16.gmra.mxu0 %v4911
        %v5091 = vpop.f32.mrf.mxu0
        %v5092 = vadd.f32 0.0, %v5091
        %v5093 = vpop.f32.mrf.mxu0
        %v5094 = vpop.f32.mrf.mxu0
        %v5095 = vadd.f32 0.0, %v5094
        %v5096 = vpop.f32.mrf.mxu0
        %5097 = vmatprep.mubr.bf16.mxu0 0
        %5098 = vmatmul.mubr.bf16.gmra.mxu0 %v4914
        %v5099 = vpop.f32.mrf.mxu0
        %v5100 = vpop.f32.mrf.mxu0
        %v5101 = vpop.f32.mrf.mxu0
        %v5102 = vpop.f32.mrf.mxu0
        %5103 = vmatprep.mubr.bf16.mxu0 0
        %5104 = vmatmul.mubr.bf16.gmra.mxu0 %v4917
        %v5105 = vpop.f32.mrf.mxu0
        %v5106 = vadd.f32 0.0, %v5105
        %v5107 = vpop.f32.mrf.mxu0
        %v5108 = vpop.f32.mrf.mxu0
        %v5109 = vadd.f32 0.0, %v5108
        %v5110 = vpop.f32.mrf.mxu0
        %5111 = vmatprep.mubr.bf16.mxu0 0
        %5112 = vmatmul.mubr.bf16.gmra.mxu0 %v4920
        %v5113 = vpop.f32.mrf.mxu0
        %v5114 = vpop.f32.mrf.mxu0
        %v5115 = vpop.f32.mrf.mxu0
        %v5116 = vpop.f32.mrf.mxu0
        %5117 = vmatprep.mubr.bf16.mxu0 0
        %5118 = vmatmul.mubr.bf16.gmra.mxu0 %v4923
        %v5119 = vpop.f32.mrf.mxu0
        %v5120 = vadd.f32 0.0, %v5119
        %v5121 = vpop.f32.mrf.mxu0
        %v5122 = vpop.f32.mrf.mxu0
        %v5123 = vadd.f32 0.0, %v5122
        %v5124 = vpop.f32.mrf.mxu0
        %5125 = vmatprep.mubr.bf16.mxu0 0
        %5126 = vmatmul.mubr.bf16.gmra.mxu0 %v4926
        %v5127 = vpop.f32.mrf.mxu0
        %v5128 = vpop.f32.mrf.mxu0
        %v5129 = vpop.f32.mrf.mxu0
        %v5130 = vpop.f32.mrf.mxu0
        %5131 = vmatprep.mubr.bf16.mxu0 0
        %5132 = vmatmul.mubr.bf16.gmra.mxu0 %v4929
        %v5133 = vpop.f32.mrf.mxu0
        %v5134 = vadd.f32 0.0, %v5133
        %v5135 = vpop.f32.mrf.mxu0
        %v5136 = vpop.f32.mrf.mxu0
        %v5137 = vadd.f32 0.0, %v5136
        %v5138 = vpop.f32.mrf.mxu0
        %5139 = vmatprep.mubr.bf16.mxu0 0
        %5140 = vmatmul.mubr.bf16.gmra.mxu0 %v4932
        %v5141 = vpop.f32.mrf.mxu0
        %v5142 = vpop.f32.mrf.mxu0
        %v5143 = vpop.f32.mrf.mxu0
        %v5144 = vpop.f32.mrf.mxu0
        %5145 = vmatprep.mubr.bf16.mxu0 0
        %5146 = vmatmul.mubr.bf16.gmra.mxu0 %v4935
        %v5147 = vpop.f32.mrf.mxu0
        %v5148 = vadd.f32 0.0, %v5147
        %v5149 = vpop.f32.mrf.mxu0
        %v5150 = vpop.f32.mrf.mxu0
        %v5151 = vadd.f32 0.0, %v5150
        %v5152 = vpop.f32.mrf.mxu0
        %5153 = vmatprep.mubr.bf16.mxu0 0
        %5154 = vmatmul.mubr.bf16.gmra.mxu0 %v4938
        %v5155 = vpop.f32.mrf.mxu0
        %v5156 = vpop.f32.mrf.mxu0
        %v5157 = vpop.f32.mrf.mxu0
        %v5158 = vpop.f32.mrf.mxu0
        %5159 = vmatprep.mubr.bf16.mxu0 0
        %5160 = vmatmul.mubr.bf16.gmra.mxu0 %v4941
        %v5161 = vpop.f32.mrf.mxu0
        %v5162 = vadd.f32 0.0, %v5161
        %v5163 = vpop.f32.mrf.mxu0
        %v5164 = vpop.f32.mrf.mxu0
        %v5165 = vadd.f32 0.0, %v5164
        %v5166 = vpop.f32.mrf.mxu0
        %5167 = vmatprep.mubr.bf16.mxu0 0
        %5168 = vmatmul.mubr.bf16.gmra.mxu0 %v4944
        %v5169 = vpop.f32.mrf.mxu0
        %v5170 = vpop.f32.mrf.mxu0
        %v5171 = vpop.f32.mrf.mxu0
        %v5172 = vpop.f32.mrf.mxu0
        %5173 = vmatprep.mubr.bf16.mxu0 0
        %5174 = vmatmul.mubr.bf16.gmra.mxu0 %v4947
        %v5175 = vpop.f32.mrf.mxu0
        %v5176 = vadd.f32 0.0, %v5175
        %v5177 = vpop.f32.mrf.mxu0
        %v5178 = vpop.f32.mrf.mxu0
        %v5179 = vadd.f32 0.0, %v5178
        %v5180 = vpop.f32.mrf.mxu0
        %5181 = vmatprep.mubr.bf16.mxu0 0
        %5182 = vmatmul.mubr.bf16.gmra.mxu0 %v4950
        %v5183 = vpop.f32.mrf.mxu0
        %v5184 = vpop.f32.mrf.mxu0
        %v5185 = vpop.f32.mrf.mxu0
        %v5186 = vpop.f32.mrf.mxu0
        %5187 = vmatprep.mubr.bf16.mxu0 0
        %5188 = vmatmul.mubr.bf16.gmra.mxu0 %v4953
        %v5189 = vpop.f32.mrf.mxu0
        %v5190 = vadd.f32 0.0, %v5189
        %v5191 = vpop.f32.mrf.mxu0
        %v5192 = vpop.f32.mrf.mxu0
        %v5193 = vadd.f32 0.0, %v5192
        %v5194 = vpop.f32.mrf.mxu0
        %5195 = vmatprep.mubr.bf16.mxu0 0
        %5196 = vmatmul.mubr.bf16.gmra.mxu0 %v4956
        %v5197 = vpop.f32.mrf.mxu0
        %v5198 = vpop.f32.mrf.mxu0
        %v5199 = vpop.f32.mrf.mxu0
        %v5200 = vpop.f32.mrf.mxu0
        %5201 = vmatprep.mubr.bf16.mxu0 0
        %5202 = vmatmul.mubr.bf16.gmra.mxu0 %v4959
        %v5203 = vpop.f32.mrf.mxu0
        %v5204 = vadd.f32 0.0, %v5203
        %v5205 = vpop.f32.mrf.mxu0
        %v5206 = vpop.f32.mrf.mxu0
        %v5207 = vadd.f32 0.0, %v5206
        %v5208 = vpop.f32.mrf.mxu0
        %5209 = vmatprep.mubr.bf16.mxu0 0
        %5210 = vmatmul.mubr.bf16.gmra.mxu0 %v4962
        %v5211 = vpop.f32.mrf.mxu0
        %v5212 = vpop.f32.mrf.mxu0
        %v5213 = vpop.f32.mrf.mxu0
        %v5214 = vpop.f32.mrf.mxu0
        %5215 = vmatprep.mubr.bf16.mxu0 0
        %5216 = vmatmul.mubr.bf16.gmra.mxu0 %v4965
        %v5217 = vpop.f32.mrf.mxu0
        %v5218 = vadd.f32 0.0, %v5217
        %v5219 = vpop.f32.mrf.mxu0
        %v5220 = vpop.f32.mrf.mxu0
        %v5221 = vadd.f32 0.0, %v5220
        %v5222 = vpop.f32.mrf.mxu0
        %5223 = vmatprep.mubr.bf16.mxu0 0
        %5224 = vmatmul.mubr.bf16.gmra.mxu0 %v4968
        %v5225 = vpop.f32.mrf.mxu0
        %v5226 = vpop.f32.mrf.mxu0
        %v5227 = vpop.f32.mrf.mxu0
        %v5228 = vpop.f32.mrf.mxu0
        %5229 = vdwg.mxu0
        %v5230 = vadd.f32 %v4352, %v5008
        %v5231 = vadd.f32 %v4353, %v5011
        %v5232 = vadd.f32 %v4354, %v5022
        %v5233 = vadd.f32 %v4355, %v5025
        %v5234 = vadd.f32 %v4356, %v5036
        %v5235 = vadd.f32 %v4357, %v5039
        %v5236 = vadd.f32 %v4358, %v5050
        %v5237 = vadd.f32 %v4359, %v5053
        %v5238 = vadd.f32 %v4360, %v5064
        %v5239 = vadd.f32 %v4361, %v5067
        %v5240 = vadd.f32 %v4362, %v5078
        %v5241 = vadd.f32 %v4363, %v5081
        %v5242 = vadd.f32 %v4364, %v5092
        %v5243 = vadd.f32 %v4365, %v5095
        %v5244 = vadd.f32 %v4366, %v5106
        %v5245 = vadd.f32 %v4367, %v5109
        %v5246 = vadd.f32 %v4368, %v5120
        %v5247 = vadd.f32 %v4369, %v5123
        %v5248 = vadd.f32 %v4370, %v5134
        %v5249 = vadd.f32 %v4371, %v5137
        %v5250 = vadd.f32 %v4372, %v5148
        %v5251 = vadd.f32 %v4373, %v5151
        %v5252 = vadd.f32 %v4374, %v5162
        %v5253 = vadd.f32 %v4375, %v5165
        %v5254 = vadd.f32 %v4376, %v5176
        %v5255 = vadd.f32 %v4377, %v5179
        %v5256 = vadd.f32 %v4378, %v5190
        %v5257 = vadd.f32 %v4379, %v5193
        %v5258 = vadd.f32 %v4380, %v5204
        %v5259 = vadd.f32 %v4381, %v5207
        %v5260 = vadd.f32 %v4382, %v5218
        %v5261 = vadd.f32 %v4383, %v5221
        %v5262 = vld [vmem:[%s182 + $0x20] sm:$0xe]
        %s5263 = scalar_lea.vmem %s1, 16
        %v5264 = vld [vmem:[%s5263] sm:$0x3]
        %v5266 = vunpack.c.l.b16 %v5262
        %v5267 = vpack.c.b16 %v4517, %v5266
        %v5268 = vrot.slane %v5267, 1
        %v5269 = vrot.slane %v4582, 1
        %v5270 = vsel %vm1365, %v5268, %v5269
        %v5271 = vrot.slane %v4583, 1
        %v5272 = vsel %vm1365, %v5269, %v5271
        %v5273 = vrot.slane %v4584, 1
        %v5274 = vsel %vm1365, %v5271, %v5273
        %v5275 = vrot.slane %v4585, 1
        %v5276 = vsel %vm1365, %v5273, %v5275
        %v5277 = vrot.slane %v4586, 1
        %v5278 = vsel %vm1365, %v5275, %v5277
        %v5279 = vrot.slane %v4587, 1
        %v5280 = vsel %vm1365, %v5277, %v5279
        %v5281 = vrot.slane %v4588, 1
        %v5282 = vsel %vm1365, %v5279, %v5281
        %v5283 = vrot.slane %v4589, 1
        %v5284 = vsel %vm1365, %v5281, %v5283
        %v5285 = vrot.slane %v4590, 1
        %v5286 = vsel %vm1365, %v5283, %v5285
        %v5287 = vrot.slane %v4591, 1
        %v5288 = vsel %vm1365, %v5285, %v5287
        %v5289 = vrot.slane %v4592, 1
        %v5290 = vsel %vm1365, %v5287, %v5289
        %v5291 = vrot.slane %v4593, 1
        %v5292 = vsel %vm1365, %v5289, %v5291
        %v5293 = vrot.slane %v4594, 1
        %v5294 = vsel %vm1365, %v5291, %v5293
        %v5295 = vrot.slane %v4595, 1
        %v5296 = vsel %vm1365, %v5293, %v5295
        %v5297 = vrot.slane %v4596, 1
        %v5298 = vsel %vm1365, %v5295, %v5297
        %v5299 = vrot.slane %v4597, 1
        %v5300 = vsel %vm1365, %v5297, %v5299
        %v5301 = vrot.slane %v4598, 1
        %v5302 = vsel %vm1365, %v5299, %v5301
        %v5303 = vrot.slane %v4599, 1
        %v5304 = vsel %vm1365, %v5301, %v5303
        %v5305 = vrot.slane %v4600, 1
        %v5306 = vsel %vm1365, %v5303, %v5305
        %v5307 = vrot.slane %v4601, 1
        %v5308 = vsel %vm1365, %v5305, %v5307
        %v5309 = vrot.slane %v4602, 1
        %v5310 = vsel %vm1365, %v5307, %v5309
        %v5311 = vrot.slane %v4603, 1
        %v5312 = vsel %vm1365, %v5309, %v5311
        %v5313 = vrot.slane %v4604, 1
        %v5314 = vsel %vm1365, %v5311, %v5313
        %v5315 = vrot.slane %v4605, 1
        %v5316 = vsel %vm1365, %v5313, %v5315
        %v5317 = vrot.slane %v4606, 1
        %v5318 = vsel %vm1365, %v5315, %v5317
        %v5319 = vrot.slane %v4607, 1
        %v5320 = vsel %vm1365, %v5317, %v5319
        %v5321 = vrot.slane %v4608, 1
        %v5322 = vsel %vm1365, %v5319, %v5321
        %v5323 = vrot.slane %v4609, 1
        %v5324 = vsel %vm1365, %v5321, %v5323
        %v5325 = vrot.slane %v4610, 1
        %v5326 = vsel %vm1365, %v5323, %v5325
        %v5327 = vrot.slane %v4611, 1
        %v5328 = vsel %vm1365, %v5325, %v5327
        %v5329 = vrot.slane %v4612, 1
        %v5330 = vsel %vm1365, %v5327, %v5329
        %v5331 = vrot.slane %v4613, 1
        %v5332 = vsel %vm1365, %v5329, %v5331
        %v5334 = vsel %vm677, %v5270, 0
        %v5337 = vsel %vm677, %v5272, 0
        %v5340 = vsel %vm677, %v5274, 0
        %v5343 = vsel %vm677, %v5276, 0
        %v5346 = vsel %vm677, %v5278, 0
        %v5349 = vsel %vm677, %v5280, 0
        %v5352 = vsel %vm677, %v5282, 0
        %v5355 = vsel %vm677, %v5284, 0
        %v5358 = vsel %vm677, %v5286, 0
        %v5361 = vsel %vm677, %v5288, 0
        %v5364 = vsel %vm677, %v5290, 0
        %v5367 = vsel %vm677, %v5292, 0
        %v5370 = vsel %vm677, %v5294, 0
        %v5373 = vsel %vm677, %v5296, 0
        %v5376 = vsel %vm677, %v5298, 0
        %v5379 = vsel %vm677, %v5300, 0
        %v5382 = vsel %vm677, %v5302, 0
        %v5385 = vsel %vm677, %v5304, 0
        %v5388 = vsel %vm677, %v5306, 0
        %v5391 = vsel %vm677, %v5308, 0
        %v5394 = vsel %vm677, %v5310, 0
        %v5397 = vsel %vm677, %v5312, 0
        %v5400 = vsel %vm677, %v5314, 0
        %v5403 = vsel %vm677, %v5316, 0
        %v5406 = vsel %vm677, %v5318, 0
        %v5409 = vsel %vm677, %v5320, 0
        %v5412 = vsel %vm677, %v5322, 0
        %v5415 = vsel %vm677, %v5324, 0
        %v5418 = vsel %vm677, %v5326, 0
        %v5421 = vsel %vm677, %v5328, 0
        %v5424 = vsel %vm677, %v5330, 0
        %v5427 = vsel %vm677, %v5332, 0
        %v5430 = vsel %vm774, %v5264, 0
        %5432 = vmatprep.subr.bf16.mxu0 0
        %5433 = vmatpush1.bf16.msra.mxu0 0
        %5434 = vmatprep.subr.bf16.mxu0 0
        %5435 = vmatpush1.bf16.msra.mxu0 0
        %5436 = vmatprep.subr.bf16.mxu0 0
        %5437 = vmatpush1.bf16.msra.mxu0 0
        %5438 = vmatprep.subr.bf16.mxu0 0
        %5439 = vmatpush1.bf16.msra.mxu0 0
        %5440 = vmatprep.subr.bf16.mxu0 0
        %5441 = vmatpush1.bf16.msra.mxu0 0
        %5442 = vmatprep.subr.bf16.mxu0 0
        %5443 = vmatpush1.bf16.msra.mxu0 0
        %5444 = vmatprep.subr.bf16.mxu0 0
        %5445 = vmatpush1.bf16.msra.mxu0 0
        %5446 = vmatprep.subr.bf16.mxu0 0
        %5447 = vmatpush1.bf16.msra.mxu0 %v5430
        %5448 = vmatprep.subr.bf16.mxu0 0
        %5449 = vmatpush2.bf16.msra.mxu0 0
        %5450 = vmatprep.subr.bf16.mxu0 0
        %5451 = vmatpush2.bf16.msra.mxu0 0
        %5452 = vmatprep.subr.bf16.mxu0 0
        %5453 = vmatpush2.bf16.msra.mxu0 0
        %5454 = vmatprep.subr.bf16.mxu0 0
        %5455 = vmatpush2.bf16.msra.mxu0 0
        %5456 = vmatprep.subr.bf16.mxu0 0
        %5457 = vmatpush2.bf16.msra.mxu0 0
        %5458 = vmatprep.subr.bf16.mxu0 0
        %5459 = vmatpush2.bf16.msra.mxu0 0
        %5460 = vmatprep.subr.bf16.mxu0 0
        %5461 = vmatpush2.bf16.msra.mxu0 0
        %5462 = vmatprep.subr.bf16.mxu0 0
        %5463 = vmatpush2.bf16.msra.mxu0 0
        %5464 = vmatprep.mubr.bf16.mxu0 0
        %5465 = vmatmul.mubr.bf16.gmra.mxu0 %v5334
        %v5466 = vpop.f32.mrf.mxu0
        %v5467 = vadd.f32 0.0, %v5466
        %v5468 = vpop.f32.mrf.mxu0
        %v5469 = vpop.f32.mrf.mxu0
        %v5470 = vadd.f32 0.0, %v5469
        %v5471 = vpop.f32.mrf.mxu0
        %5472 = vmatprep.mubr.bf16.mxu0 0
        %5473 = vmatmul.mubr.bf16.gmra.mxu0 %v5337
        %v5474 = vpop.f32.mrf.mxu0
        %v5475 = vpop.f32.mrf.mxu0
        %v5476 = vpop.f32.mrf.mxu0
        %v5477 = vpop.f32.mrf.mxu0
        %5478 = vmatprep.mubr.bf16.mxu0 0
        %5479 = vmatmul.mubr.bf16.gmra.mxu0 %v5340
        %v5480 = vpop.f32.mrf.mxu0
        %v5481 = vadd.f32 0.0, %v5480
        %v5482 = vpop.f32.mrf.mxu0
        %v5483 = vpop.f32.mrf.mxu0
        %v5484 = vadd.f32 0.0, %v5483
        %v5485 = vpop.f32.mrf.mxu0
        %5486 = vmatprep.mubr.bf16.mxu0 0
        %5487 = vmatmul.mubr.bf16.gmra.mxu0 %v5343
        %v5488 = vpop.f32.mrf.mxu0
        %v5489 = vpop.f32.mrf.mxu0
        %v5490 = vpop.f32.mrf.mxu0
        %v5491 = vpop.f32.mrf.mxu0
        %5492 = vmatprep.mubr.bf16.mxu0 0
        %5493 = vmatmul.mubr.bf16.gmra.mxu0 %v5346
        %v5494 = vpop.f32.mrf.mxu0
        %v5495 = vadd.f32 0.0, %v5494
        %v5496 = vpop.f32.mrf.mxu0
        %v5497 = vpop.f32.mrf.mxu0
        %v5498 = vadd.f32 0.0, %v5497
        %v5499 = vpop.f32.mrf.mxu0
        %5500 = vmatprep.mubr.bf16.mxu0 0
        %5501 = vmatmul.mubr.bf16.gmra.mxu0 %v5349
        %v5502 = vpop.f32.mrf.mxu0
        %v5503 = vpop.f32.mrf.mxu0
        %v5504 = vpop.f32.mrf.mxu0
        %v5505 = vpop.f32.mrf.mxu0
        %5506 = vmatprep.mubr.bf16.mxu0 0
        %5507 = vmatmul.mubr.bf16.gmra.mxu0 %v5352
        %v5508 = vpop.f32.mrf.mxu0
        %v5509 = vadd.f32 0.0, %v5508
        %v5510 = vpop.f32.mrf.mxu0
        %v5511 = vpop.f32.mrf.mxu0
        %v5512 = vadd.f32 0.0, %v5511
        %v5513 = vpop.f32.mrf.mxu0
        %5514 = vmatprep.mubr.bf16.mxu0 0
        %5515 = vmatmul.mubr.bf16.gmra.mxu0 %v5355
        %v5516 = vpop.f32.mrf.mxu0
        %v5517 = vpop.f32.mrf.mxu0
        %v5518 = vpop.f32.mrf.mxu0
        %v5519 = vpop.f32.mrf.mxu0
        %5520 = vmatprep.mubr.bf16.mxu0 0
        %5521 = vmatmul.mubr.bf16.gmra.mxu0 %v5358
        %v5522 = vpop.f32.mrf.mxu0
        %v5523 = vadd.f32 0.0, %v5522
        %v5524 = vpop.f32.mrf.mxu0
        %v5525 = vpop.f32.mrf.mxu0
        %v5526 = vadd.f32 0.0, %v5525
        %v5527 = vpop.f32.mrf.mxu0
        %5528 = vmatprep.mubr.bf16.mxu0 0
        %5529 = vmatmul.mubr.bf16.gmra.mxu0 %v5361
        %v5530 = vpop.f32.mrf.mxu0
        %v5531 = vpop.f32.mrf.mxu0
        %v5532 = vpop.f32.mrf.mxu0
        %v5533 = vpop.f32.mrf.mxu0
        %5534 = vmatprep.mubr.bf16.mxu0 0
        %5535 = vmatmul.mubr.bf16.gmra.mxu0 %v5364
        %v5536 = vpop.f32.mrf.mxu0
        %v5537 = vadd.f32 0.0, %v5536
        %v5538 = vpop.f32.mrf.mxu0
        %v5539 = vpop.f32.mrf.mxu0
        %v5540 = vadd.f32 0.0, %v5539
        %v5541 = vpop.f32.mrf.mxu0
        %5542 = vmatprep.mubr.bf16.mxu0 0
        %5543 = vmatmul.mubr.bf16.gmra.mxu0 %v5367
        %v5544 = vpop.f32.mrf.mxu0
        %v5545 = vpop.f32.mrf.mxu0
        %v5546 = vpop.f32.mrf.mxu0
        %v5547 = vpop.f32.mrf.mxu0
        %5548 = vmatprep.mubr.bf16.mxu0 0
        %5549 = vmatmul.mubr.bf16.gmra.mxu0 %v5370
        %v5550 = vpop.f32.mrf.mxu0
        %v5551 = vadd.f32 0.0, %v5550
        %v5552 = vpop.f32.mrf.mxu0
        %v5553 = vpop.f32.mrf.mxu0
        %v5554 = vadd.f32 0.0, %v5553
        %v5555 = vpop.f32.mrf.mxu0
        %5556 = vmatprep.mubr.bf16.mxu0 0
        %5557 = vmatmul.mubr.bf16.gmra.mxu0 %v5373
        %v5558 = vpop.f32.mrf.mxu0
        %v5559 = vpop.f32.mrf.mxu0
        %v5560 = vpop.f32.mrf.mxu0
        %v5561 = vpop.f32.mrf.mxu0
        %5562 = vmatprep.mubr.bf16.mxu0 0
        %5563 = vmatmul.mubr.bf16.gmra.mxu0 %v5376
        %v5564 = vpop.f32.mrf.mxu0
        %v5565 = vadd.f32 0.0, %v5564
        %v5566 = vpop.f32.mrf.mxu0
        %v5567 = vpop.f32.mrf.mxu0
        %v5568 = vadd.f32 0.0, %v5567
        %v5569 = vpop.f32.mrf.mxu0
        %5570 = vmatprep.mubr.bf16.mxu0 0
        %5571 = vmatmul.mubr.bf16.gmra.mxu0 %v5379
        %v5572 = vpop.f32.mrf.mxu0
        %v5573 = vpop.f32.mrf.mxu0
        %v5574 = vpop.f32.mrf.mxu0
        %v5575 = vpop.f32.mrf.mxu0
        %5576 = vmatprep.mubr.bf16.mxu0 0
        %5577 = vmatmul.mubr.bf16.gmra.mxu0 %v5382
        %v5578 = vpop.f32.mrf.mxu0
        %v5579 = vadd.f32 0.0, %v5578
        %v5580 = vpop.f32.mrf.mxu0
        %v5581 = vpop.f32.mrf.mxu0
        %v5582 = vadd.f32 0.0, %v5581
        %v5583 = vpop.f32.mrf.mxu0
        %5584 = vmatprep.mubr.bf16.mxu0 0
        %5585 = vmatmul.mubr.bf16.gmra.mxu0 %v5385
        %v5586 = vpop.f32.mrf.mxu0
        %v5587 = vpop.f32.mrf.mxu0
        %v5588 = vpop.f32.mrf.mxu0
        %v5589 = vpop.f32.mrf.mxu0
        %5590 = vmatprep.mubr.bf16.mxu0 0
        %5591 = vmatmul.mubr.bf16.gmra.mxu0 %v5388
        %v5592 = vpop.f32.mrf.mxu0
        %v5593 = vadd.f32 0.0, %v5592
        %v5594 = vpop.f32.mrf.mxu0
        %v5595 = vpop.f32.mrf.mxu0
        %v5596 = vadd.f32 0.0, %v5595
        %v5597 = vpop.f32.mrf.mxu0
        %5598 = vmatprep.mubr.bf16.mxu0 0
        %5599 = vmatmul.mubr.bf16.gmra.mxu0 %v5391
        %v5600 = vpop.f32.mrf.mxu0
        %v5601 = vpop.f32.mrf.mxu0
        %v5602 = vpop.f32.mrf.mxu0
        %v5603 = vpop.f32.mrf.mxu0
        %5604 = vmatprep.mubr.bf16.mxu0 0
        %5605 = vmatmul.mubr.bf16.gmra.mxu0 %v5394
        %v5606 = vpop.f32.mrf.mxu0
        %v5607 = vadd.f32 0.0, %v5606
        %v5608 = vpop.f32.mrf.mxu0
        %v5609 = vpop.f32.mrf.mxu0
        %v5610 = vadd.f32 0.0, %v5609
        %v5611 = vpop.f32.mrf.mxu0
        %5612 = vmatprep.mubr.bf16.mxu0 0
        %5613 = vmatmul.mubr.bf16.gmra.mxu0 %v5397
        %v5614 = vpop.f32.mrf.mxu0
        %v5615 = vpop.f32.mrf.mxu0
        %v5616 = vpop.f32.mrf.mxu0
        %v5617 = vpop.f32.mrf.mxu0
        %5618 = vmatprep.mubr.bf16.mxu0 0
        %5619 = vmatmul.mubr.bf16.gmra.mxu0 %v5400
        %v5620 = vpop.f32.mrf.mxu0
        %v5621 = vadd.f32 0.0, %v5620
        %v5622 = vpop.f32.mrf.mxu0
        %v5623 = vpop.f32.mrf.mxu0
        %v5624 = vadd.f32 0.0, %v5623
        %v5625 = vpop.f32.mrf.mxu0
        %5626 = vmatprep.mubr.bf16.mxu0 0
        %5627 = vmatmul.mubr.bf16.gmra.mxu0 %v5403
        %v5628 = vpop.f32.mrf.mxu0
        %v5629 = vpop.f32.mrf.mxu0
        %v5630 = vpop.f32.mrf.mxu0
        %v5631 = vpop.f32.mrf.mxu0
        %5632 = vmatprep.mubr.bf16.mxu0 0
        %5633 = vmatmul.mubr.bf16.gmra.mxu0 %v5406
        %v5634 = vpop.f32.mrf.mxu0
        %v5635 = vadd.f32 0.0, %v5634
        %v5636 = vpop.f32.mrf.mxu0
        %v5637 = vpop.f32.mrf.mxu0
        %v5638 = vadd.f32 0.0, %v5637
        %v5639 = vpop.f32.mrf.mxu0
        %5640 = vmatprep.mubr.bf16.mxu0 0
        %5641 = vmatmul.mubr.bf16.gmra.mxu0 %v5409
        %v5642 = vpop.f32.mrf.mxu0
        %v5643 = vpop.f32.mrf.mxu0
        %v5644 = vpop.f32.mrf.mxu0
        %v5645 = vpop.f32.mrf.mxu0
        %5646 = vmatprep.mubr.bf16.mxu0 0
        %5647 = vmatmul.mubr.bf16.gmra.mxu0 %v5412
        %v5648 = vpop.f32.mrf.mxu0
        %v5649 = vadd.f32 0.0, %v5648
        %v5650 = vpop.f32.mrf.mxu0
        %v5651 = vpop.f32.mrf.mxu0
        %v5652 = vadd.f32 0.0, %v5651
        %v5653 = vpop.f32.mrf.mxu0
        %5654 = vmatprep.mubr.bf16.mxu0 0
        %5655 = vmatmul.mubr.bf16.gmra.mxu0 %v5415
        %v5656 = vpop.f32.mrf.mxu0
        %v5657 = vpop.f32.mrf.mxu0
        %v5658 = vpop.f32.mrf.mxu0
        %v5659 = vpop.f32.mrf.mxu0
        %5660 = vmatprep.mubr.bf16.mxu0 0
        %5661 = vmatmul.mubr.bf16.gmra.mxu0 %v5418
        %v5662 = vpop.f32.mrf.mxu0
        %v5663 = vadd.f32 0.0, %v5662
        %v5664 = vpop.f32.mrf.mxu0
        %v5665 = vpop.f32.mrf.mxu0
        %v5666 = vadd.f32 0.0, %v5665
        %v5667 = vpop.f32.mrf.mxu0
        %5668 = vmatprep.mubr.bf16.mxu0 0
        %5669 = vmatmul.mubr.bf16.gmra.mxu0 %v5421
        %v5670 = vpop.f32.mrf.mxu0
        %v5671 = vpop.f32.mrf.mxu0
        %v5672 = vpop.f32.mrf.mxu0
        %v5673 = vpop.f32.mrf.mxu0
        %5674 = vmatprep.mubr.bf16.mxu0 0
        %5675 = vmatmul.mubr.bf16.gmra.mxu0 %v5424
        %v5676 = vpop.f32.mrf.mxu0
        %v5677 = vadd.f32 0.0, %v5676
        %v5678 = vpop.f32.mrf.mxu0
        %v5679 = vpop.f32.mrf.mxu0
        %v5680 = vadd.f32 0.0, %v5679
        %v5681 = vpop.f32.mrf.mxu0
        %5682 = vmatprep.mubr.bf16.mxu0 0
        %5683 = vmatmul.mubr.bf16.gmra.mxu0 %v5427
        %v5684 = vpop.f32.mrf.mxu0
        %v5685 = vpop.f32.mrf.mxu0
        %v5686 = vpop.f32.mrf.mxu0
        %v5687 = vpop.f32.mrf.mxu0
        %5688 = vdwg.mxu0
        %v5689 = vadd.f32 %v5230, %v5467
        %v5690 = vadd.f32 %v5231, %v5470
        %v5691 = vadd.f32 %v5232, %v5481
        %v5692 = vadd.f32 %v5233, %v5484
        %v5693 = vadd.f32 %v5234, %v5495
        %v5694 = vadd.f32 %v5235, %v5498
        %v5695 = vadd.f32 %v5236, %v5509
        %v5696 = vadd.f32 %v5237, %v5512
        %v5697 = vadd.f32 %v5238, %v5523
        %v5698 = vadd.f32 %v5239, %v5526
        %v5699 = vadd.f32 %v5240, %v5537
        %v5700 = vadd.f32 %v5241, %v5540
        %v5701 = vadd.f32 %v5242, %v5551
        %v5702 = vadd.f32 %v5243, %v5554
        %v5703 = vadd.f32 %v5244, %v5565
        %v5704 = vadd.f32 %v5245, %v5568
        %v5705 = vadd.f32 %v5246, %v5579
        %v5706 = vadd.f32 %v5247, %v5582
        %v5707 = vadd.f32 %v5248, %v5593
        %v5708 = vadd.f32 %v5249, %v5596
        %v5709 = vadd.f32 %v5250, %v5607
        %v5710 = vadd.f32 %v5251, %v5610
        %v5711 = vadd.f32 %v5252, %v5621
        %v5712 = vadd.f32 %v5253, %v5624
        %v5713 = vadd.f32 %v5254, %v5635
        %v5714 = vadd.f32 %v5255, %v5638
        %v5715 = vadd.f32 %v5256, %v5649
        %v5716 = vadd.f32 %v5257, %v5652
        %v5717 = vadd.f32 %v5258, %v5663
        %v5718 = vadd.f32 %v5259, %v5666
        %v5719 = vadd.f32 %v5260, %v5677
        %v5720 = vadd.f32 %v5261, %v5680
        %v5721 = vld [vmem:[%s2] sm:$0x1]
        %v5723 = vlaneseq
        %v5724 = vshrl.u32 %v5723, 7
        %v5725 = vsub.s32 0, %v5724
        %v5726 = vrot.slane %v5721, %v5725
        %v5728 = vadd.f32 %v5689, %v5726
        %v5729 = vadd.f32 %v5690, %v5726
        %v5730 = vadd.f32 %v5691, %v5726
        %v5731 = vadd.f32 %v5692, %v5726
        %v5732 = vadd.f32 %v5693, %v5726
        %v5733 = vadd.f32 %v5694, %v5726
        %v5734 = vadd.f32 %v5695, %v5726
        %v5735 = vadd.f32 %v5696, %v5726
        %v5736 = vadd.f32 %v5697, %v5726
        %v5737 = vadd.f32 %v5698, %v5726
        %v5738 = vadd.f32 %v5699, %v5726
        %v5739 = vadd.f32 %v5700, %v5726
        %v5740 = vadd.f32 %v5701, %v5726
        %v5741 = vadd.f32 %v5702, %v5726
        %v5742 = vadd.f32 %v5703, %v5726
        %v5743 = vadd.f32 %v5704, %v5726
        %v5744 = vadd.f32 %v5705, %v5726
        %v5745 = vadd.f32 %v5706, %v5726
        %v5746 = vadd.f32 %v5707, %v5726
        %v5747 = vadd.f32 %v5708, %v5726
        %v5748 = vadd.f32 %v5709, %v5726
        %v5749 = vadd.f32 %v5710, %v5726
        %v5750 = vadd.f32 %v5711, %v5726
        %v5751 = vadd.f32 %v5712, %v5726
        %v5752 = vadd.f32 %v5713, %v5726
        %v5753 = vadd.f32 %v5714, %v5726
        %v5754 = vadd.f32 %v5715, %v5726
        %v5755 = vadd.f32 %v5716, %v5726
        %v5756 = vadd.f32 %v5717, %v5726
        %v5757 = vadd.f32 %v5718, %v5726
        %v5758 = vadd.f32 %v5719, %v5726
        %v5759 = vadd.f32 %v5720, %v5726
        %vm5760 = vcmp.ge.f32.partialorder %v5728, 0.0
        %vm5761 = vcmp.ge.f32.partialorder %v5729, 0.0
        %vm5762 = vcmp.ge.f32.partialorder %v5730, 0.0
        %vm5763 = vcmp.ge.f32.partialorder %v5731, 0.0
        %vm5764 = vcmp.ge.f32.partialorder %v5732, 0.0
        %vm5765 = vcmp.ge.f32.partialorder %v5733, 0.0
        %vm5766 = vcmp.ge.f32.partialorder %v5734, 0.0
        %vm5767 = vcmp.ge.f32.partialorder %v5735, 0.0
        %vm5768 = vcmp.ge.f32.partialorder %v5736, 0.0
        %vm5769 = vcmp.ge.f32.partialorder %v5737, 0.0
        %vm5770 = vcmp.ge.f32.partialorder %v5738, 0.0
        %vm5771 = vcmp.ge.f32.partialorder %v5739, 0.0
        %vm5772 = vcmp.ge.f32.partialorder %v5740, 0.0
        %vm5773 = vcmp.ge.f32.partialorder %v5741, 0.0
        %vm5774 = vcmp.ge.f32.partialorder %v5742, 0.0
        %vm5775 = vcmp.ge.f32.partialorder %v5743, 0.0
        %vm5776 = vcmp.ge.f32.partialorder %v5744, 0.0
        %vm5777 = vcmp.ge.f32.partialorder %v5745, 0.0
        %vm5778 = vcmp.ge.f32.partialorder %v5746, 0.0
        %vm5779 = vcmp.ge.f32.partialorder %v5747, 0.0
        %vm5780 = vcmp.ge.f32.partialorder %v5748, 0.0
        %vm5781 = vcmp.ge.f32.partialorder %v5749, 0.0
        %vm5782 = vcmp.ge.f32.partialorder %v5750, 0.0
        %vm5783 = vcmp.ge.f32.partialorder %v5751, 0.0
        %vm5784 = vcmp.ge.f32.partialorder %v5752, 0.0
        %vm5785 = vcmp.ge.f32.partialorder %v5753, 0.0
        %vm5786 = vcmp.ge.f32.partialorder %v5754, 0.0
        %vm5787 = vcmp.ge.f32.partialorder %v5755, 0.0
        %vm5788 = vcmp.ge.f32.partialorder %v5756, 0.0
        %vm5789 = vcmp.ge.f32.partialorder %v5757, 0.0
        %vm5790 = vcmp.ge.f32.partialorder %v5758, 0.0
        %vm5791 = vcmp.ge.f32.partialorder %v5759, 0.0
        %v5792 = vmul.f32 %v5728, 0.01
        %v5793 = vmul.f32 %v5729, 0.01
        %v5794 = vmul.f32 %v5730, 0.01
        %v5795 = vmul.f32 %v5731, 0.01
        %v5796 = vmul.f32 %v5732, 0.01
        %v5797 = vmul.f32 %v5733, 0.01
        %v5798 = vmul.f32 %v5734, 0.01
        %v5799 = vmul.f32 %v5735, 0.01
        %v5800 = vmul.f32 %v5736, 0.01
        %v5801 = vmul.f32 %v5737, 0.01
        %v5802 = vmul.f32 %v5738, 0.01
        %v5803 = vmul.f32 %v5739, 0.01
        %v5804 = vmul.f32 %v5740, 0.01
        %v5805 = vmul.f32 %v5741, 0.01
        %v5806 = vmul.f32 %v5742, 0.01
        %v5807 = vmul.f32 %v5743, 0.01
        %v5808 = vmul.f32 %v5744, 0.01
        %v5809 = vmul.f32 %v5745, 0.01
        %v5810 = vmul.f32 %v5746, 0.01
        %v5811 = vmul.f32 %v5747, 0.01
        %v5812 = vmul.f32 %v5748, 0.01
        %v5813 = vmul.f32 %v5749, 0.01
        %v5814 = vmul.f32 %v5750, 0.01
        %v5815 = vmul.f32 %v5751, 0.01
        %v5816 = vmul.f32 %v5752, 0.01
        %v5817 = vmul.f32 %v5753, 0.01
        %v5818 = vmul.f32 %v5754, 0.01
        %v5819 = vmul.f32 %v5755, 0.01
        %v5820 = vmul.f32 %v5756, 0.01
        %v5821 = vmul.f32 %v5757, 0.01
        %v5822 = vmul.f32 %v5758, 0.01
        %v5823 = vmul.f32 %v5759, 0.01
        %v5824 = vsel %vm5760, %v5728, %v5792
        %v5825 = vsel %vm5761, %v5729, %v5793
        %v5826 = vsel %vm5762, %v5730, %v5794
        %v5827 = vsel %vm5763, %v5731, %v5795
        %v5828 = vsel %vm5764, %v5732, %v5796
        %v5829 = vsel %vm5765, %v5733, %v5797
        %v5830 = vsel %vm5766, %v5734, %v5798
        %v5831 = vsel %vm5767, %v5735, %v5799
        %v5832 = vsel %vm5768, %v5736, %v5800
        %v5833 = vsel %vm5769, %v5737, %v5801
        %v5834 = vsel %vm5770, %v5738, %v5802
        %v5835 = vsel %vm5771, %v5739, %v5803
        %v5836 = vsel %vm5772, %v5740, %v5804
        %v5837 = vsel %vm5773, %v5741, %v5805
        %v5838 = vsel %vm5774, %v5742, %v5806
        %v5839 = vsel %vm5775, %v5743, %v5807
        %v5840 = vsel %vm5776, %v5744, %v5808
        %v5841 = vsel %vm5777, %v5745, %v5809
        %v5842 = vsel %vm5778, %v5746, %v5810
        %v5843 = vsel %vm5779, %v5747, %v5811
        %v5844 = vsel %vm5780, %v5748, %v5812
        %v5845 = vsel %vm5781, %v5749, %v5813
        %v5846 = vsel %vm5782, %v5750, %v5814
        %v5847 = vsel %vm5783, %v5751, %v5815
        %v5848 = vsel %vm5784, %v5752, %v5816
        %v5849 = vsel %vm5785, %v5753, %v5817
        %v5850 = vsel %vm5786, %v5754, %v5818
        %v5851 = vsel %vm5787, %v5755, %v5819
        %v5852 = vsel %vm5788, %v5756, %v5820
        %v5853 = vsel %vm5789, %v5757, %v5821
        %v5854 = vsel %vm5790, %v5758, %v5822
        %v5855 = vsel %vm5791, %v5759, %v5823
        %v5856 = vpack.c.bf16 %v5825, %v5824
        %v5857 = vpack.c.bf16 %v5827, %v5826
        %v5858 = vpack.c.bf16 %v5829, %v5828
        %v5859 = vpack.c.bf16 %v5831, %v5830
        %v5860 = vpack.c.bf16 %v5833, %v5832
        %v5861 = vpack.c.bf16 %v5835, %v5834
        %v5862 = vpack.c.bf16 %v5837, %v5836
        %v5863 = vpack.c.bf16 %v5839, %v5838
        %v5864 = vpack.c.bf16 %v5841, %v5840
        %v5865 = vpack.c.bf16 %v5843, %v5842
        %v5866 = vpack.c.bf16 %v5845, %v5844
        %v5867 = vpack.c.bf16 %v5847, %v5846
        %v5868 = vpack.c.bf16 %v5849, %v5848
        %v5869 = vpack.c.bf16 %v5851, %v5850
        %v5870 = vpack.c.bf16 %v5853, %v5852
        %v5871 = vpack.c.bf16 %v5855, %v5854
        %v5888 = vunpack.c.l.b16 %v5856
        %v5889 = vunpack.c.h.b16 %v5856
        %v5890 = vunpack.c.l.b16 %v5857
        %v5891 = vunpack.c.h.b16 %v5857
        %v5892 = vunpack.c.l.b16 %v5858
        %v5893 = vunpack.c.h.b16 %v5858
        %v5894 = vunpack.c.l.b16 %v5859
        %v5895 = vunpack.c.h.b16 %v5859
        %v5896 = vunpack.c.l.b16 %v5860
        %v5897 = vunpack.c.h.b16 %v5860
        %v5898 = vunpack.c.l.b16 %v5861
        %v5899 = vunpack.c.h.b16 %v5861
        %v5900 = vunpack.c.l.b16 %v5862
        %v5901 = vunpack.c.h.b16 %v5862
        %v5902 = vunpack.c.l.b16 %v5863
        %v5903 = vunpack.c.h.b16 %v5863
        %v5904 = vunpack.c.l.b16 %v5864
        %v5905 = vunpack.c.h.b16 %v5864
        %v5906 = vunpack.c.l.b16 %v5865
        %v5907 = vunpack.c.h.b16 %v5865
        %v5908 = vunpack.c.l.b16 %v5866
        %v5909 = vunpack.c.h.b16 %v5866
        %v5910 = vunpack.c.l.b16 %v5867
        %v5911 = vunpack.c.h.b16 %v5867
        %v5912 = vunpack.c.l.b16 %v5868
        %v5913 = vunpack.c.h.b16 %v5868
        %v5914 = vunpack.c.l.b16 %v5869
        %v5915 = vunpack.c.h.b16 %v5869
        %v5916 = vunpack.c.l.b16 %v5870
        %v5917 = vunpack.c.h.b16 %v5870
        %v5918 = vunpack.c.l.b16 %v5871
        %v5919 = vunpack.c.h.b16 %v5871
        %v5920 = vpack.c.b16 %v5888, %v5888
        %v5921 = vpack.c.b16 %v5889, %v5889
        %v5922 = vpack.c.b16 %v5890, %v5890
        %v5923 = vpack.c.b16 %v5891, %v5891
        %v5924 = vpack.c.b16 %v5892, %v5892
        %v5925 = vpack.c.b16 %v5893, %v5893
        %v5926 = vpack.c.b16 %v5894, %v5894
        %v5927 = vpack.c.b16 %v5895, %v5895
        %v5928 = vpack.c.b16 %v5896, %v5896
        %v5929 = vpack.c.b16 %v5897, %v5897
        %v5930 = vpack.c.b16 %v5898, %v5898
        %v5931 = vpack.c.b16 %v5899, %v5899
        %v5932 = vpack.c.b16 %v5900, %v5900
        %v5933 = vpack.c.b16 %v5901, %v5901
        %v5934 = vpack.c.b16 %v5902, %v5902
        %v5935 = vpack.c.b16 %v5903, %v5903
        %v5936 = vpack.c.b16 %v5904, %v5904
        %v5937 = vpack.c.b16 %v5905, %v5905
        %v5938 = vpack.c.b16 %v5906, %v5906
        %v5939 = vpack.c.b16 %v5907, %v5907
        %v5940 = vpack.c.b16 %v5908, %v5908
        %v5941 = vpack.c.b16 %v5909, %v5909
        %v5942 = vpack.c.b16 %v5910, %v5910
        %v5943 = vpack.c.b16 %v5911, %v5911
        %v5944 = vpack.c.b16 %v5912, %v5912
        %v5945 = vpack.c.b16 %v5913, %v5913
        %v5946 = vpack.c.b16 %v5914, %v5914
        %v5947 = vpack.c.b16 %v5915, %v5915
        %v5948 = vpack.c.b16 %v5916, %v5916
        %v5949 = vpack.c.b16 %v5917, %v5917
        %v5950 = vpack.c.b16 %v5918, %v5918
        %v5951 = vpack.c.b16 %v5919, %v5919
        %5984 = vst [vmem:[%s177] sm:$0xf] %v5920
        %5985 = vst [vmem:[%s177 + $0x4] sm:$0xf] %v5921
        %5986 = vst [vmem:[%s177 + $0x8] sm:$0xf] %v5922
        %5987 = vst [vmem:[%s177 + $0xc] sm:$0xf] %v5923
        %5988 = vst [vmem:[%s177 + $0x10] sm:$0xf] %v5924
        %5989 = vst [vmem:[%s177 + $0x14] sm:$0xf] %v5925
        %5990 = vst [vmem:[%s177 + $0x18] sm:$0xf] %v5926
        %5991 = vst [vmem:[%s177 + $0x1c] sm:$0xf] %v5927
        %5992 = vst [vmem:[%s177 + $0x20] sm:$0xf] %v5928
        %5993 = vst [vmem:[%s177 + $0x24] sm:$0xf] %v5929
        %5994 = vst [vmem:[%s177 + $0x28] sm:$0xf] %v5930
        %5995 = vst [vmem:[%s177 + $0x2c] sm:$0xf] %v5931
        %5996 = vst [vmem:[%s177 + $0x30] sm:$0xf] %v5932
        %5997 = vst [vmem:[%s177 + $0x34] sm:$0xf] %v5933
        %5998 = vst [vmem:[%s177 + $0x38] sm:$0xf] %v5934
        %5999 = vst [vmem:[%s177 + $0x3c] sm:$0xf] %v5935
        %6000 = vst [vmem:[%s177 + $0x40] sm:$0xf] %v5936
        %6001 = vst [vmem:[%s177 + $0x44] sm:$0xf] %v5937
        %6002 = vst [vmem:[%s177 + $0x48] sm:$0xf] %v5938
        %6003 = vst [vmem:[%s177 + $0x4c] sm:$0xf] %v5939
        %6004 = vst [vmem:[%s177 + $0x50] sm:$0xf] %v5940
        %6005 = vst [vmem:[%s177 + $0x54] sm:$0xf] %v5941
        %6006 = vst [vmem:[%s177 + $0x58] sm:$0xf] %v5942
        %6007 = vst [vmem:[%s177 + $0x5c] sm:$0xf] %v5943
        %6008 = vst [vmem:[%s177 + $0x60] sm:$0xf] %v5944
        %6009 = vst [vmem:[%s177 + $0x64] sm:$0xf] %v5945
        %6010 = vst [vmem:[%s177 + $0x68] sm:$0xf] %v5946
        %6011 = vst [vmem:[%s177 + $0x6c] sm:$0xf] %v5947
        %6012 = vst [vmem:[%s177 + $0x70] sm:$0xf] %v5948
        %6013 = vst [vmem:[%s177 + $0x74] sm:$0xf] %v5949
        %6014 = vst [vmem:[%s177 + $0x78] sm:$0xf] %v5950
        %6015 = vst [vmem:[%s177 + $0x7c] sm:$0xf] %v5951
        %s6016 = sand.u32 %s107, 1
        %s6017 = scalar_lea.sflag [#allocation3], %s6016
        %s6018 = sand.u32 %s107, 1
        %s6019 = smul.addr %s6018, 128
        %s6020 = scalar_lea.vmem [#allocation2], %s6019
        // Predicated region
        $region33: #{tpu_custom_call.1} parent=31 // pred_check
          %p6021 = pneg %p117
        $region34: #{tpu_custom_call.1} parent=31 // pred_check_branch
          %6023 = sbr.rel (%p6021) target = $region36
        $region35: #{tpu_custom_call.1} parent=31 // pred_region
          %s6024 = smul.u32 16, %s22
          %s6026 = ssub.s32 2048, 2048
          %6027 = vsyncadd %s6017, %s6026
          %s6028 = smul.addr %s6024, 2
          %s6029 = smul.addr %s21, 32
          %s6030 = sadd.s32 %s6028, %s6029
          %s6031 = smul.addr %s6030, 64
          %s6032 = scalar_lea.hbm %s3, %s6031
          %s6033 = sshll.u32 %s6020, 4
          %s6034 = int_to_ptr.vmem [resolvable:$true] %s6033
          %6039 = dma.vmem_to_hbm [thread:$0]  %s6034, 2048, %s6032, %s6017, 64, 64, 4
        $region36: #{tpu_custom_call.1} parent=31 // pred_fallthru
          _
      $region32: #{tpu_custom_call.1} parent=5 // pred_fallthru
        _
      %p6040 = scmp.le.s32.totalorder 2, %s12
      // Predicated region
      $region37: #{tpu_custom_call.1} parent=5 // pred_check
        %p6041 = pneg %p6040
      $region38: #{tpu_custom_call.1} parent=5 // pred_check_branch
        %6043 = sbr.rel (%p6041) target = $region40
      $region39: #{tpu_custom_call.1} parent=5 // pred_region
        %s6044 = ssub.s32 %s12, 2
        // Predicated region
        $region41: #{tpu_custom_call.1} parent=39 // pred_check
          %p6045 = pneg %p123
        $region42: #{tpu_custom_call.1} parent=39 // pred_check_branch
          %6047 = sbr.rel (%p6045) target = $region44
        $region43: #{tpu_custom_call.1} parent=39 // pred_region
          %s6048 = sand.u32 %s108, 1
          %s6049 = scalar_lea.sflag [#allocation3], %s6048
          %s6050 = sand.u32 %s108, 1
          %s6051 = smul.addr %s6050, 128
          %s6052 = scalar_lea.vmem [#allocation2], %s6051
          %6053 = dma.done %s6049, 2048
        $region44: #{tpu_custom_call.1} parent=39 // pred_fallthru
          _
      $region40: #{tpu_custom_call.1} parent=5 // pred_fallthru
        _
    $region6: #{tpu_custom_call.1} parent=1 // loop_footer
      %s16 = sadd.s32 1, %s12
    $region7: #{tpu_custom_call.1} parent=1 // loop_footer_branch
      %11 = sbr.rel target = $region3
    $region8: #{tpu_custom_call.1} parent=1 // loop_exit
      _
    %6054 = vsyncpa [#allocation3], 1
    %s6055 = scalar_lea.sflag [#allocation3], 1
    %6056 = vsyncpa %s6055, 1

</llo_original>
